<compile_context>
chip_gen: v6e
topology: v6e:2x2x1
jax: 0.10.0
libtpu: 0.0.40
codegen_flags: <defaults>
</compile_context>

<pallas_src>
import functools

import jax
import jax.numpy as jnp
from jax import lax
from jax.experimental import pallas as pl
from jax.experimental.pallas import tpu as pltpu

_NF = 3  # n_features in the module

# dot_general dimension numbers used in the kernel
_BMM_T = (((2,), (2,)), ((0,), (0,)))   # (b,m,k),(b,n,k)->(b,m,n)  torch.bmm(B, v)
_RANK2 = (((1,), (1,)), ((0,), (0,)))   # (b,f,m),(b,f,n)->(b,m,n)  A^T @ R per traj
_DENSE = (((1,), (0,)), ((), ()))       # (o,i),(i,l)->(o,l)        shared Linear


def _loa_bfgs_kernel(gamma, Bt, P,
                     grad_ref, gradm1_ref, dm1_ref, B_ref,
                     w1_ref, w2_ref, w3_ref, l1_ref, l2_ref, l3_ref, wskip_ref,
                     d_ref, newB_ref):
  f32 = jnp.float32

  g3 = grad_ref[...]                        # (Bt, 1, P)
  dm1_3 = dm1_ref[...]                      # (Bt, 1, P)
  dgk3 = g3 - gradm1_ref[...]               # (Bt, 1, P)   DGK
  V = jnp.concatenate([dgk3, g3], axis=1)   # (Bt, 2, P): rows [dgk, grad]

  # construct_features: B @ dgk and B @ grad for every trajectory in the block.
  # Contracting B's last dim matches torch.bmm exactly (transposed-RHS MXU path,
  # no materialised (P,P) transpose).
  prod = lax.dot_general(V, B_ref[...], _BMM_T,
                         preferred_element_type=f32)        # (Bt, 2, P)
  qndg3 = prod[:, 0:1, :]                                   # B @ (grad - gradm1)
  bg3 = prod[:, 1:2, :]                                     # B @ grad

  # ---- relayout batched -> feature-major dense (feat, Bt*P) for the shared MLP.
  # Built from lane-tile-aligned (1,P) pieces (cheap lane-axis concatenation;
  # no sublane-merging reshapes).
  def dense_row(pieces):
    return jnp.concatenate(pieces, axis=1)                  # (1, Bt*P)

  qndg_row = dense_row([prod[b, 0:1, :] for b in range(Bt)])
  bkg_row = (-gamma) * dense_row([prod[b, 1:2, :] for b in range(Bt)])
  dm1_row = dense_row([dm1_3[b] for b in range(Bt)])
  x3 = jnp.concatenate([qndg_row, dm1_row, bkg_row], axis=0)  # (3, Bt*P)

  def dlin(w_ref, x):
    # shared Linear as one dense matmul: W (O,I) @ X (I, Bt*P) -> (O, Bt*P)
    return lax.dot_general(w_ref[...], x, _DENSE, preferred_element_type=f32)

  # --- outer_FF branch: Linear+ReLU, Linear+ReLU, Linear, then mean over P
  h = jnp.maximum(dlin(w1_ref, x3), 0.0)                    # (6,  Bt*P)
  h = jnp.maximum(dlin(w2_ref, h), 0.0)                     # (12, Bt*P)
  h = dlin(w3_ref, h)                                       # (3,  Bt*P)
  inv_p = 1.0 / P
  of_row = jnp.concatenate(
      [jnp.broadcast_to(
          jnp.sum(h[:, b * P:(b + 1) * P], axis=1, keepdims=True) * inv_p,
          (_NF, P))
       for b in range(Bt)], axis=1)                         # (3, Bt*P)
  x6 = jnp.concatenate([x3, of_row], axis=0)                # (6, Bt*P)

  # --- fullskip + inner layers
  skip = dlin(wskip_ref, x6)                                # (1,  Bt*P)
  out = jnp.maximum(dlin(l1_ref, x6), 0.0)                  # (12, Bt*P)
  out = jnp.maximum(dlin(l2_ref, out), 0.0)                 # (24, Bt*P)
  out_d = dlin(l3_ref, out) + skip                          # (1,  Bt*P)

  # ---- back to per-trajectory layout (static lane-tile slices, slab stack)
  out3 = jnp.stack([out_d[:, b * P:(b + 1) * P] for b in range(Bt)],
                   axis=0)                                  # (Bt, 1, P)
  secant3 = dm1_3 - qndg3                                   # (Bt, 1, P)

  # scalar dot products on the VPU/XLU (keeps the MXU for the rank-2 update)
  sD = jnp.sum(out3 * dgk3, axis=2, keepdims=True)          # out    . dgk
  sS = jnp.sum(secant3 * dgk3, axis=2, keepdims=True)       # secant . dgk
  sG = jnp.sum(secant3 * g3, axis=2, keepdims=True)         # secant . grad
  oG = jnp.sum(out3 * g3, axis=2, keepdims=True)            # out    . grad

  # TODO(synk): no epsilon / curvature guard on 1/sD (mirrors the PyTorch model).
  inv = 1.0 / sD
  coef = sS * inv

  # rank-2 quasi-Newton update, one batched MXU contraction: upd[b] = A[b]^T @ R[b]
  A = jnp.concatenate([secant3, out3], axis=1)              # (Bt, 2, P)
  R = jnp.concatenate([inv * out3, inv * secant3 - (inv * coef) * out3], axis=1)
  upd = lax.dot_general(A, R, _RANK2, preferred_element_type=f32)  # (Bt, P, P)
  newB_ref[...] = B_ref[...] + upd

  # d = Bn @ (-grad) from the rank-2 structure (no second (P,P) matvec):
  #   d = -(B@grad) - inv*( (out.g)*secant + ((secant.g) - coef*(out.g))*out )
  c_sec = -(inv * oG)
  c_out = inv * (coef * oG - sG)
  d_ref[...] = c_sec * secant3 + c_out * out3 - bg3


@functools.partial(jax.jit, static_argnames=("gamma", "block_traj"))
def loa_bfgs_forward(grad, gradm1, dm1, predicted_mat, params,
                     gamma=1.0, block_traj=32):
  """Functional forward; returns (d, new_predicted_mat)."""
  # TODO(synk): tensor-valued / per-trajectory previous_gamma not supported;
  #             gamma is a compile-time scalar.
  N, P = grad.shape
  f32 = jnp.float32

  Bt = max(1, min(int(block_traj), N))
  # v7x has two TensorCores per chip: keep >= 2 grid steps on the "parallel"
  # axis whenever there is enough work to split.
  if N >= 2 and Bt == N:
    Bt = -(-N // 2)
  n_blocks = -(-N // Bt)
  N_pad = n_blocks * Bt

  grad = grad.astype(f32)
  gradm1 = gradm1.astype(f32)
  dm1 = dm1.astype(f32)
  B = predicted_mat.astype(f32)
  if N_pad != N:
    pad = N_pad - N
    # Pad by replicating trajectory 0: padded rows stay finite (no 1/0 -> inf),
    # and are sliced away below.
    rep = lambda x: jnp.concatenate(
        [x, jnp.broadcast_to(x[:1], (pad,) + x.shape[1:])], axis=0)
    grad, gradm1, dm1, B = rep(grad), rep(gradm1), rep(dm1), rep(B)

  g3 = grad.reshape(N_pad, 1, P)
  gm3 = gradm1.reshape(N_pad, 1, P)
  dm3 = dm1.reshape(N_pad, 1, P)

  weights = tuple(params[k].astype(f32)
                  for k in ("W1", "W2", "W3", "L1", "L2", "L3", "Wskip"))

  kernel = functools.partial(_loa_bfgs_kernel, float(gamma), Bt, P)
  vec_spec = pl.BlockSpec((Bt, 1, P), lambda i: (i, 0, 0))
  mat_spec = pl.BlockSpec((Bt, P, P), lambda i: (i, 0, 0))
  w_specs = [pl.BlockSpec(w.shape, lambda i: (0, 0)) for w in weights]

  # ~Bt*256 KiB for the double-buffered (Bt,P,P) in/out tiles, ~Bt*64 KiB for
  # the rank-2 temp, plus slack for the dense MLP activations.
  vmem_limit = int(min(100 * 2**20, 24 * 2**20 + Bt * 336 * 1024))

  d3, new_B = pl.pallas_call(
      kernel,
      out_shape=(jax.ShapeDtypeStruct((N_pad, 1, P), f32),
                 jax.ShapeDtypeStruct((N_pad, P, P), f32)),
      grid_spec=pltpu.PrefetchScalarGridSpec(
          num_scalar_prefetch=0,
          grid=(n_blocks,),
          in_specs=[vec_spec, vec_spec, vec_spec, mat_spec, *w_specs],
          out_specs=[vec_spec, mat_spec],
      ),
      # donate predicted_mat's HBM buffer to new_predicted_mat (in-place state)
      input_output_aliases={3: 1},
      compiler_params=pltpu.CompilerParams(
          dimension_semantics=("parallel",),
          vmem_limit_bytes=vmem_limit),
  )(g3, gm3, dm3, B, *weights)

  return d3[:N, 0, :], new_B[:N]


def reference_forward(grad, gradm1, dm1, B, params, gamma=1.0):
  """Plain-JAX replica of the PyTorch forward (for verification)."""
  N, P = grad.shape
  dgk = grad - gradm1
  QNDG = jnp.einsum('nij,nj->ni', B, dgk)
  BkG = -gamma * jnp.einsum('nij,nj->ni', B, grad)
  x = jnp.stack([QNDG, dm1, BkG], axis=-1)                  # (N, P, 3)
  lin = lambda a, w: jnp.einsum('npi,oi->npo', a, w)
  h = jax.nn.relu(lin(x, params['W1']))
  h = jax.nn.relu(lin(h, params['W2']))
  h = lin(h, params['W3'])                                  # (N, P, 3)
  of = jnp.sum(h, axis=1) / P                               # (N, 3)
  outer = jnp.broadcast_to(of[:, None, :], x.shape)
  x6 = jnp.concatenate([x, outer], axis=-1)                 # (N, P, 6)
  fullskip = lin(x6, params['Wskip'])[..., 0]               # (N, P)
  out = jax.nn.relu(lin(x6, params['L1']))
  out = jax.nn.relu(lin(out, params['L2']))
  out = lin(out, params['L3'])[..., 0]                      # (N, P)
  out = out + fullskip
  secant = x6[:, :, 1] - x6[:, :, 0]
  sD = jnp.sum(out * dgk, axis=-1)[:, None, None]
  sS = jnp.sum(secant * dgk, axis=-1)[:, None, None]
  Bn = B + (1.0 / sD) * (secant[:, :, None] * out[:, None, :]
                         + out[:, :, None] * secant[:, None, :]
                         - (sS / sD) * out[:, :, None] * out[:, None, :])
  d = jnp.einsum('nij,nj->ni', Bn, -grad)
  return d, Bn


if __name__ == "__main__":
  P = 128   # problem dimension (lane-aligned)
  N = 6     # n_traj (exercises multi-block grid + padded-last-block path)

  key = jax.random.PRNGKey(0)
  keys = jax.random.split(key, 12)

  def lin_init(k, out_dim, in_dim):
    bound = 1.0 / (in_dim ** 0.5)
    return jax.random.uniform(k, (out_dim, in_dim), jnp.float32, -bound, bound)

  params = {
      'W1': lin_init(keys[0], 6, 3),      # outer_FF[0]
      'W2': lin_init(keys[1], 12, 6),     # outer_FF[1]
      'W3': lin_init(keys[2], 3, 12),     # outer_FF[2]
      'L1': lin_init(keys[3], 12, 6),     # layers[0]
      'L2': lin_init(keys[4], 24, 12),    # layers[1]
      'L3': lin_init(keys[5], 1, 24),     # layers[2]
      'Wskip': lin_init(keys[6], 1, 6),   # fullskip_layer
  }

  grad = jax.random.normal(keys[7], (N, P), jnp.float32)
  gradm1 = jax.random.normal(keys[8], (N, P), jnp.float32)
  dm1 = jax.random.normal(keys[9], (N, P), jnp.float32)
  B0 = jnp.broadcast_to(jnp.eye(P, dtype=jnp.float32), (N, P, P))  # reset_mat(N)

  # step 1 (identity state), step 2 (chained, non-trivial predicted_mat)
  d1, B1 = loa_bfgs_forward(grad, gradm1, dm1, B0, params, gamma=1.0, block_traj=4)
  grad2 = jax.random.normal(keys[10], (N, P), jnp.float32)
  d2, B2 = loa_bfgs_forward(grad2, grad, d1, B1, params, gamma=1.0, block_traj=4)
  jax.block_until_ready((d1, B1, d2, B2))

  d1_r, B1_r = reference_forward(grad, gradm1, dm1, B0, params, gamma=1.0)
  d2_r, B2_r = reference_forward(grad2, grad, d1_r, B1_r, params, gamma=1.0)

  def rel_err(a, b):
    return float(jnp.max(jnp.abs(a - b)) / (jnp.max(jnp.abs(b)) + 1e-6))

  errs = [rel_err(d1, d1_r), rel_err(B1, B1_r),
          rel_err(d2, d2_r), rel_err(B2, B2_r)]
  assert max(errs) < 5e-3, errs

  print("KERNEL_OK")
</pallas_src>

<mosaic_0001>
module attributes {stable_mosaic.version = 11 : i64} {
  func.func @_loa_bfgs_kernel(%arg0: i32, %arg1: memref<4x1x128xf32, #tpu.memory_space<vmem>>, %arg2: memref<4x1x128xf32, #tpu.memory_space<vmem>>, %arg3: memref<4x1x128xf32, #tpu.memory_space<vmem>>, %arg4: memref<4x128x128xf32, #tpu.memory_space<vmem>>, %arg5: memref<6x3xf32, #tpu.memory_space<vmem>>, %arg6: memref<12x6xf32, #tpu.memory_space<vmem>>, %arg7: memref<3x12xf32, #tpu.memory_space<vmem>>, %arg8: memref<12x6xf32, #tpu.memory_space<vmem>>, %arg9: memref<24x12xf32, #tpu.memory_space<vmem>>, %arg10: memref<1x24xf32, #tpu.memory_space<vmem>>, %arg11: memref<1x6xf32, #tpu.memory_space<vmem>>, %arg12: memref<4x1x128xf32, #tpu.memory_space<vmem>>, %arg13: memref<4x128x128xf32, #tpu.memory_space<vmem>>) attributes {dimension_semantics = [#tpu.dimension_semantics<parallel>], iteration_bounds = array<i64: 2>, scalar_prefetch = 0 : i64, scratch_operands = 0 : i64, tpu.core_type = #tpu.core_type<tc>, window_params = [{transform_indices = @transform_0, window_bounds = array<i64: 4, 1, 128>}, {transform_indices = @transform_1, window_bounds = array<i64: 4, 1, 128>}, {transform_indices = @transform_2, window_bounds = array<i64: 4, 1, 128>}, {transform_indices = @transform_3, window_bounds = array<i64: 4, 128, 128>}, {pipeline_mode = #tpu.pipeline_mode<synchronous>, transform_indices = @transform_4, window_bounds = array<i64: 6, 3>}, {pipeline_mode = #tpu.pipeline_mode<synchronous>, transform_indices = @transform_5, window_bounds = array<i64: 12, 6>}, {pipeline_mode = #tpu.pipeline_mode<synchronous>, transform_indices = @transform_6, window_bounds = array<i64: 3, 12>}, {pipeline_mode = #tpu.pipeline_mode<synchronous>, transform_indices = @transform_7, window_bounds = array<i64: 12, 6>}, {pipeline_mode = #tpu.pipeline_mode<synchronous>, transform_indices = @transform_8, window_bounds = array<i64: 24, 12>}, {pipeline_mode = #tpu.pipeline_mode<synchronous>, transform_indices = @transform_9, window_bounds = array<i64: 1, 24>}, {pipeline_mode = #tpu.pipeline_mode<synchronous>, transform_indices = @transform_10, window_bounds = array<i64: 1, 6>}, {transform_indices = @transform_11, window_bounds = array<i64: 4, 1, 128>}, {transform_indices = @transform_12, window_bounds = array<i64: 4, 128, 128>}]} {
    %c0 = arith.constant 0 : index
    %c0_0 = arith.constant 0 : index
    %c0_1 = arith.constant 0 : index
    %0 = vector.load %arg1[%c0, %c0_0, %c0_1] : memref<4x1x128xf32, #tpu.memory_space<vmem>>, vector<4x1x128xf32>
    %c0_2 = arith.constant 0 : index
    %c0_3 = arith.constant 0 : index
    %c0_4 = arith.constant 0 : index
    %1 = vector.load %arg3[%c0_2, %c0_3, %c0_4] : memref<4x1x128xf32, #tpu.memory_space<vmem>>, vector<4x1x128xf32>
    %c0_5 = arith.constant 0 : index
    %c0_6 = arith.constant 0 : index
    %c0_7 = arith.constant 0 : index
    %2 = vector.load %arg2[%c0_5, %c0_6, %c0_7] : memref<4x1x128xf32, #tpu.memory_space<vmem>>, vector<4x1x128xf32>
    %3 = arith.subf %0, %2 : vector<4x1x128xf32>
    %4 = tpu.concatenate %3, %0 in 1 : vector<4x1x128xf32>, vector<4x1x128xf32> -> vector<4x2x128xf32>
    %c0_8 = arith.constant 0 : index
    %c0_9 = arith.constant 0 : index
    %c0_10 = arith.constant 0 : index
    %5 = vector.load %arg4[%c0_8, %c0_9, %c0_10] : memref<4x128x128xf32, #tpu.memory_space<vmem>>, vector<4x128x128xf32>
    %cst = arith.constant dense<0.000000e+00> : vector<4x2x128xf32>
    %6 = tpu.matmul %4, %5, %cst {dimension_numbers = #tpu.dot_dimension_numbers<[2], [2], [1], [1], [0, 0, 0, 1, 1, 1], [0], [0]>} : vector<4x2x128xf32>, vector<4x128x128xf32>, vector<4x2x128xf32> -> vector<4x2x128xf32>
    %7 = vector.extract_strided_slice %6 {offsets = [0, 0, 0], sizes = [4, 1, 128], strides = [1, 1, 1]} : vector<4x2x128xf32> to vector<4x1x128xf32>
    %8 = vector.extract_strided_slice %6 {offsets = [0, 1, 0], sizes = [4, 1, 128], strides = [1, 1, 1]} : vector<4x2x128xf32> to vector<4x1x128xf32>
    %9 = vector.extract_strided_slice %6 {offsets = [0, 0, 0], sizes = [1, 1, 128], strides = [1, 1, 1]} : vector<4x2x128xf32> to vector<1x1x128xf32>
    %10 = vector.shape_cast %9 : vector<1x1x128xf32> to vector<1x128xf32>
    %11 = vector.extract_strided_slice %6 {offsets = [1, 0, 0], sizes = [1, 1, 128], strides = [1, 1, 1]} : vector<4x2x128xf32> to vector<1x1x128xf32>
    %12 = vector.shape_cast %11 : vector<1x1x128xf32> to vector<1x128xf32>
    %13 = vector.extract_strided_slice %6 {offsets = [2, 0, 0], sizes = [1, 1, 128], strides = [1, 1, 1]} : vector<4x2x128xf32> to vector<1x1x128xf32>
    %14 = vector.shape_cast %13 : vector<1x1x128xf32> to vector<1x128xf32>
    %15 = vector.extract_strided_slice %6 {offsets = [3, 0, 0], sizes = [1, 1, 128], strides = [1, 1, 1]} : vector<4x2x128xf32> to vector<1x1x128xf32>
    %16 = vector.shape_cast %15 : vector<1x1x128xf32> to vector<1x128xf32>
    %17 = tpu.concatenate %10, %12, %14, %16 in 1 : vector<1x128xf32>, vector<1x128xf32>, vector<1x128xf32>, vector<1x128xf32> -> vector<1x512xf32>
    %18 = vector.extract_strided_slice %6 {offsets = [0, 1, 0], sizes = [1, 1, 128], strides = [1, 1, 1]} : vector<4x2x128xf32> to vector<1x1x128xf32>
    %19 = vector.shape_cast %18 : vector<1x1x128xf32> to vector<1x128xf32>
    %20 = vector.extract_strided_slice %6 {offsets = [1, 1, 0], sizes = [1, 1, 128], strides = [1, 1, 1]} : vector<4x2x128xf32> to vector<1x1x128xf32>
    %21 = vector.shape_cast %20 : vector<1x1x128xf32> to vector<1x128xf32>
    %22 = vector.extract_strided_slice %6 {offsets = [2, 1, 0], sizes = [1, 1, 128], strides = [1, 1, 1]} : vector<4x2x128xf32> to vector<1x1x128xf32>
    %23 = vector.shape_cast %22 : vector<1x1x128xf32> to vector<1x128xf32>
    %24 = vector.extract_strided_slice %6 {offsets = [3, 1, 0], sizes = [1, 1, 128], strides = [1, 1, 1]} : vector<4x2x128xf32> to vector<1x1x128xf32>
    %25 = vector.shape_cast %24 : vector<1x1x128xf32> to vector<1x128xf32>
    %26 = tpu.concatenate %19, %21, %23, %25 in 1 : vector<1x128xf32>, vector<1x128xf32>, vector<1x128xf32>, vector<1x128xf32> -> vector<1x512xf32>
    %cst_11 = arith.constant -1.000000e+00 : f32
    %27 = vector.broadcast %cst_11 : f32 to vector<1x512xf32>
    %28 = arith.mulf %27, %26 : vector<1x512xf32>
    %29 = vector.extract_strided_slice %1 {offsets = [0, 0, 0], sizes = [1, 1, 128], strides = [1, 1, 1]} : vector<4x1x128xf32> to vector<1x1x128xf32>
    %30 = vector.shape_cast %29 : vector<1x1x128xf32> to vector<1x128xf32>
    %31 = vector.extract_strided_slice %1 {offsets = [1, 0, 0], sizes = [1, 1, 128], strides = [1, 1, 1]} : vector<4x1x128xf32> to vector<1x1x128xf32>
    %32 = vector.shape_cast %31 : vector<1x1x128xf32> to vector<1x128xf32>
    %33 = vector.extract_strided_slice %1 {offsets = [2, 0, 0], sizes = [1, 1, 128], strides = [1, 1, 1]} : vector<4x1x128xf32> to vector<1x1x128xf32>
    %34 = vector.shape_cast %33 : vector<1x1x128xf32> to vector<1x128xf32>
    %35 = vector.extract_strided_slice %1 {offsets = [3, 0, 0], sizes = [1, 1, 128], strides = [1, 1, 1]} : vector<4x1x128xf32> to vector<1x1x128xf32>
    %36 = vector.shape_cast %35 : vector<1x1x128xf32> to vector<1x128xf32>
    %37 = tpu.concatenate %30, %32, %34, %36 in 1 : vector<1x128xf32>, vector<1x128xf32>, vector<1x128xf32>, vector<1x128xf32> -> vector<1x512xf32>
    %38 = tpu.concatenate %17, %37, %28 in 0 : vector<1x512xf32>, vector<1x512xf32>, vector<1x512xf32> -> vector<3x512xf32>
    %c0_12 = arith.constant 0 : index
    %c0_13 = arith.constant 0 : index
    %39 = vector.load %arg5[%c0_12, %c0_13] : memref<6x3xf32, #tpu.memory_space<vmem>>, vector<6x3xf32>
    %cst_14 = arith.constant dense<0.000000e+00> : vector<6x512xf32>
    %40 = tpu.matmul %39, %38, %cst_14 {dimension_numbers = #tpu.dot_dimension_numbers<[1], [0], [0], [1], [0, 0, 1, 1], [], []>} : vector<6x3xf32>, vector<3x512xf32>, vector<6x512xf32> -> vector<6x512xf32>
    %cst_15 = arith.constant 0.000000e+00 : f32
    %41 = vector.broadcast %cst_15 : f32 to vector<6x512xf32>
    %42 = arith.maximumf %40, %41 : vector<6x512xf32>
    %c0_16 = arith.constant 0 : index
    %c0_17 = arith.constant 0 : index
    %43 = vector.load %arg6[%c0_16, %c0_17] : memref<12x6xf32, #tpu.memory_space<vmem>>, vector<12x6xf32>
    %cst_18 = arith.constant dense<0.000000e+00> : vector<12x512xf32>
    %44 = tpu.matmul %43, %42, %cst_18 {dimension_numbers = #tpu.dot_dimension_numbers<[1], [0], [0], [1], [0, 0, 1, 1], [], []>} : vector<12x6xf32>, vector<6x512xf32>, vector<12x512xf32> -> vector<12x512xf32>
    %cst_19 = arith.constant 0.000000e+00 : f32
    %45 = vector.broadcast %cst_19 : f32 to vector<12x512xf32>
    %46 = arith.maximumf %44, %45 : vector<12x512xf32>
    %c0_20 = arith.constant 0 : index
    %c0_21 = arith.constant 0 : index
    %47 = vector.load %arg7[%c0_20, %c0_21] : memref<3x12xf32, #tpu.memory_space<vmem>>, vector<3x12xf32>
    %cst_22 = arith.constant dense<0.000000e+00> : vector<3x512xf32>
    %48 = tpu.matmul %47, %46, %cst_22 {dimension_numbers = #tpu.dot_dimension_numbers<[1], [0], [0], [1], [0, 0, 1, 1], [], []>} : vector<3x12xf32>, vector<12x512xf32>, vector<3x512xf32> -> vector<3x512xf32>
    %49 = vector.extract_strided_slice %48 {offsets = [0, 0], sizes = [3, 128], strides = [1, 1]} : vector<3x512xf32> to vector<3x128xf32>
    %cst_23 = arith.constant dense<0.000000e+00> : vector<3xf32>
    %50 = vector.multi_reduction <add>, %49, %cst_23 [1] : vector<3x128xf32> to vector<3xf32>
    %51 = vector.shape_cast %50 : vector<3xf32> to vector<3x1xf32>
    %cst_24 = arith.constant 7.812500e-03 : f32
    %52 = vector.broadcast %cst_24 : f32 to vector<3x1xf32>
    %53 = arith.mulf %51, %52 : vector<3x1xf32>
    %54 = vector.shape_cast %53 : vector<3x1xf32> to vector<3x1xf32>
    %55 = vector.broadcast %54 : vector<3x1xf32> to vector<3x128xf32>
    %56 = vector.extract_strided_slice %48 {offsets = [0, 128], sizes = [3, 128], strides = [1, 1]} : vector<3x512xf32> to vector<3x128xf32>
    %cst_25 = arith.constant dense<0.000000e+00> : vector<3xf32>
    %57 = vector.multi_reduction <add>, %56, %cst_25 [1] : vector<3x128xf32> to vector<3xf32>
    %58 = vector.shape_cast %57 : vector<3xf32> to vector<3x1xf32>
    %cst_26 = arith.constant 7.812500e-03 : f32
    %59 = vector.broadcast %cst_26 : f32 to vector<3x1xf32>
    %60 = arith.mulf %58, %59 : vector<3x1xf32>
    %61 = vector.shape_cast %60 : vector<3x1xf32> to vector<3x1xf32>
    %62 = vector.broadcast %61 : vector<3x1xf32> to vector<3x128xf32>
    %63 = vector.extract_strided_slice %48 {offsets = [0, 256], sizes = [3, 128], strides = [1, 1]} : vector<3x512xf32> to vector<3x128xf32>
    %cst_27 = arith.constant dense<0.000000e+00> : vector<3xf32>
    %64 = vector.multi_reduction <add>, %63, %cst_27 [1] : vector<3x128xf32> to vector<3xf32>
    %65 = vector.shape_cast %64 : vector<3xf32> to vector<3x1xf32>
    %cst_28 = arith.constant 7.812500e-03 : f32
    %66 = vector.broadcast %cst_28 : f32 to vector<3x1xf32>
    %67 = arith.mulf %65, %66 : vector<3x1xf32>
    %68 = vector.shape_cast %67 : vector<3x1xf32> to vector<3x1xf32>
    %69 = vector.broadcast %68 : vector<3x1xf32> to vector<3x128xf32>
    %70 = vector.extract_strided_slice %48 {offsets = [0, 384], sizes = [3, 128], strides = [1, 1]} : vector<3x512xf32> to vector<3x128xf32>
    %cst_29 = arith.constant dense<0.000000e+00> : vector<3xf32>
    %71 = vector.multi_reduction <add>, %70, %cst_29 [1] : vector<3x128xf32> to vector<3xf32>
    %72 = vector.shape_cast %71 : vector<3xf32> to vector<3x1xf32>
    %cst_30 = arith.constant 7.812500e-03 : f32
    %73 = vector.broadcast %cst_30 : f32 to vector<3x1xf32>
    %74 = arith.mulf %72, %73 : vector<3x1xf32>
    %75 = vector.shape_cast %74 : vector<3x1xf32> to vector<3x1xf32>
    %76 = vector.broadcast %75 : vector<3x1xf32> to vector<3x128xf32>
    %77 = tpu.concatenate %55, %62, %69, %76 in 1 : vector<3x128xf32>, vector<3x128xf32>, vector<3x128xf32>, vector<3x128xf32> -> vector<3x512xf32>
    %78 = tpu.concatenate %38, %77 in 0 : vector<3x512xf32>, vector<3x512xf32> -> vector<6x512xf32>
    %c0_31 = arith.constant 0 : index
    %c0_32 = arith.constant 0 : index
    %79 = vector.load %arg11[%c0_31, %c0_32] : memref<1x6xf32, #tpu.memory_space<vmem>>, vector<1x6xf32>
    %cst_33 = arith.constant dense<0.000000e+00> : vector<1x512xf32>
    %80 = tpu.matmul %79, %78, %cst_33 {dimension_numbers = #tpu.dot_dimension_numbers<[1], [0], [0], [1], [0, 0, 1, 1], [], []>} : vector<1x6xf32>, vector<6x512xf32>, vector<1x512xf32> -> vector<1x512xf32>
    %c0_34 = arith.constant 0 : index
    %c0_35 = arith.constant 0 : index
    %81 = vector.load %arg8[%c0_34, %c0_35] : memref<12x6xf32, #tpu.memory_space<vmem>>, vector<12x6xf32>
    %cst_36 = arith.constant dense<0.000000e+00> : vector<12x512xf32>
    %82 = tpu.matmul %81, %78, %cst_36 {dimension_numbers = #tpu.dot_dimension_numbers<[1], [0], [0], [1], [0, 0, 1, 1], [], []>} : vector<12x6xf32>, vector<6x512xf32>, vector<12x512xf32> -> vector<12x512xf32>
    %cst_37 = arith.constant 0.000000e+00 : f32
    %83 = vector.broadcast %cst_37 : f32 to vector<12x512xf32>
    %84 = arith.maximumf %82, %83 : vector<12x512xf32>
    %c0_38 = arith.constant 0 : index
    %c0_39 = arith.constant 0 : index
    %85 = vector.load %arg9[%c0_38, %c0_39] : memref<24x12xf32, #tpu.memory_space<vmem>>, vector<24x12xf32>
    %cst_40 = arith.constant dense<0.000000e+00> : vector<24x512xf32>
    %86 = tpu.matmul %85, %84, %cst_40 {dimension_numbers = #tpu.dot_dimension_numbers<[1], [0], [0], [1], [0, 0, 1, 1], [], []>} : vector<24x12xf32>, vector<12x512xf32>, vector<24x512xf32> -> vector<24x512xf32>
    %cst_41 = arith.constant 0.000000e+00 : f32
    %87 = vector.broadcast %cst_41 : f32 to vector<24x512xf32>
    %88 = arith.maximumf %86, %87 : vector<24x512xf32>
    %c0_42 = arith.constant 0 : index
    %c0_43 = arith.constant 0 : index
    %89 = vector.load %arg10[%c0_42, %c0_43] : memref<1x24xf32, #tpu.memory_space<vmem>>, vector<1x24xf32>
    %cst_44 = arith.constant dense<0.000000e+00> : vector<1x512xf32>
    %90 = tpu.matmul %89, %88, %cst_44 {dimension_numbers = #tpu.dot_dimension_numbers<[1], [0], [0], [1], [0, 0, 1, 1], [], []>} : vector<1x24xf32>, vector<24x512xf32>, vector<1x512xf32> -> vector<1x512xf32>
    %91 = arith.addf %90, %80 : vector<1x512xf32>
    %92 = vector.extract_strided_slice %91 {offsets = [0, 0], sizes = [1, 128], strides = [1, 1]} : vector<1x512xf32> to vector<1x128xf32>
    %93 = vector.extract_strided_slice %91 {offsets = [0, 128], sizes = [1, 128], strides = [1, 1]} : vector<1x512xf32> to vector<1x128xf32>
    %94 = vector.extract_strided_slice %91 {offsets = [0, 256], sizes = [1, 128], strides = [1, 1]} : vector<1x512xf32> to vector<1x128xf32>
    %95 = vector.extract_strided_slice %91 {offsets = [0, 384], sizes = [1, 128], strides = [1, 1]} : vector<1x512xf32> to vector<1x128xf32>
    %96 = vector.shape_cast %92 : vector<1x128xf32> to vector<1x1x128xf32>
    %97 = vector.shape_cast %93 : vector<1x128xf32> to vector<1x1x128xf32>
    %98 = vector.shape_cast %94 : vector<1x128xf32> to vector<1x1x128xf32>
    %99 = vector.shape_cast %95 : vector<1x128xf32> to vector<1x1x128xf32>
    %100 = tpu.concatenate %96, %97, %98, %99 in 0 : vector<1x1x128xf32>, vector<1x1x128xf32>, vector<1x1x128xf32>, vector<1x1x128xf32> -> vector<4x1x128xf32>
    %101 = arith.subf %1, %7 : vector<4x1x128xf32>
    %102 = arith.mulf %100, %3 : vector<4x1x128xf32>
    %cst_45 = arith.constant dense<0.000000e+00> : vector<4x1xf32>
    %103 = vector.multi_reduction <add>, %102, %cst_45 [2] : vector<4x1x128xf32> to vector<4x1xf32>
    %104 = vector.shape_cast %103 : vector<4x1xf32> to vector<4x1x1xf32>
    %105 = arith.mulf %101, %3 : vector<4x1x128xf32>
    %cst_46 = arith.constant dense<0.000000e+00> : vector<4x1xf32>
    %106 = vector.multi_reduction <add>, %105, %cst_46 [2] : vector<4x1x128xf32> to vector<4x1xf32>
    %107 = vector.shape_cast %106 : vector<4x1xf32> to vector<4x1x1xf32>
    %108 = arith.mulf %101, %0 : vector<4x1x128xf32>
    %cst_47 = arith.constant dense<0.000000e+00> : vector<4x1xf32>
    %109 = vector.multi_reduction <add>, %108, %cst_47 [2] : vector<4x1x128xf32> to vector<4x1xf32>
    %110 = vector.shape_cast %109 : vector<4x1xf32> to vector<4x1x1xf32>
    %111 = arith.mulf %100, %0 : vector<4x1x128xf32>
    %cst_48 = arith.constant dense<0.000000e+00> : vector<4x1xf32>
    %112 = vector.multi_reduction <add>, %111, %cst_48 [2] : vector<4x1x128xf32> to vector<4x1xf32>
    %113 = vector.shape_cast %112 : vector<4x1xf32> to vector<4x1x1xf32>
    %cst_49 = arith.constant 1.000000e+00 : f32
    %114 = vector.broadcast %cst_49 : f32 to vector<4x1x1xf32>
    %115 = arith.divf %114, %104 : vector<4x1x1xf32>
    %116 = arith.mulf %107, %115 : vector<4x1x1xf32>
    %117 = tpu.concatenate %101, %100 in 1 : vector<4x1x128xf32>, vector<4x1x128xf32> -> vector<4x2x128xf32>
    %118 = vector.broadcast %115 : vector<4x1x1xf32> to vector<4x1x128xf32>
    %119 = arith.mulf %118, %100 : vector<4x1x128xf32>
    %120 = vector.broadcast %115 : vector<4x1x1xf32> to vector<4x1x128xf32>
    %121 = arith.mulf %120, %101 : vector<4x1x128xf32>
    %122 = arith.mulf %115, %116 : vector<4x1x1xf32>
    %123 = vector.broadcast %122 : vector<4x1x1xf32> to vector<4x1x128xf32>
    %124 = arith.mulf %123, %100 : vector<4x1x128xf32>
    %125 = arith.subf %121, %124 : vector<4x1x128xf32>
    %126 = tpu.concatenate %119, %125 in 1 : vector<4x1x128xf32>, vector<4x1x128xf32> -> vector<4x2x128xf32>
    %cst_50 = arith.constant dense<0.000000e+00> : vector<4x128x128xf32>
    %127 = tpu.matmul %117, %126, %cst_50 {dimension_numbers = #tpu.dot_dimension_numbers<[1], [1], [2], [2], [0, 0, 0, 2, 1, 2], [0], [0]>} : vector<4x2x128xf32>, vector<4x2x128xf32>, vector<4x128x128xf32> -> vector<4x128x128xf32>
    %c0_51 = arith.constant 0 : index
    %c0_52 = arith.constant 0 : index
    %c0_53 = arith.constant 0 : index
    %128 = vector.load %arg4[%c0_51, %c0_52, %c0_53] : memref<4x128x128xf32, #tpu.memory_space<vmem>>, vector<4x128x128xf32>
    %129 = arith.addf %128, %127 : vector<4x128x128xf32>
    %c0_54 = arith.constant 0 : index
    %c0_55 = arith.constant 0 : index
    %c0_56 = arith.constant 0 : index
    %130 = vector.load %arg13[%c0_54, %c0_55, %c0_56] : memref<4x128x128xf32, #tpu.memory_space<vmem>>, vector<4x128x128xf32>
    tpu.vector_store %arg13[%c0_54, %c0_55, %c0_56], %129 {strides = array<i32>} : memref<4x128x128xf32, #tpu.memory_space<vmem>>, vector<4x128x128xf32>,
    %131 = arith.mulf %115, %113 : vector<4x1x1xf32>
    %cst_57 = arith.constant 0.000000e+00 : f32
    %132 = vector.broadcast %cst_57 : f32 to vector<4x1x1xf32>
    %133 = arith.subf %132, %131 : vector<4x1x1xf32>
    %134 = arith.mulf %116, %113 : vector<4x1x1xf32>
    %135 = arith.subf %134, %110 : vector<4x1x1xf32>
    %136 = arith.mulf %115, %135 : vector<4x1x1xf32>
    %137 = vector.broadcast %133 : vector<4x1x1xf32> to vector<4x1x128xf32>
    %138 = arith.mulf %137, %101 : vector<4x1x128xf32>
    %139 = vector.broadcast %136 : vector<4x1x1xf32> to vector<4x1x128xf32>
    %140 = arith.mulf %139, %100 : vector<4x1x128xf32>
    %141 = arith.addf %138, %140 : vector<4x1x128xf32>
    %142 = arith.subf %141, %8 : vector<4x1x128xf32>
    %c0_58 = arith.constant 0 : index
    %c0_59 = arith.constant 0 : index
    %c0_60 = arith.constant 0 : index
    %143 = vector.load %arg12[%c0_58, %c0_59, %c0_60] : memref<4x1x128xf32, #tpu.memory_space<vmem>>, vector<4x1x128xf32>
    tpu.vector_store %arg12[%c0_58, %c0_59, %c0_60], %142 {strides = array<i32>} : memref<4x1x128xf32, #tpu.memory_space<vmem>>, vector<4x1x128xf32>,
    return
  }
  func.func @transform_0(%arg0: i32) -> (i32, i32, i32) {
    %c0_i32 = arith.constant 0 : i32
    %c0_i32_0 = arith.constant 0 : i32
    %c0_i32_1 = arith.constant 0 : i32
    return %arg0, %c0_i32, %c0_i32_0 : i32, i32, i32
  }
  func.func @transform_1(%arg0: i32) -> (i32, i32, i32) {
    %c0_i32 = arith.constant 0 : i32
    %c0_i32_0 = arith.constant 0 : i32
    %c0_i32_1 = arith.constant 0 : i32
    return %arg0, %c0_i32, %c0_i32_0 : i32, i32, i32
  }
  func.func @transform_2(%arg0: i32) -> (i32, i32, i32) {
    %c0_i32 = arith.constant 0 : i32
    %c0_i32_0 = arith.constant 0 : i32
    %c0_i32_1 = arith.constant 0 : i32
    return %arg0, %c0_i32, %c0_i32_0 : i32, i32, i32
  }
  func.func @transform_3(%arg0: i32) -> (i32, i32, i32) {
    %c0_i32 = arith.constant 0 : i32
    %c0_i32_0 = arith.constant 0 : i32
    %c0_i32_1 = arith.constant 0 : i32
    return %arg0, %c0_i32, %c0_i32_0 : i32, i32, i32
  }
  func.func @transform_4(%arg0: i32) -> (i32, i32) {
    %c0_i32 = arith.constant 0 : i32
    %c0_i32_0 = arith.constant 0 : i32
    %c0_i32_1 = arith.constant 0 : i32
    return %c0_i32, %c0_i32_0 : i32, i32
  }
  func.func @transform_5(%arg0: i32) -> (i32, i32) {
    %c0_i32 = arith.constant 0 : i32
    %c0_i32_0 = arith.constant 0 : i32
    %c0_i32_1 = arith.constant 0 : i32
    return %c0_i32, %c0_i32_0 : i32, i32
  }
  func.func @transform_6(%arg0: i32) -> (i32, i32) {
    %c0_i32 = arith.constant 0 : i32
    %c0_i32_0 = arith.constant 0 : i32
    %c0_i32_1 = arith.constant 0 : i32
    return %c0_i32, %c0_i32_0 : i32, i32
  }
  func.func @transform_7(%arg0: i32) -> (i32, i32) {
    %c0_i32 = arith.constant 0 : i32
    %c0_i32_0 = arith.constant 0 : i32
    %c0_i32_1 = arith.constant 0 : i32
    return %c0_i32, %c0_i32_0 : i32, i32
  }
  func.func @transform_8(%arg0: i32) -> (i32, i32) {
    %c0_i32 = arith.constant 0 : i32
    %c0_i32_0 = arith.constant 0 : i32
    %c0_i32_1 = arith.constant 0 : i32
    return %c0_i32, %c0_i32_0 : i32, i32
  }
  func.func @transform_9(%arg0: i32) -> (i32, i32) {
    %c0_i32 = arith.constant 0 : i32
    %c0_i32_0 = arith.constant 0 : i32
    %c0_i32_1 = arith.constant 0 : i32
    return %c0_i32, %c0_i32_0 : i32, i32
  }
  func.func @transform_10(%arg0: i32) -> (i32, i32) {
    %c0_i32 = arith.constant 0 : i32
    %c0_i32_0 = arith.constant 0 : i32
    %c0_i32_1 = arith.constant 0 : i32
    return %c0_i32, %c0_i32_0 : i32, i32
  }
  func.func @transform_11(%arg0: i32) -> (i32, i32, i32) {
    %c0_i32 = arith.constant 0 : i32
    %c0_i32_0 = arith.constant 0 : i32
    %c0_i32_1 = arith.constant 0 : i32
    return %arg0, %c0_i32, %c0_i32_0 : i32, i32, i32
  }
  func.func @transform_12(%arg0: i32) -> (i32, i32, i32) {
    %c0_i32 = arith.constant 0 : i32
    %c0_i32_0 = arith.constant 0 : i32
    %c0_i32_1 = arith.constant 0 : i32
    return %arg0, %c0_i32, %c0_i32_0 : i32, i32, i32
  }
}

</mosaic_0001>

<llo_original>
// kernel: loa_bfgs_forward.1
$region0: #{loa_bfgs_forward.1}
  #allocation0 [shape = 'u32[]', space=smem, size = 0x4, offset = 0x4, fixed_abs, tag = 'smem constant byte address 0x4 - core index']
  #allocation1 [shape = 'u32[144,128]{1,0:T(1,128)}', space=vmem, size = 0x12000, scoped, tag = 'internal scratch']
  %s0 = inlined_call_operand.vmem [shape: f32[8,1,128], index: 0, kind: input, shape index: {}]
  %s1 = inlined_call_operand.vmem [shape: f32[8,1,128], index: 1, kind: input, shape index: {}]
  %s2 = inlined_call_operand.vmem [shape: f32[8,1,128], index: 2, kind: input, shape index: {}]
  %s3 = inlined_call_operand.vmem [shape: f32[8,128,128], index: 3, kind: input, shape index: {}, may-alias: {3,12}]
  %s4 = inlined_call_operand.vmem [shape: f32[6,3], index: 4, kind: input, shape index: {}]
  %s5 = inlined_call_operand.vmem [shape: f32[12,6], index: 5, kind: input, shape index: {}]
  %s6 = inlined_call_operand.vmem [shape: f32[3,12], index: 6, kind: input, shape index: {}]
  %s7 = inlined_call_operand.vmem [shape: f32[12,6], index: 7, kind: input, shape index: {}]
  %s8 = inlined_call_operand.vmem [shape: f32[24,12], index: 8, kind: input, shape index: {}]
  %s9 = inlined_call_operand.vmem [shape: f32[1,24], index: 9, kind: input, shape index: {}]
  %s10 = inlined_call_operand.vmem [shape: f32[1,6], index: 10, kind: input, shape index: {}]
  %s11 = inlined_call_operand.vmem [shape: f32[8,1,128], index: 11, kind: output, shape index: {0}]
  %s12 = inlined_call_operand.vmem [shape: f32[8,128,128], index: 12, kind: output, shape index: {1}, may-alias: {3,12}]
  %13 = xla_tuple %s11, %s12
  %s14 = sld [smem:[#allocation0]]
  $region85: #{loa_bfgs_forward.1} parent=0
    _
  %s16 = ssub.s32 1, %s14
  %s17 = scalar_select 0, %s16, %s14
  loop: start=0, step=1, limit=4
  $region2: #{loa_bfgs_forward.1} parent=0 // loop_pre_header
    _
  $region3: #{loa_bfgs_forward.1} parent=0 // loop_header
    %s19 = sphi 0, %s23
    %p20 = scmp.ge.s32.totalorder %s19, 4
    %s29 = sphi 0, %s31
    %s32 = sphi 0, %s29
    %s33 = sphi 0, %s32
    %s49 = sphi 0, %s33
    %s55 = sphi 0, %s57
    %s58 = sphi 0, %s55
    %s59 = sphi 0, %s58
    %s75 = sphi 0, %s59
    %s81 = sphi 0, %s83
    %s84 = sphi 0, %s81
    %s85 = sphi 0, %s84
    %s101 = sphi 0, %s85
    %s107 = sphi 0, %s109
    %s110 = sphi 0, %s107
    %s111 = sphi 0, %s110
    %s127 = sphi 0, %s111
    %s131 = sphi 0, %s131
    %s133 = sphi 0, %s131
    %s134 = sphi 0, %s133
    %s148 = sphi 0, %s134
    %s152 = sphi 0, %s152
    %s154 = sphi 0, %s152
    %s155 = sphi 0, %s154
    %s169 = sphi 0, %s155
    %s173 = sphi 0, %s173
    %s175 = sphi 0, %s173
    %s176 = sphi 0, %s175
    %s190 = sphi 0, %s176
    %s194 = sphi 0, %s194
    %s196 = sphi 0, %s194
    %s197 = sphi 0, %s196
    %s211 = sphi 0, %s197
    %s215 = sphi 0, %s215
    %s217 = sphi 0, %s215
    %s218 = sphi 0, %s217
    %s232 = sphi 0, %s218
    %s236 = sphi 0, %s236
    %s238 = sphi 0, %s236
    %s239 = sphi 0, %s238
    %s253 = sphi 0, %s239
    %s257 = sphi 0, %s257
    %s259 = sphi 0, %s257
    %s260 = sphi 0, %s259
    %s274 = sphi 0, %s260
    %s280 = sphi 0, %s282
    %s283 = sphi 0, %s280
    %s284 = sphi 0, %s283
    %s300 = sphi 0, %s284
    %s306 = sphi 0, %s308
    %s309 = sphi 0, %s306
    %s310 = sphi 0, %s309
    %s326 = sphi 0, %s310
  $region4: #{loa_bfgs_forward.1} parent=0 // loop_header_branch
    %22 = sbr.rel (%p20) target = $region8
  $region5: #{loa_bfgs_forward.1} parent=0 // loop_body
    %s24 = ssub.s32 %s19, 1
    %s25 = ssub.s32 %s19, 2
    %s26 = sadd.s32 %s19, 1
    %s27 = ssub.s32 %s19, %s26
    %p28 = scmp.eq.s32.totalorder %s27, 0
    %s30 = sadd.s32 %s29, 1
    %s31 = scalar_select %p28, %s29, %s30
    %p34 = pneg %p28
    %p35 = scmp.eq.s32.totalorder %s19, 1
    %p36 = por %p34, %p35
    %p37 = scmp.ne.s32.totalorder %s29, %s32
    %p38 = scmp.eq.s32.totalorder %s19, 0
    %p39 = por %p37, %p38
    %p40 = scmp.ne.s32.totalorder %s29, %s32
    %p41 = scmp.eq.s32.totalorder %s24, 1
    %p42 = por %p40, %p41
    %p43 = scmp.ne.s32.totalorder %s32, %s33
    %p44 = scmp.eq.s32.totalorder %s24, 0
    %p45 = por %p43, %p44
    %p46 = scmp.ne.s32.totalorder %s32, %s33
    %p47 = scmp.eq.s32.totalorder %s25, 1
    %p48 = por %p46, %p47
    %p50 = scmp.ne.s32.totalorder %s33, %s49
    %p51 = scmp.eq.s32.totalorder %s25, 0
    %p52 = por %p50, %p51
    %s53 = ssub.s32 %s19, %s26
    %p54 = scmp.eq.s32.totalorder %s53, 0
    %s56 = sadd.s32 %s55, 1
    %s57 = scalar_select %p54, %s55, %s56
    %p60 = pneg %p54
    %p61 = scmp.eq.s32.totalorder %s19, 1
    %p62 = por %p60, %p61
    %p63 = scmp.ne.s32.totalorder %s55, %s58
    %p64 = scmp.eq.s32.totalorder %s19, 0
    %p65 = por %p63, %p64
    %p66 = scmp.ne.s32.totalorder %s55, %s58
    %p67 = scmp.eq.s32.totalorder %s24, 1
    %p68 = por %p66, %p67
    %p69 = scmp.ne.s32.totalorder %s58, %s59
    %p70 = scmp.eq.s32.totalorder %s24, 0
    %p71 = por %p69, %p70
    %p72 = scmp.ne.s32.totalorder %s58, %s59
    %p73 = scmp.eq.s32.totalorder %s25, 1
    %p74 = por %p72, %p73
    %p76 = scmp.ne.s32.totalorder %s59, %s75
    %p77 = scmp.eq.s32.totalorder %s25, 0
    %p78 = por %p76, %p77
    %s79 = ssub.s32 %s19, %s26
    %p80 = scmp.eq.s32.totalorder %s79, 0
    %s82 = sadd.s32 %s81, 1
    %s83 = scalar_select %p80, %s81, %s82
    %p86 = pneg %p80
    %p87 = scmp.eq.s32.totalorder %s19, 1
    %p88 = por %p86, %p87
    %p89 = scmp.ne.s32.totalorder %s81, %s84
    %p90 = scmp.eq.s32.totalorder %s19, 0
    %p91 = por %p89, %p90
    %p92 = scmp.ne.s32.totalorder %s81, %s84
    %p93 = scmp.eq.s32.totalorder %s24, 1
    %p94 = por %p92, %p93
    %p95 = scmp.ne.s32.totalorder %s84, %s85
    %p96 = scmp.eq.s32.totalorder %s24, 0
    %p97 = por %p95, %p96
    %p98 = scmp.ne.s32.totalorder %s84, %s85
    %p99 = scmp.eq.s32.totalorder %s25, 1
    %p100 = por %p98, %p99
    %p102 = scmp.ne.s32.totalorder %s85, %s101
    %p103 = scmp.eq.s32.totalorder %s25, 0
    %p104 = por %p102, %p103
    %s105 = ssub.s32 %s19, %s26
    %p106 = scmp.eq.s32.totalorder %s105, 0
    %s108 = sadd.s32 %s107, 1
    %s109 = scalar_select %p106, %s107, %s108
    %p112 = pneg %p106
    %p113 = scmp.eq.s32.totalorder %s19, 1
    %p114 = por %p112, %p113
    %p115 = scmp.ne.s32.totalorder %s107, %s110
    %p116 = scmp.eq.s32.totalorder %s19, 0
    %p117 = por %p115, %p116
    %p118 = scmp.ne.s32.totalorder %s107, %s110
    %p119 = scmp.eq.s32.totalorder %s24, 1
    %p120 = por %p118, %p119
    %p121 = scmp.ne.s32.totalorder %s110, %s111
    %p122 = scmp.eq.s32.totalorder %s24, 0
    %p123 = por %p121, %p122
    %p124 = scmp.ne.s32.totalorder %s110, %s111
    %p125 = scmp.eq.s32.totalorder %s25, 1
    %p126 = por %p124, %p125
    %p128 = scmp.ne.s32.totalorder %s111, %s127
    %p129 = scmp.eq.s32.totalorder %s25, 0
    %p130 = por %p128, %p129
    %s132 = sadd.s32 %s131, 1
    %p135 = scmp.eq.s32.totalorder %s19, 1
    %p136 = scmp.ne.s32.totalorder %s131, %s133
    %p137 = scmp.eq.s32.totalorder %s19, 0
    %p138 = por %p136, %p137
    %p139 = scmp.ne.s32.totalorder %s131, %s133
    %p140 = scmp.eq.s32.totalorder %s24, 1
    %p141 = por %p139, %p140
    %p142 = scmp.ne.s32.totalorder %s133, %s134
    %p143 = scmp.eq.s32.totalorder %s24, 0
    %p144 = por %p142, %p143
    %p145 = scmp.ne.s32.totalorder %s133, %s134
    %p146 = scmp.eq.s32.totalorder %s25, 1
    %p147 = por %p145, %p146
    %p149 = scmp.ne.s32.totalorder %s134, %s148
    %p150 = scmp.eq.s32.totalorder %s25, 0
    %p151 = por %p149, %p150
    %s153 = sadd.s32 %s152, 1
    %p156 = scmp.eq.s32.totalorder %s19, 1
    %p157 = scmp.ne.s32.totalorder %s152, %s154
    %p158 = scmp.eq.s32.totalorder %s19, 0
    %p159 = por %p157, %p158
    %p160 = scmp.ne.s32.totalorder %s152, %s154
    %p161 = scmp.eq.s32.totalorder %s24, 1
    %p162 = por %p160, %p161
    %p163 = scmp.ne.s32.totalorder %s154, %s155
    %p164 = scmp.eq.s32.totalorder %s24, 0
    %p165 = por %p163, %p164
    %p166 = scmp.ne.s32.totalorder %s154, %s155
    %p167 = scmp.eq.s32.totalorder %s25, 1
    %p168 = por %p166, %p167
    %p170 = scmp.ne.s32.totalorder %s155, %s169
    %p171 = scmp.eq.s32.totalorder %s25, 0
    %p172 = por %p170, %p171
    %s174 = sadd.s32 %s173, 1
    %p177 = scmp.eq.s32.totalorder %s19, 1
    %p178 = scmp.ne.s32.totalorder %s173, %s175
    %p179 = scmp.eq.s32.totalorder %s19, 0
    %p180 = por %p178, %p179
    %p181 = scmp.ne.s32.totalorder %s173, %s175
    %p182 = scmp.eq.s32.totalorder %s24, 1
    %p183 = por %p181, %p182
    %p184 = scmp.ne.s32.totalorder %s175, %s176
    %p185 = scmp.eq.s32.totalorder %s24, 0
    %p186 = por %p184, %p185
    %p187 = scmp.ne.s32.totalorder %s175, %s176
    %p188 = scmp.eq.s32.totalorder %s25, 1
    %p189 = por %p187, %p188
    %p191 = scmp.ne.s32.totalorder %s176, %s190
    %p192 = scmp.eq.s32.totalorder %s25, 0
    %p193 = por %p191, %p192
    %s195 = sadd.s32 %s194, 1
    %p198 = scmp.eq.s32.totalorder %s19, 1
    %p199 = scmp.ne.s32.totalorder %s194, %s196
    %p200 = scmp.eq.s32.totalorder %s19, 0
    %p201 = por %p199, %p200
    %p202 = scmp.ne.s32.totalorder %s194, %s196
    %p203 = scmp.eq.s32.totalorder %s24, 1
    %p204 = por %p202, %p203
    %p205 = scmp.ne.s32.totalorder %s196, %s197
    %p206 = scmp.eq.s32.totalorder %s24, 0
    %p207 = por %p205, %p206
    %p208 = scmp.ne.s32.totalorder %s196, %s197
    %p209 = scmp.eq.s32.totalorder %s25, 1
    %p210 = por %p208, %p209
    %p212 = scmp.ne.s32.totalorder %s197, %s211
    %p213 = scmp.eq.s32.totalorder %s25, 0
    %p214 = por %p212, %p213
    %s216 = sadd.s32 %s215, 1
    %p219 = scmp.eq.s32.totalorder %s19, 1
    %p220 = scmp.ne.s32.totalorder %s215, %s217
    %p221 = scmp.eq.s32.totalorder %s19, 0
    %p222 = por %p220, %p221
    %p223 = scmp.ne.s32.totalorder %s215, %s217
    %p224 = scmp.eq.s32.totalorder %s24, 1
    %p225 = por %p223, %p224
    %p226 = scmp.ne.s32.totalorder %s217, %s218
    %p227 = scmp.eq.s32.totalorder %s24, 0
    %p228 = por %p226, %p227
    %p229 = scmp.ne.s32.totalorder %s217, %s218
    %p230 = scmp.eq.s32.totalorder %s25, 1
    %p231 = por %p229, %p230
    %p233 = scmp.ne.s32.totalorder %s218, %s232
    %p234 = scmp.eq.s32.totalorder %s25, 0
    %p235 = por %p233, %p234
    %s237 = sadd.s32 %s236, 1
    %p240 = scmp.eq.s32.totalorder %s19, 1
    %p241 = scmp.ne.s32.totalorder %s236, %s238
    %p242 = scmp.eq.s32.totalorder %s19, 0
    %p243 = por %p241, %p242
    %p244 = scmp.ne.s32.totalorder %s236, %s238
    %p245 = scmp.eq.s32.totalorder %s24, 1
    %p246 = por %p244, %p245
    %p247 = scmp.ne.s32.totalorder %s238, %s239
    %p248 = scmp.eq.s32.totalorder %s24, 0
    %p249 = por %p247, %p248
    %p250 = scmp.ne.s32.totalorder %s238, %s239
    %p251 = scmp.eq.s32.totalorder %s25, 1
    %p252 = por %p250, %p251
    %p254 = scmp.ne.s32.totalorder %s239, %s253
    %p255 = scmp.eq.s32.totalorder %s25, 0
    %p256 = por %p254, %p255
    %s258 = sadd.s32 %s257, 1
    %p261 = scmp.eq.s32.totalorder %s19, 1
    %p262 = scmp.ne.s32.totalorder %s257, %s259
    %p263 = scmp.eq.s32.totalorder %s19, 0
    %p264 = por %p262, %p263
    %p265 = scmp.ne.s32.totalorder %s257, %s259
    %p266 = scmp.eq.s32.totalorder %s24, 1
    %p267 = por %p265, %p266
    %p268 = scmp.ne.s32.totalorder %s259, %s260
    %p269 = scmp.eq.s32.totalorder %s24, 0
    %p270 = por %p268, %p269
    %p271 = scmp.ne.s32.totalorder %s259, %s260
    %p272 = scmp.eq.s32.totalorder %s25, 1
    %p273 = por %p271, %p272
    %p275 = scmp.ne.s32.totalorder %s260, %s274
    %p276 = scmp.eq.s32.totalorder %s25, 0
    %p277 = por %p275, %p276
    %s278 = ssub.s32 %s19, %s26
    %p279 = scmp.eq.s32.totalorder %s278, 0
    %s281 = sadd.s32 %s280, 1
    %s282 = scalar_select %p279, %s280, %s281
    %p285 = pneg %p279
    %p286 = scmp.eq.s32.totalorder %s19, 1
    %p287 = por %p285, %p286
    %p288 = scmp.ne.s32.totalorder %s280, %s283
    %p289 = scmp.eq.s32.totalorder %s19, 0
    %p290 = por %p288, %p289
    %p291 = scmp.ne.s32.totalorder %s280, %s283
    %p292 = scmp.eq.s32.totalorder %s24, 1
    %p293 = por %p291, %p292
    %p294 = scmp.ne.s32.totalorder %s283, %s284
    %p295 = scmp.eq.s32.totalorder %s24, 0
    %p296 = por %p294, %p295
    %p297 = scmp.ne.s32.totalorder %s283, %s284
    %p298 = scmp.eq.s32.totalorder %s25, 1
    %p299 = por %p297, %p298
    %p301 = scmp.ne.s32.totalorder %s284, %s300
    %p302 = scmp.eq.s32.totalorder %s25, 0
    %p303 = por %p301, %p302
    %s304 = ssub.s32 %s19, %s26
    %p305 = scmp.eq.s32.totalorder %s304, 0
    %s307 = sadd.s32 %s306, 1
    %s308 = scalar_select %p305, %s306, %s307
    %p311 = pneg %p305
    %p312 = scmp.eq.s32.totalorder %s19, 1
    %p313 = por %p311, %p312
    %p314 = scmp.ne.s32.totalorder %s306, %s309
    %p315 = scmp.eq.s32.totalorder %s19, 0
    %p316 = por %p314, %p315
    %p317 = scmp.ne.s32.totalorder %s306, %s309
    %p318 = scmp.eq.s32.totalorder %s24, 1
    %p319 = por %p317, %p318
    %p320 = scmp.ne.s32.totalorder %s309, %s310
    %p321 = scmp.eq.s32.totalorder %s24, 0
    %p322 = por %p320, %p321
    %p323 = scmp.ne.s32.totalorder %s309, %s310
    %p324 = scmp.eq.s32.totalorder %s25, 1
    %p325 = por %p323, %p324
    %p327 = scmp.ne.s32.totalorder %s310, %s326
    %p328 = scmp.eq.s32.totalorder %s25, 0
    %p329 = por %p327, %p328
    %p330 = scmp.le.s32.totalorder 1, %s19
    %p331 = scmp.lt.s32.totalorder %s19, 3
    %p332 = pnand %p330, %p331
    %p333 = pneg %p332
    // Predicated region
    $region9: #{loa_bfgs_forward.1} parent=5 // pred_check
      _
    $region10: #{loa_bfgs_forward.1} parent=5 // pred_check_branch
      %335 = sbr.rel (%p332) target = $region12
    $region11: #{loa_bfgs_forward.1} parent=5 // pred_region
      %s336 = ssub.s32 %s19, 1
      // Predicated region
      $region13: #{loa_bfgs_forward.1} parent=11 // pred_check
        %p337 = pneg %p144
      $region14: #{loa_bfgs_forward.1} parent=11 // pred_check_branch
        %339 = sbr.rel (%p337) target = $region16
      $region15: #{loa_bfgs_forward.1} parent=11 // pred_region
        _
      $region16: #{loa_bfgs_forward.1} parent=11 // pred_fallthru
        _
      // Predicated region
      $region17: #{loa_bfgs_forward.1} parent=11 // pred_check
        %p340 = pneg %p165
      $region18: #{loa_bfgs_forward.1} parent=11 // pred_check_branch
        %342 = sbr.rel (%p340) target = $region20
      $region19: #{loa_bfgs_forward.1} parent=11 // pred_region
        _
      $region20: #{loa_bfgs_forward.1} parent=11 // pred_fallthru
        _
      // Predicated region
      $region21: #{loa_bfgs_forward.1} parent=11 // pred_check
        %p343 = pneg %p186
      $region22: #{loa_bfgs_forward.1} parent=11 // pred_check_branch
        %345 = sbr.rel (%p343) target = $region24
      $region23: #{loa_bfgs_forward.1} parent=11 // pred_region
        _
      $region24: #{loa_bfgs_forward.1} parent=11 // pred_fallthru
        _
      // Predicated region
      $region25: #{loa_bfgs_forward.1} parent=11 // pred_check
        %p346 = pneg %p207
      $region26: #{loa_bfgs_forward.1} parent=11 // pred_check_branch
        %348 = sbr.rel (%p346) target = $region28
      $region27: #{loa_bfgs_forward.1} parent=11 // pred_region
        _
      $region28: #{loa_bfgs_forward.1} parent=11 // pred_fallthru
        _
      // Predicated region
      $region29: #{loa_bfgs_forward.1} parent=11 // pred_check
        %p349 = pneg %p228
      $region30: #{loa_bfgs_forward.1} parent=11 // pred_check_branch
        %351 = sbr.rel (%p349) target = $region32
      $region31: #{loa_bfgs_forward.1} parent=11 // pred_region
        _
      $region32: #{loa_bfgs_forward.1} parent=11 // pred_fallthru
        _
      // Predicated region
      $region33: #{loa_bfgs_forward.1} parent=11 // pred_check
        %p352 = pneg %p249
      $region34: #{loa_bfgs_forward.1} parent=11 // pred_check_branch
        %354 = sbr.rel (%p352) target = $region36
      $region35: #{loa_bfgs_forward.1} parent=11 // pred_region
        _
      $region36: #{loa_bfgs_forward.1} parent=11 // pred_fallthru
        _
      // Predicated region
      $region37: #{loa_bfgs_forward.1} parent=11 // pred_check
        %p355 = pneg %p270
      $region38: #{loa_bfgs_forward.1} parent=11 // pred_check_branch
        %357 = sbr.rel (%p355) target = $region40
      $region39: #{loa_bfgs_forward.1} parent=11 // pred_region
        _
      $region40: #{loa_bfgs_forward.1} parent=11 // pred_fallthru
        _
    $region12: #{loa_bfgs_forward.1} parent=5 // pred_fallthru
      _
    %p358 = scmp.lt.s32.totalorder %s19, 2
    // Predicated region
    $region41: #{loa_bfgs_forward.1} parent=5 // pred_check
      %p359 = pneg %p358
    $region42: #{loa_bfgs_forward.1} parent=5 // pred_check_branch
      %361 = sbr.rel (%p359) target = $region44
    $region43: #{loa_bfgs_forward.1} parent=5 // pred_region
      // Predicated region
      $region45: #{loa_bfgs_forward.1} parent=43 // pred_check
        %p362 = pneg %p39
      $region46: #{loa_bfgs_forward.1} parent=43 // pred_check_branch
        %364 = sbr.rel (%p362) target = $region48
      $region47: #{loa_bfgs_forward.1} parent=43 // pred_region
        %s365 = smul.u32 4, %s19
        %p366 = scmp.lt.s32.totalorder %s365, 7
        %s367 = scalar_select %p366, %s365, 7
        %s368 = scalar_lea.vmem %s0, %s367
        %s369 = smul.u32 4, %s19
      $region48: #{loa_bfgs_forward.1} parent=43 // pred_fallthru
        _
      // Predicated region
      $region49: #{loa_bfgs_forward.1} parent=43 // pred_check
        %p370 = pneg %p65
      $region50: #{loa_bfgs_forward.1} parent=43 // pred_check_branch
        %372 = sbr.rel (%p370) target = $region52
      $region51: #{loa_bfgs_forward.1} parent=43 // pred_region
        %s373 = smul.u32 4, %s19
        %p374 = scmp.lt.s32.totalorder %s373, 7
        %s375 = scalar_select %p374, %s373, 7
        %s376 = scalar_lea.vmem %s1, %s375
        %s377 = smul.u32 4, %s19
      $region52: #{loa_bfgs_forward.1} parent=43 // pred_fallthru
        _
      // Predicated region
      $region53: #{loa_bfgs_forward.1} parent=43 // pred_check
        %p378 = pneg %p91
      $region54: #{loa_bfgs_forward.1} parent=43 // pred_check_branch
        %380 = sbr.rel (%p378) target = $region56
      $region55: #{loa_bfgs_forward.1} parent=43 // pred_region
        %s381 = smul.u32 4, %s19
        %p382 = scmp.lt.s32.totalorder %s381, 7
        %s383 = scalar_select %p382, %s381, 7
        %s384 = scalar_lea.vmem %s2, %s383
        %s385 = smul.u32 4, %s19
      $region56: #{loa_bfgs_forward.1} parent=43 // pred_fallthru
        _
      // Predicated region
      $region57: #{loa_bfgs_forward.1} parent=43 // pred_check
        %p386 = pneg %p117
      $region58: #{loa_bfgs_forward.1} parent=43 // pred_check_branch
        %388 = sbr.rel (%p386) target = $region60
      $region59: #{loa_bfgs_forward.1} parent=43 // pred_region
        %s389 = smul.u32 4, %s19
        %p390 = scmp.lt.s32.totalorder %s389, 7
        %s391 = scalar_select %p390, %s389, 7
        %s392 = smul.addr %s391, 16
        %s393 = smul.addr %s392, 8
        %s394 = scalar_lea.vmem %s3, %s393
        %s395 = smul.u32 4, %s19
      $region60: #{loa_bfgs_forward.1} parent=43 // pred_fallthru
        _
    $region44: #{loa_bfgs_forward.1} parent=5 // pred_fallthru
      _
    %p396 = scmp.le.s32.totalorder 1, %s19
    %p397 = scmp.lt.s32.totalorder %s19, 3
    %p398 = pnand %p396, %p397
    %p399 = pneg %p398
    // Predicated region
    $region61: #{loa_bfgs_forward.1} parent=5 // pred_check
      _
    $region62: #{loa_bfgs_forward.1} parent=5 // pred_check_branch
      %401 = sbr.rel (%p398) target = $region64
    $region63: #{loa_bfgs_forward.1} parent=5 // pred_region
      %s402 = ssub.s32 %s19, 1
      %s403 = smul.u32 4, %s24
      %p404 = scmp.lt.s32.totalorder %s403, 7
      %s405 = scalar_select %p404, %s403, 7
      %s406 = scalar_lea.vmem %s0, %s405
      %p407 = pneg %p45
      %p408 = pneg %p42
      %s409 = smul.u32 4, %s24
      %p410 = scmp.lt.s32.totalorder %s409, 7
      %s411 = scalar_select %p410, %s409, 7
      %s412 = scalar_lea.vmem %s1, %s411
      %p413 = pneg %p71
      %p414 = pneg %p68
      %s415 = smul.u32 4, %s24
      %p416 = scmp.lt.s32.totalorder %s415, 7
      %s417 = scalar_select %p416, %s415, 7
      %s418 = scalar_lea.vmem %s2, %s417
      %p419 = pneg %p97
      %p420 = pneg %p94
      %s421 = smul.u32 4, %s24
      %p422 = scmp.lt.s32.totalorder %s421, 7
      %s423 = scalar_select %p422, %s421, 7
      %s424 = smul.addr %s423, 16
      %s425 = smul.addr %s424, 8
      %s426 = scalar_lea.vmem %s3, %s425
      %p427 = pneg %p123
      %p428 = pneg %p120
      %p429 = pneg %p144
      %p430 = pneg %p141
      %p431 = pneg %p165
      %p432 = pneg %p162
      %p433 = pneg %p186
      %p434 = pneg %p183
      %p435 = pneg %p207
      %p436 = pneg %p204
      %p437 = pneg %p228
      %p438 = pneg %p225
      %p439 = pneg %p249
      %p440 = pneg %p246
      %p441 = pneg %p270
      %p442 = pneg %p267
      %p443 = pneg %p296
      %p444 = pneg %p293
      %s445 = smul.u32 4, %s24
      %p446 = scmp.lt.s32.totalorder %s445, 7
      %s447 = scalar_select %p446, %s445, 7
      %s448 = scalar_lea.vmem %s11, %s447
      %p449 = pneg %p322
      %p450 = pneg %p319
      %s451 = smul.u32 4, %s24
      %p452 = scmp.lt.s32.totalorder %s451, 7
      %s453 = scalar_select %p452, %s451, 7
      %s454 = smul.addr %s453, 16
      %s455 = smul.addr %s454, 8
      %s456 = scalar_lea.vmem %s12, %s455
      %s457 = smul.u32 4, %s24
      %p458 = scmp.lt.s32.totalorder %s457, 7
      %s459 = scalar_select %p458, %s457, 7
      %s460 = scalar_lea.vmem %s0, %s459
      %s461 = smul.u32 4, %s24
      %s462 = smul.u32 4, %s24
      %p463 = scmp.lt.s32.totalorder %s462, 7
      %s464 = scalar_select %p463, %s462, 7
      %s465 = scalar_lea.vmem %s1, %s464
      %s466 = smul.u32 4, %s24
      %s467 = smul.u32 4, %s24
      %p468 = scmp.lt.s32.totalorder %s467, 7
      %s469 = scalar_select %p468, %s467, 7
      %s470 = scalar_lea.vmem %s2, %s469
      %s471 = smul.u32 4, %s24
      %s472 = smul.u32 4, %s24
      %p473 = scmp.lt.s32.totalorder %s472, 7
      %s474 = scalar_select %p473, %s472, 7
      %s475 = smul.addr %s474, 16
      %s476 = smul.addr %s475, 8
      %s477 = scalar_lea.vmem %s3, %s476
      %s478 = smul.u32 4, %s24
      %s479 = smul.u32 4, %s24
      %p480 = scmp.lt.s32.totalorder %s479, 7
      %s481 = scalar_select %p480, %s479, 7
      %s482 = scalar_lea.vmem %s11, %s481
      %s483 = smul.u32 4, %s24
      %s484 = smul.u32 4, %s24
      %p485 = scmp.lt.s32.totalorder %s484, 7
      %s486 = scalar_select %p485, %s484, 7
      %s487 = smul.addr %s486, 16
      %s488 = smul.addr %s487, 8
      %s489 = scalar_lea.vmem %s12, %s488
      %s490 = smul.u32 4, %s24
      %v491 = vld [vmem:[%s460] sm:$0x1]
      %v492 = vld [vmem:[%s460 + $0x1] sm:$0x1]
      %v493 = vld [vmem:[%s460 + $0x2] sm:$0x1]
      %v494 = vld [vmem:[%s460 + $0x3] sm:$0x1]
      %v495 = vld [vmem:[%s470] sm:$0x1]
      %v496 = vld [vmem:[%s470 + $0x1] sm:$0x1]
      %v497 = vld [vmem:[%s470 + $0x2] sm:$0x1]
      %v498 = vld [vmem:[%s470 + $0x3] sm:$0x1]
      %v499 = vld [vmem:[%s465] sm:$0x1]
      %v500 = vld [vmem:[%s465 + $0x1] sm:$0x1]
      %v501 = vld [vmem:[%s465 + $0x2] sm:$0x1]
      %v502 = vld [vmem:[%s465 + $0x3] sm:$0x1]
      %v503 = vsub.f32 %v491, %v499
      %v504 = vsub.f32 %v492, %v500
      %v505 = vsub.f32 %v493, %v501
      %v506 = vsub.f32 %v494, %v502
      %v511 = vlaneseq
      %v512 = vshrl.u32 %v511, 7
      %v513 = vsub.s32 0, %v512
      %v514 = vrot.slane %v491, %v513
      %v515 = vlaneseq
      %v516 = vshrl.u32 %v515, 7
      %v517 = vsub.s32 0, %v516
      %v518 = vrot.slane %v492, %v517
      %v519 = vlaneseq
      %v520 = vshrl.u32 %v519, 7
      %v521 = vsub.s32 0, %v520
      %v522 = vrot.slane %v493, %v521
      %v523 = vlaneseq
      %v524 = vshrl.u32 %v523, 7
      %v525 = vsub.s32 0, %v524
      %v526 = vrot.slane %v494, %v525
      %vm531 = vcmask 1040384
      %v532 = vsel %vm531, %v503, %v514
      %v533 = vsel %vm531, %v504, %v518
      %v534 = vsel %vm531, %v505, %v522
      %v535 = vsel %vm531, %v506, %v526
      %v536 = vld [vmem:[%s477] sm:$0xff]
      %v537 = vld [vmem:[%s477 + $0x8] sm:$0xff]
      %v538 = vld [vmem:[%s477 + $0x10] sm:$0xff]
      %v539 = vld [vmem:[%s477 + $0x18] sm:$0xff]
      %v540 = vld [vmem:[%s477 + $0x20] sm:$0xff]
      %v541 = vld [vmem:[%s477 + $0x28] sm:$0xff]
      %v542 = vld [vmem:[%s477 + $0x30] sm:$0xff]
      %v543 = vld [vmem:[%s477 + $0x38] sm:$0xff]
      %v544 = vld [vmem:[%s477 + $0x40] sm:$0xff]
      %v545 = vld [vmem:[%s477 + $0x48] sm:$0xff]
      %v546 = vld [vmem:[%s477 + $0x50] sm:$0xff]
      %v547 = vld [vmem:[%s477 + $0x58] sm:$0xff]
      %v548 = vld [vmem:[%s477 + $0x60] sm:$0xff]
      %v549 = vld [vmem:[%s477 + $0x68] sm:$0xff]
      %v550 = vld [vmem:[%s477 + $0x70] sm:$0xff]
      %v551 = vld [vmem:[%s477 + $0x78] sm:$0xff]
      %v552 = vld [vmem:[%s477 + $0x80] sm:$0xff]
      %v553 = vld [vmem:[%s477 + $0x88] sm:$0xff]
      %v554 = vld [vmem:[%s477 + $0x90] sm:$0xff]
      %v555 = vld [vmem:[%s477 + $0x98] sm:$0xff]
      %v556 = vld [vmem:[%s477 + $0xa0] sm:$0xff]
      %v557 = vld [vmem:[%s477 + $0xa8] sm:$0xff]
      %v558 = vld [vmem:[%s477 + $0xb0] sm:$0xff]
      %v559 = vld [vmem:[%s477 + $0xb8] sm:$0xff]
      %v560 = vld [vmem:[%s477 + $0xc0] sm:$0xff]
      %v561 = vld [vmem:[%s477 + $0xc8] sm:$0xff]
      %v562 = vld [vmem:[%s477 + $0xd0] sm:$0xff]
      %v563 = vld [vmem:[%s477 + $0xd8] sm:$0xff]
      %v564 = vld [vmem:[%s477 + $0xe0] sm:$0xff]
      %v565 = vld [vmem:[%s477 + $0xe8] sm:$0xff]
      %v566 = vld [vmem:[%s477 + $0xf0] sm:$0xff]
      %v567 = vld [vmem:[%s477 + $0xf8] sm:$0xff]
      %v568 = vld [vmem:[%s477 + $0x100] sm:$0xff]
      %v569 = vld [vmem:[%s477 + $0x108] sm:$0xff]
      %v570 = vld [vmem:[%s477 + $0x110] sm:$0xff]
      %v571 = vld [vmem:[%s477 + $0x118] sm:$0xff]
      %v572 = vld [vmem:[%s477 + $0x120] sm:$0xff]
      %v573 = vld [vmem:[%s477 + $0x128] sm:$0xff]
      %v574 = vld [vmem:[%s477 + $0x130] sm:$0xff]
      %v575 = vld [vmem:[%s477 + $0x138] sm:$0xff]
      %v576 = vld [vmem:[%s477 + $0x140] sm:$0xff]
      %v577 = vld [vmem:[%s477 + $0x148] sm:$0xff]
      %v578 = vld [vmem:[%s477 + $0x150] sm:$0xff]
      %v579 = vld [vmem:[%s477 + $0x158] sm:$0xff]
      %v580 = vld [vmem:[%s477 + $0x160] sm:$0xff]
      %v581 = vld [vmem:[%s477 + $0x168] sm:$0xff]
      %v582 = vld [vmem:[%s477 + $0x170] sm:$0xff]
      %v583 = vld [vmem:[%s477 + $0x178] sm:$0xff]
      %v584 = vld [vmem:[%s477 + $0x180] sm:$0xff]
      %v585 = vld [vmem:[%s477 + $0x188] sm:$0xff]
      %v586 = vld [vmem:[%s477 + $0x190] sm:$0xff]
      %v587 = vld [vmem:[%s477 + $0x198] sm:$0xff]
      %v588 = vld [vmem:[%s477 + $0x1a0] sm:$0xff]
      %v589 = vld [vmem:[%s477 + $0x1a8] sm:$0xff]
      %v590 = vld [vmem:[%s477 + $0x1b0] sm:$0xff]
      %v591 = vld [vmem:[%s477 + $0x1b8] sm:$0xff]
      %v592 = vld [vmem:[%s477 + $0x1c0] sm:$0xff]
      %v593 = vld [vmem:[%s477 + $0x1c8] sm:$0xff]
      %v594 = vld [vmem:[%s477 + $0x1d0] sm:$0xff]
      %v595 = vld [vmem:[%s477 + $0x1d8] sm:$0xff]
      %v596 = vld [vmem:[%s477 + $0x1e0] sm:$0xff]
      %v597 = vld [vmem:[%s477 + $0x1e8] sm:$0xff]
      %v598 = vld [vmem:[%s477 + $0x1f0] sm:$0xff]
      %v599 = vld [vmem:[%s477 + $0x1f8] sm:$0xff]
      %600 = vmatprep.subr.mxu0 0.0
      %601 = vmatpush1.xpose.msra.mxu0 %v551
      %602 = vmatprep.subr.mxu0 0.0
      %603 = vmatpush1.xpose.msra.mxu0 %v550
      %604 = vmatprep.subr.mxu0 0.0
      %605 = vmatpush1.xpose.msra.mxu0 %v549
      %606 = vmatprep.subr.mxu0 0.0
      %607 = vmatpush1.xpose.msra.mxu0 %v548
      %608 = vmatprep.subr.mxu0 0.0
      %609 = vmatpush1.xpose.msra.mxu0 %v547
      %610 = vmatprep.subr.mxu0 0.0
      %611 = vmatpush1.xpose.msra.mxu0 %v546
      %612 = vmatprep.subr.mxu0 0.0
      %613 = vmatpush1.xpose.msra.mxu0 %v545
      %614 = vmatprep.subr.mxu0 0.0
      %615 = vmatpush1.xpose.msra.mxu0 %v544
      %616 = vmatprep.subr.mxu0 0.0
      %617 = vmatpush1.xpose.msra.mxu0 %v543
      %618 = vmatprep.subr.mxu0 0.0
      %619 = vmatpush1.xpose.msra.mxu0 %v542
      %620 = vmatprep.subr.mxu0 0.0
      %621 = vmatpush1.xpose.msra.mxu0 %v541
      %622 = vmatprep.subr.mxu0 0.0
      %623 = vmatpush1.xpose.msra.mxu0 %v540
      %624 = vmatprep.subr.mxu0 0.0
      %625 = vmatpush1.xpose.msra.mxu0 %v539
      %626 = vmatprep.subr.mxu0 0.0
      %627 = vmatpush1.xpose.msra.mxu0 %v538
      %628 = vmatprep.subr.mxu0 0.0
      %629 = vmatpush1.xpose.msra.mxu0 %v537
      %630 = vmatprep.subr.mxu0 0.0
      %631 = vmatpush1.xpose.msra.mxu0 %v536
      %632 = vmatprep.subr.mxu0 0.0
      %633 = vmatpush2.xpose.msra.mxu0 0.0
      %634 = vmatprep.subr.mxu0 0.0
      %635 = vmatpush2.xpose.msra.mxu0 0.0
      %636 = vmatprep.subr.mxu0 0.0
      %637 = vmatpush2.xpose.msra.mxu0 0.0
      %638 = vmatprep.subr.mxu0 0.0
      %639 = vmatpush2.xpose.msra.mxu0 0.0
      %640 = vmatprep.subr.mxu0 0.0
      %641 = vmatpush2.xpose.msra.mxu0 0.0
      %642 = vmatprep.subr.mxu0 0.0
      %643 = vmatpush2.xpose.msra.mxu0 0.0
      %644 = vmatprep.subr.mxu0 0.0
      %645 = vmatpush2.xpose.msra.mxu0 0.0
      %646 = vmatprep.subr.mxu0 0.0
      %647 = vmatpush2.xpose.msra.mxu0 0.0
      %648 = vmatprep.subr.mxu0 0.0
      %649 = vmatpush2.xpose.msra.mxu0 0.0
      %650 = vmatprep.subr.mxu0 0.0
      %651 = vmatpush2.xpose.msra.mxu0 0.0
      %652 = vmatprep.subr.mxu0 0.0
      %653 = vmatpush2.xpose.msra.mxu0 0.0
      %654 = vmatprep.subr.mxu0 0.0
      %655 = vmatpush2.xpose.msra.mxu0 0.0
      %656 = vmatprep.subr.mxu0 0.0
      %657 = vmatpush2.xpose.msra.mxu0 0.0
      %658 = vmatprep.subr.mxu0 0.0
      %659 = vmatpush2.xpose.msra.mxu0 0.0
      %660 = vmatprep.subr.mxu0 0.0
      %661 = vmatpush2.xpose.msra.mxu0 0.0
      %662 = vmatprep.subr.mxu0 0.0
      %663 = vmatpush2.xpose.msra.mxu0 0.0
      %664 = vmatprep.mubr.f32.mxu0 0.0
      %665 = vmatmul.mubr.f32.gmra.mxu0 %v532
      %v666 = vpop.f32.mrf.mxu0
      %v667 = vadd.f32 0.0, %v666
      %v668 = vpop.f32.mrf.mxu0
      %669 = vdwg.mxu0
      %670 = vmatprep.subr.mxu0 0.0
      %671 = vmatpush1.xpose.msra.mxu0 %v567
      %672 = vmatprep.subr.mxu0 0.0
      %673 = vmatpush1.xpose.msra.mxu0 %v566
      %674 = vmatprep.subr.mxu0 0.0
      %675 = vmatpush1.xpose.msra.mxu0 %v565
      %676 = vmatprep.subr.mxu0 0.0
      %677 = vmatpush1.xpose.msra.mxu0 %v564
      %678 = vmatprep.subr.mxu0 0.0
      %679 = vmatpush1.xpose.msra.mxu0 %v563
      %680 = vmatprep.subr.mxu0 0.0
      %681 = vmatpush1.xpose.msra.mxu0 %v562
      %682 = vmatprep.subr.mxu0 0.0
      %683 = vmatpush1.xpose.msra.mxu0 %v561
      %684 = vmatprep.subr.mxu0 0.0
      %685 = vmatpush1.xpose.msra.mxu0 %v560
      %686 = vmatprep.subr.mxu0 0.0
      %687 = vmatpush1.xpose.msra.mxu0 %v559
      %688 = vmatprep.subr.mxu0 0.0
      %689 = vmatpush1.xpose.msra.mxu0 %v558
      %690 = vmatprep.subr.mxu0 0.0
      %691 = vmatpush1.xpose.msra.mxu0 %v557
      %692 = vmatprep.subr.mxu0 0.0
      %693 = vmatpush1.xpose.msra.mxu0 %v556
      %694 = vmatprep.subr.mxu0 0.0
      %695 = vmatpush1.xpose.msra.mxu0 %v555
      %696 = vmatprep.subr.mxu0 0.0
      %697 = vmatpush1.xpose.msra.mxu0 %v554
      %698 = vmatprep.subr.mxu0 0.0
      %699 = vmatpush1.xpose.msra.mxu0 %v553
      %700 = vmatprep.subr.mxu0 0.0
      %701 = vmatpush1.xpose.msra.mxu0 %v552
      %702 = vmatprep.subr.mxu0 0.0
      %703 = vmatpush2.xpose.msra.mxu0 0.0
      %704 = vmatprep.subr.mxu0 0.0
      %705 = vmatpush2.xpose.msra.mxu0 0.0
      %706 = vmatprep.subr.mxu0 0.0
      %707 = vmatpush2.xpose.msra.mxu0 0.0
      %708 = vmatprep.subr.mxu0 0.0
      %709 = vmatpush2.xpose.msra.mxu0 0.0
      %710 = vmatprep.subr.mxu0 0.0
      %711 = vmatpush2.xpose.msra.mxu0 0.0
      %712 = vmatprep.subr.mxu0 0.0
      %713 = vmatpush2.xpose.msra.mxu0 0.0
      %714 = vmatprep.subr.mxu0 0.0
      %715 = vmatpush2.xpose.msra.mxu0 0.0
      %716 = vmatprep.subr.mxu0 0.0
      %717 = vmatpush2.xpose.msra.mxu0 0.0
      %718 = vmatprep.subr.mxu0 0.0
      %719 = vmatpush2.xpose.msra.mxu0 0.0
      %720 = vmatprep.subr.mxu0 0.0
      %721 = vmatpush2.xpose.msra.mxu0 0.0
      %722 = vmatprep.subr.mxu0 0.0
      %723 = vmatpush2.xpose.msra.mxu0 0.0
      %724 = vmatprep.subr.mxu0 0.0
      %725 = vmatpush2.xpose.msra.mxu0 0.0
      %726 = vmatprep.subr.mxu0 0.0
      %727 = vmatpush2.xpose.msra.mxu0 0.0
      %728 = vmatprep.subr.mxu0 0.0
      %729 = vmatpush2.xpose.msra.mxu0 0.0
      %730 = vmatprep.subr.mxu0 0.0
      %731 = vmatpush2.xpose.msra.mxu0 0.0
      %732 = vmatprep.subr.mxu0 0.0
      %733 = vmatpush2.xpose.msra.mxu0 0.0
      %734 = vmatprep.mubr.f32.mxu0 0.0
      %735 = vmatmul.mubr.f32.gmra.mxu0 %v533
      %v736 = vpop.f32.mrf.mxu0
      %v737 = vadd.f32 0.0, %v736
      %v738 = vpop.f32.mrf.mxu0
      %739 = vdwg.mxu0
      %740 = vmatprep.subr.mxu0 0.0
      %741 = vmatpush1.xpose.msra.mxu0 %v583
      %742 = vmatprep.subr.mxu0 0.0
      %743 = vmatpush1.xpose.msra.mxu0 %v582
      %744 = vmatprep.subr.mxu0 0.0
      %745 = vmatpush1.xpose.msra.mxu0 %v581
      %746 = vmatprep.subr.mxu0 0.0
      %747 = vmatpush1.xpose.msra.mxu0 %v580
      %748 = vmatprep.subr.mxu0 0.0
      %749 = vmatpush1.xpose.msra.mxu0 %v579
      %750 = vmatprep.subr.mxu0 0.0
      %751 = vmatpush1.xpose.msra.mxu0 %v578
      %752 = vmatprep.subr.mxu0 0.0
      %753 = vmatpush1.xpose.msra.mxu0 %v577
      %754 = vmatprep.subr.mxu0 0.0
      %755 = vmatpush1.xpose.msra.mxu0 %v576
      %756 = vmatprep.subr.mxu0 0.0
      %757 = vmatpush1.xpose.msra.mxu0 %v575
      %758 = vmatprep.subr.mxu0 0.0
      %759 = vmatpush1.xpose.msra.mxu0 %v574
      %760 = vmatprep.subr.mxu0 0.0
      %761 = vmatpush1.xpose.msra.mxu0 %v573
      %762 = vmatprep.subr.mxu0 0.0
      %763 = vmatpush1.xpose.msra.mxu0 %v572
      %764 = vmatprep.subr.mxu0 0.0
      %765 = vmatpush1.xpose.msra.mxu0 %v571
      %766 = vmatprep.subr.mxu0 0.0
      %767 = vmatpush1.xpose.msra.mxu0 %v570
      %768 = vmatprep.subr.mxu0 0.0
      %769 = vmatpush1.xpose.msra.mxu0 %v569
      %770 = vmatprep.subr.mxu0 0.0
      %771 = vmatpush1.xpose.msra.mxu0 %v568
      %772 = vmatprep.subr.mxu0 0.0
      %773 = vmatpush2.xpose.msra.mxu0 0.0
      %774 = vmatprep.subr.mxu0 0.0
      %775 = vmatpush2.xpose.msra.mxu0 0.0
      %776 = vmatprep.subr.mxu0 0.0
      %777 = vmatpush2.xpose.msra.mxu0 0.0
      %778 = vmatprep.subr.mxu0 0.0
      %779 = vmatpush2.xpose.msra.mxu0 0.0
      %780 = vmatprep.subr.mxu0 0.0
      %781 = vmatpush2.xpose.msra.mxu0 0.0
      %782 = vmatprep.subr.mxu0 0.0
      %783 = vmatpush2.xpose.msra.mxu0 0.0
      %784 = vmatprep.subr.mxu0 0.0
      %785 = vmatpush2.xpose.msra.mxu0 0.0
      %786 = vmatprep.subr.mxu0 0.0
      %787 = vmatpush2.xpose.msra.mxu0 0.0
      %788 = vmatprep.subr.mxu0 0.0
      %789 = vmatpush2.xpose.msra.mxu0 0.0
      %790 = vmatprep.subr.mxu0 0.0
      %791 = vmatpush2.xpose.msra.mxu0 0.0
      %792 = vmatprep.subr.mxu0 0.0
      %793 = vmatpush2.xpose.msra.mxu0 0.0
      %794 = vmatprep.subr.mxu0 0.0
      %795 = vmatpush2.xpose.msra.mxu0 0.0
      %796 = vmatprep.subr.mxu0 0.0
      %797 = vmatpush2.xpose.msra.mxu0 0.0
      %798 = vmatprep.subr.mxu0 0.0
      %799 = vmatpush2.xpose.msra.mxu0 0.0
      %800 = vmatprep.subr.mxu0 0.0
      %801 = vmatpush2.xpose.msra.mxu0 0.0
      %802 = vmatprep.subr.mxu0 0.0
      %803 = vmatpush2.xpose.msra.mxu0 0.0
      %804 = vmatprep.mubr.f32.mxu0 0.0
      %805 = vmatmul.mubr.f32.gmra.mxu0 %v534
      %v806 = vpop.f32.mrf.mxu0
      %v807 = vadd.f32 0.0, %v806
      %v808 = vpop.f32.mrf.mxu0
      %809 = vdwg.mxu0
      %810 = vmatprep.subr.mxu0 0.0
      %811 = vmatpush1.xpose.msra.mxu0 %v599
      %812 = vmatprep.subr.mxu0 0.0
      %813 = vmatpush1.xpose.msra.mxu0 %v598
      %814 = vmatprep.subr.mxu0 0.0
      %815 = vmatpush1.xpose.msra.mxu0 %v597
      %816 = vmatprep.subr.mxu0 0.0
      %817 = vmatpush1.xpose.msra.mxu0 %v596
      %818 = vmatprep.subr.mxu0 0.0
      %819 = vmatpush1.xpose.msra.mxu0 %v595
      %820 = vmatprep.subr.mxu0 0.0
      %821 = vmatpush1.xpose.msra.mxu0 %v594
      %822 = vmatprep.subr.mxu0 0.0
      %823 = vmatpush1.xpose.msra.mxu0 %v593
      %824 = vmatprep.subr.mxu0 0.0
      %825 = vmatpush1.xpose.msra.mxu0 %v592
      %826 = vmatprep.subr.mxu0 0.0
      %827 = vmatpush1.xpose.msra.mxu0 %v591
      %828 = vmatprep.subr.mxu0 0.0
      %829 = vmatpush1.xpose.msra.mxu0 %v590
      %830 = vmatprep.subr.mxu0 0.0
      %831 = vmatpush1.xpose.msra.mxu0 %v589
      %832 = vmatprep.subr.mxu0 0.0
      %833 = vmatpush1.xpose.msra.mxu0 %v588
      %834 = vmatprep.subr.mxu0 0.0
      %835 = vmatpush1.xpose.msra.mxu0 %v587
      %836 = vmatprep.subr.mxu0 0.0
      %837 = vmatpush1.xpose.msra.mxu0 %v586
      %838 = vmatprep.subr.mxu0 0.0
      %839 = vmatpush1.xpose.msra.mxu0 %v585
      %840 = vmatprep.subr.mxu0 0.0
      %841 = vmatpush1.xpose.msra.mxu0 %v584
      %842 = vmatprep.subr.mxu0 0.0
      %843 = vmatpush2.xpose.msra.mxu0 0.0
      %844 = vmatprep.subr.mxu0 0.0
      %845 = vmatpush2.xpose.msra.mxu0 0.0
      %846 = vmatprep.subr.mxu0 0.0
      %847 = vmatpush2.xpose.msra.mxu0 0.0
      %848 = vmatprep.subr.mxu0 0.0
      %849 = vmatpush2.xpose.msra.mxu0 0.0
      %850 = vmatprep.subr.mxu0 0.0
      %851 = vmatpush2.xpose.msra.mxu0 0.0
      %852 = vmatprep.subr.mxu0 0.0
      %853 = vmatpush2.xpose.msra.mxu0 0.0
      %854 = vmatprep.subr.mxu0 0.0
      %855 = vmatpush2.xpose.msra.mxu0 0.0
      %856 = vmatprep.subr.mxu0 0.0
      %857 = vmatpush2.xpose.msra.mxu0 0.0
      %858 = vmatprep.subr.mxu0 0.0
      %859 = vmatpush2.xpose.msra.mxu0 0.0
      %860 = vmatprep.subr.mxu0 0.0
      %861 = vmatpush2.xpose.msra.mxu0 0.0
      %862 = vmatprep.subr.mxu0 0.0
      %863 = vmatpush2.xpose.msra.mxu0 0.0
      %864 = vmatprep.subr.mxu0 0.0
      %865 = vmatpush2.xpose.msra.mxu0 0.0
      %866 = vmatprep.subr.mxu0 0.0
      %867 = vmatpush2.xpose.msra.mxu0 0.0
      %868 = vmatprep.subr.mxu0 0.0
      %869 = vmatpush2.xpose.msra.mxu0 0.0
      %870 = vmatprep.subr.mxu0 0.0
      %871 = vmatpush2.xpose.msra.mxu0 0.0
      %872 = vmatprep.subr.mxu0 0.0
      %873 = vmatpush2.xpose.msra.mxu0 0.0
      %874 = vmatprep.mubr.f32.mxu0 0.0
      %875 = vmatmul.mubr.f32.gmra.mxu0 %v535
      %v876 = vpop.f32.mrf.mxu0
      %v877 = vadd.f32 0.0, %v876
      %v878 = vpop.f32.mrf.mxu0
      %879 = vdwg.mxu0
      %v880 = vmul.f32 %v667, -1.0
      %v881 = vmul.f32 %v737, -1.0
      %v882 = vmul.f32 %v807, -1.0
      %v883 = vmul.f32 %v877, -1.0
      %v888 = vrot.slane %v495, 7
      %v889 = vrot.slane %v496, 7
      %v890 = vrot.slane %v497, 7
      %v891 = vrot.slane %v498, 7
      %v900 = vrot.slane %v880, 7
      %v901 = vrot.slane %v881, 7
      %v902 = vrot.slane %v882, 7
      %v903 = vrot.slane %v883, 7
      %v908 = vsel %vm531, %v667, %v888
      %v909 = vsel %vm531, %v737, %v889
      %v910 = vsel %vm531, %v807, %v890
      %v911 = vsel %vm531, %v877, %v891
      %vm912 = vcmask 1041408
      %v913 = vsel %vm912, %v908, %v900
      %v914 = vsel %vm912, %v909, %v901
      %v915 = vsel %vm912, %v910, %v902
      %v916 = vsel %vm912, %v911, %v903
      %v917 = vld [vmem:[%s4] sm:$0x3f]
      %vm918 = vcmask 23552
      %v920 = vsel %vm918, %v917, 0
      %vm922 = vcmask 1042432
      %v924 = vsel %vm922, %v913, 0
      %v927 = vsel %vm922, %v914, 0
      %v930 = vsel %vm922, %v915, 0
      %v933 = vsel %vm922, %v916, 0
      %935 = vmatprep.subr.mxu0 0.0
      %936 = vmatpush1.msra.mxu0 0.0
      %937 = vmatprep.subr.mxu0 0.0
      %938 = vmatpush1.msra.mxu0 0.0
      %939 = vmatprep.subr.mxu0 0.0
      %940 = vmatpush1.msra.mxu0 0.0
      %941 = vmatprep.subr.mxu0 0.0
      %942 = vmatpush1.msra.mxu0 0.0
      %943 = vmatprep.subr.mxu0 0.0
      %944 = vmatpush1.msra.mxu0 0.0
      %945 = vmatprep.subr.mxu0 0.0
      %946 = vmatpush1.msra.mxu0 0.0
      %947 = vmatprep.subr.mxu0 0.0
      %948 = vmatpush1.msra.mxu0 0.0
      %949 = vmatprep.subr.mxu0 0.0
      %950 = vmatpush1.msra.mxu0 0.0
      %951 = vmatprep.subr.mxu0 0.0
      %952 = vmatpush1.msra.mxu0 0.0
      %953 = vmatprep.subr.mxu0 0.0
      %954 = vmatpush1.msra.mxu0 0.0
      %955 = vmatprep.subr.mxu0 0.0
      %956 = vmatpush1.msra.mxu0 0.0
      %957 = vmatprep.subr.mxu0 0.0
      %958 = vmatpush1.msra.mxu0 0.0
      %959 = vmatprep.subr.mxu0 0.0
      %960 = vmatpush1.msra.mxu0 0.0
      %961 = vmatprep.subr.mxu0 0.0
      %962 = vmatpush1.msra.mxu0 0.0
      %963 = vmatprep.subr.mxu0 0.0
      %964 = vmatpush1.msra.mxu0 0.0
      %965 = vmatprep.subr.mxu0 %v927
      %966 = vmatpush1.msra.mxu0 %v924
      %967 = vmatprep.subr.mxu0 0.0
      %968 = vmatpush2.msra.mxu0 0.0
      %969 = vmatprep.subr.mxu0 0.0
      %970 = vmatpush2.msra.mxu0 0.0
      %971 = vmatprep.subr.mxu0 0.0
      %972 = vmatpush2.msra.mxu0 0.0
      %973 = vmatprep.subr.mxu0 0.0
      %974 = vmatpush2.msra.mxu0 0.0
      %975 = vmatprep.subr.mxu0 0.0
      %976 = vmatpush2.msra.mxu0 0.0
      %977 = vmatprep.subr.mxu0 0.0
      %978 = vmatpush2.msra.mxu0 0.0
      %979 = vmatprep.subr.mxu0 0.0
      %980 = vmatpush2.msra.mxu0 0.0
      %981 = vmatprep.subr.mxu0 0.0
      %982 = vmatpush2.msra.mxu0 0.0
      %983 = vmatprep.subr.mxu0 0.0
      %984 = vmatpush2.msra.mxu0 0.0
      %985 = vmatprep.subr.mxu0 0.0
      %986 = vmatpush2.msra.mxu0 0.0
      %987 = vmatprep.subr.mxu0 0.0
      %988 = vmatpush2.msra.mxu0 0.0
      %989 = vmatprep.subr.mxu0 0.0
      %990 = vmatpush2.msra.mxu0 0.0
      %991 = vmatprep.subr.mxu0 0.0
      %992 = vmatpush2.msra.mxu0 0.0
      %993 = vmatprep.subr.mxu0 0.0
      %994 = vmatpush2.msra.mxu0 0.0
      %995 = vmatprep.subr.mxu0 0.0
      %996 = vmatpush2.msra.mxu0 0.0
      %997 = vmatprep.subr.mxu0 0.0
      %998 = vmatpush2.msra.mxu0 0.0
      %999 = vmatprep.mubr.f32.mxu0 0.0
      %1000 = vmatmul.mubr.f32.gmra.mxu0 %v920
      %v1001 = vpop.f32.mrf.mxu0
      %v1002 = vadd.f32 0.0, %v1001
      %v1003 = vpop.f32.mrf.mxu0
      %v1004 = vadd.f32 0.0, %v1003
      %1005 = vdwg.mxu0
      %1006 = vmatprep.subr.mxu0 0.0
      %1007 = vmatpush1.msra.mxu0 0.0
      %1008 = vmatprep.subr.mxu0 0.0
      %1009 = vmatpush1.msra.mxu0 0.0
      %1010 = vmatprep.subr.mxu0 0.0
      %1011 = vmatpush1.msra.mxu0 0.0
      %1012 = vmatprep.subr.mxu0 0.0
      %1013 = vmatpush1.msra.mxu0 0.0
      %1014 = vmatprep.subr.mxu0 0.0
      %1015 = vmatpush1.msra.mxu0 0.0
      %1016 = vmatprep.subr.mxu0 0.0
      %1017 = vmatpush1.msra.mxu0 0.0
      %1018 = vmatprep.subr.mxu0 0.0
      %1019 = vmatpush1.msra.mxu0 0.0
      %1020 = vmatprep.subr.mxu0 0.0
      %1021 = vmatpush1.msra.mxu0 0.0
      %1022 = vmatprep.subr.mxu0 0.0
      %1023 = vmatpush1.msra.mxu0 0.0
      %1024 = vmatprep.subr.mxu0 0.0
      %1025 = vmatpush1.msra.mxu0 0.0
      %1026 = vmatprep.subr.mxu0 0.0
      %1027 = vmatpush1.msra.mxu0 0.0
      %1028 = vmatprep.subr.mxu0 0.0
      %1029 = vmatpush1.msra.mxu0 0.0
      %1030 = vmatprep.subr.mxu0 0.0
      %1031 = vmatpush1.msra.mxu0 0.0
      %1032 = vmatprep.subr.mxu0 0.0
      %1033 = vmatpush1.msra.mxu0 0.0
      %1034 = vmatprep.subr.mxu0 0.0
      %1035 = vmatpush1.msra.mxu0 0.0
      %1036 = vmatprep.subr.mxu0 %v933
      %1037 = vmatpush1.msra.mxu0 %v930
      %1038 = vmatprep.subr.mxu0 0.0
      %1039 = vmatpush2.msra.mxu0 0.0
      %1040 = vmatprep.subr.mxu0 0.0
      %1041 = vmatpush2.msra.mxu0 0.0
      %1042 = vmatprep.subr.mxu0 0.0
      %1043 = vmatpush2.msra.mxu0 0.0
      %1044 = vmatprep.subr.mxu0 0.0
      %1045 = vmatpush2.msra.mxu0 0.0
      %1046 = vmatprep.subr.mxu0 0.0
      %1047 = vmatpush2.msra.mxu0 0.0
      %1048 = vmatprep.subr.mxu0 0.0
      %1049 = vmatpush2.msra.mxu0 0.0
      %1050 = vmatprep.subr.mxu0 0.0
      %1051 = vmatpush2.msra.mxu0 0.0
      %1052 = vmatprep.subr.mxu0 0.0
      %1053 = vmatpush2.msra.mxu0 0.0
      %1054 = vmatprep.subr.mxu0 0.0
      %1055 = vmatpush2.msra.mxu0 0.0
      %1056 = vmatprep.subr.mxu0 0.0
      %1057 = vmatpush2.msra.mxu0 0.0
      %1058 = vmatprep.subr.mxu0 0.0
      %1059 = vmatpush2.msra.mxu0 0.0
      %1060 = vmatprep.subr.mxu0 0.0
      %1061 = vmatpush2.msra.mxu0 0.0
      %1062 = vmatprep.subr.mxu0 0.0
      %1063 = vmatpush2.msra.mxu0 0.0
      %1064 = vmatprep.subr.mxu0 0.0
      %1065 = vmatpush2.msra.mxu0 0.0
      %1066 = vmatprep.subr.mxu0 0.0
      %1067 = vmatpush2.msra.mxu0 0.0
      %1068 = vmatprep.subr.mxu0 0.0
      %1069 = vmatpush2.msra.mxu0 0.0
      %1070 = vmatprep.mubr.f32.mxu0 0.0
      %1071 = vmatmul.mubr.f32.gmra.mxu0 %v920
      %v1072 = vpop.f32.mrf.mxu0
      %v1073 = vadd.f32 0.0, %v1072
      %v1074 = vpop.f32.mrf.mxu0
      %v1075 = vadd.f32 0.0, %v1074
      %1076 = vdwg.mxu0
      %v1077 = vmax.f32 %v1002, 0.0
      %v1078 = vmax.f32 %v1004, 0.0
      %v1079 = vmax.f32 %v1073, 0.0
      %v1080 = vmax.f32 %v1075, 0.0
      %v1081 = vld [vmem:[%s5] sm:$0xff]
      %v1082 = vld [vmem:[%s5 + $0x8] sm:$0xf]
      %vm1083 = vcmask 48128
      %v1085 = vsel %vm1083, %v1081, 0
      %v1088 = vsel %vm1083, %v1082, 0
      %vm1090 = vcmask 1045504
      %v1092 = vsel %vm1090, %v1077, 0
      %v1095 = vsel %vm1090, %v1078, 0
      %v1098 = vsel %vm1090, %v1079, 0
      %v1101 = vsel %vm1090, %v1080, 0
      %1103 = vmatprep.subr.mxu0 0.0
      %1104 = vmatpush1.msra.mxu0 0.0
      %1105 = vmatprep.subr.mxu0 0.0
      %1106 = vmatpush1.msra.mxu0 0.0
      %1107 = vmatprep.subr.mxu0 0.0
      %1108 = vmatpush1.msra.mxu0 0.0
      %1109 = vmatprep.subr.mxu0 0.0
      %1110 = vmatpush1.msra.mxu0 0.0
      %1111 = vmatprep.subr.mxu0 0.0
      %1112 = vmatpush1.msra.mxu0 0.0
      %1113 = vmatprep.subr.mxu0 0.0
      %1114 = vmatpush1.msra.mxu0 0.0
      %1115 = vmatprep.subr.mxu0 0.0
      %1116 = vmatpush1.msra.mxu0 0.0
      %1117 = vmatprep.subr.mxu0 0.0
      %1118 = vmatpush1.msra.mxu0 0.0
      %1119 = vmatprep.subr.mxu0 0.0
      %1120 = vmatpush1.msra.mxu0 0.0
      %1121 = vmatprep.subr.mxu0 0.0
      %1122 = vmatpush1.msra.mxu0 0.0
      %1123 = vmatprep.subr.mxu0 0.0
      %1124 = vmatpush1.msra.mxu0 0.0
      %1125 = vmatprep.subr.mxu0 0.0
      %1126 = vmatpush1.msra.mxu0 0.0
      %1127 = vmatprep.subr.mxu0 0.0
      %1128 = vmatpush1.msra.mxu0 0.0
      %1129 = vmatprep.subr.mxu0 0.0
      %1130 = vmatpush1.msra.mxu0 0.0
      %1131 = vmatprep.subr.mxu0 0.0
      %1132 = vmatpush1.msra.mxu0 0.0
      %1133 = vmatprep.subr.mxu0 %v1095
      %1134 = vmatpush1.msra.mxu0 %v1092
      %1135 = vmatprep.subr.mxu0 0.0
      %1136 = vmatpush2.msra.mxu0 0.0
      %1137 = vmatprep.subr.mxu0 0.0
      %1138 = vmatpush2.msra.mxu0 0.0
      %1139 = vmatprep.subr.mxu0 0.0
      %1140 = vmatpush2.msra.mxu0 0.0
      %1141 = vmatprep.subr.mxu0 0.0
      %1142 = vmatpush2.msra.mxu0 0.0
      %1143 = vmatprep.subr.mxu0 0.0
      %1144 = vmatpush2.msra.mxu0 0.0
      %1145 = vmatprep.subr.mxu0 0.0
      %1146 = vmatpush2.msra.mxu0 0.0
      %1147 = vmatprep.subr.mxu0 0.0
      %1148 = vmatpush2.msra.mxu0 0.0
      %1149 = vmatprep.subr.mxu0 0.0
      %1150 = vmatpush2.msra.mxu0 0.0
      %1151 = vmatprep.subr.mxu0 0.0
      %1152 = vmatpush2.msra.mxu0 0.0
      %1153 = vmatprep.subr.mxu0 0.0
      %1154 = vmatpush2.msra.mxu0 0.0
      %1155 = vmatprep.subr.mxu0 0.0
      %1156 = vmatpush2.msra.mxu0 0.0
      %1157 = vmatprep.subr.mxu0 0.0
      %1158 = vmatpush2.msra.mxu0 0.0
      %1159 = vmatprep.subr.mxu0 0.0
      %1160 = vmatpush2.msra.mxu0 0.0
      %1161 = vmatprep.subr.mxu0 0.0
      %1162 = vmatpush2.msra.mxu0 0.0
      %1163 = vmatprep.subr.mxu0 0.0
      %1164 = vmatpush2.msra.mxu0 0.0
      %1165 = vmatprep.subr.mxu0 0.0
      %1166 = vmatpush2.msra.mxu0 0.0
      %1167 = vmatprep.mubr.f32.mxu0 0.0
      %1168 = vmatmul.mubr.f32.gmra.mxu0 %v1085
      %v1169 = vpop.f32.mrf.mxu0
      %v1170 = vadd.f32 0.0, %v1169
      %v1171 = vpop.f32.mrf.mxu0
      %v1172 = vadd.f32 0.0, %v1171
      %1173 = vmatprep.mubr.f32.mxu0 0.0
      %1174 = vmatmul.mubr.f32.gmra.mxu0 %v1088
      %v1175 = vpop.f32.mrf.mxu0
      %v1176 = vadd.f32 0.0, %v1175
      %v1177 = vpop.f32.mrf.mxu0
      %v1178 = vadd.f32 0.0, %v1177
      %1179 = vdwg.mxu0
      %1180 = vmatprep.subr.mxu0 0.0
      %1181 = vmatpush1.msra.mxu0 0.0
      %1182 = vmatprep.subr.mxu0 0.0
      %1183 = vmatpush1.msra.mxu0 0.0
      %1184 = vmatprep.subr.mxu0 0.0
      %1185 = vmatpush1.msra.mxu0 0.0
      %1186 = vmatprep.subr.mxu0 0.0
      %1187 = vmatpush1.msra.mxu0 0.0
      %1188 = vmatprep.subr.mxu0 0.0
      %1189 = vmatpush1.msra.mxu0 0.0
      %1190 = vmatprep.subr.mxu0 0.0
      %1191 = vmatpush1.msra.mxu0 0.0
      %1192 = vmatprep.subr.mxu0 0.0
      %1193 = vmatpush1.msra.mxu0 0.0
      %1194 = vmatprep.subr.mxu0 0.0
      %1195 = vmatpush1.msra.mxu0 0.0
      %1196 = vmatprep.subr.mxu0 0.0
      %1197 = vmatpush1.msra.mxu0 0.0
      %1198 = vmatprep.subr.mxu0 0.0
      %1199 = vmatpush1.msra.mxu0 0.0
      %1200 = vmatprep.subr.mxu0 0.0
      %1201 = vmatpush1.msra.mxu0 0.0
      %1202 = vmatprep.subr.mxu0 0.0
      %1203 = vmatpush1.msra.mxu0 0.0
      %1204 = vmatprep.subr.mxu0 0.0
      %1205 = vmatpush1.msra.mxu0 0.0
      %1206 = vmatprep.subr.mxu0 0.0
      %1207 = vmatpush1.msra.mxu0 0.0
      %1208 = vmatprep.subr.mxu0 0.0
      %1209 = vmatpush1.msra.mxu0 0.0
      %1210 = vmatprep.subr.mxu0 %v1101
      %1211 = vmatpush1.msra.mxu0 %v1098
      %1212 = vmatprep.subr.mxu0 0.0
      %1213 = vmatpush2.msra.mxu0 0.0
      %1214 = vmatprep.subr.mxu0 0.0
      %1215 = vmatpush2.msra.mxu0 0.0
      %1216 = vmatprep.subr.mxu0 0.0
      %1217 = vmatpush2.msra.mxu0 0.0
      %1218 = vmatprep.subr.mxu0 0.0
      %1219 = vmatpush2.msra.mxu0 0.0
      %1220 = vmatprep.subr.mxu0 0.0
      %1221 = vmatpush2.msra.mxu0 0.0
      %1222 = vmatprep.subr.mxu0 0.0
      %1223 = vmatpush2.msra.mxu0 0.0
      %1224 = vmatprep.subr.mxu0 0.0
      %1225 = vmatpush2.msra.mxu0 0.0
      %1226 = vmatprep.subr.mxu0 0.0
      %1227 = vmatpush2.msra.mxu0 0.0
      %1228 = vmatprep.subr.mxu0 0.0
      %1229 = vmatpush2.msra.mxu0 0.0
      %1230 = vmatprep.subr.mxu0 0.0
      %1231 = vmatpush2.msra.mxu0 0.0
      %1232 = vmatprep.subr.mxu0 0.0
      %1233 = vmatpush2.msra.mxu0 0.0
      %1234 = vmatprep.subr.mxu0 0.0
      %1235 = vmatpush2.msra.mxu0 0.0
      %1236 = vmatprep.subr.mxu0 0.0
      %1237 = vmatpush2.msra.mxu0 0.0
      %1238 = vmatprep.subr.mxu0 0.0
      %1239 = vmatpush2.msra.mxu0 0.0
      %1240 = vmatprep.subr.mxu0 0.0
      %1241 = vmatpush2.msra.mxu0 0.0
      %1242 = vmatprep.subr.mxu0 0.0
      %1243 = vmatpush2.msra.mxu0 0.0
      %1244 = vmatprep.mubr.f32.mxu0 0.0
      %1245 = vmatmul.mubr.f32.gmra.mxu0 %v1085
      %v1246 = vpop.f32.mrf.mxu0
      %v1247 = vadd.f32 0.0, %v1246
      %v1248 = vpop.f32.mrf.mxu0
      %v1249 = vadd.f32 0.0, %v1248
      %1250 = vmatprep.mubr.f32.mxu0 0.0
      %1251 = vmatmul.mubr.f32.gmra.mxu0 %v1088
      %v1252 = vpop.f32.mrf.mxu0
      %v1253 = vadd.f32 0.0, %v1252
      %v1254 = vpop.f32.mrf.mxu0
      %v1255 = vadd.f32 0.0, %v1254
      %1256 = vdwg.mxu0
      %v1257 = vmax.f32 %v1170, 0.0
      %v1258 = vmax.f32 %v1172, 0.0
      %v1259 = vmax.f32 %v1247, 0.0
      %v1260 = vmax.f32 %v1249, 0.0
      %v1261 = vmax.f32 %v1176, 0.0
      %v1262 = vmax.f32 %v1178, 0.0
      %v1263 = vmax.f32 %v1253, 0.0
      %v1264 = vmax.f32 %v1255, 0.0
      %v1265 = vld [vmem:[%s6] sm:$0x7]
      %vm1266 = vcmask 97280
      %v1268 = vsel %vm1266, %v1265, 0
      %vm1270 = vcmask 1043456
      %v1272 = vsel %vm1270, %v1261, 0
      %v1275 = vsel %vm1270, %v1262, 0
      %v1278 = vsel %vm1270, %v1263, 0
      %v1281 = vsel %vm1270, %v1264, 0
      %1283 = vmatprep.subr.mxu0 0.0
      %1284 = vmatpush1.msra.mxu0 0.0
      %1285 = vmatprep.subr.mxu0 0.0
      %1286 = vmatpush1.msra.mxu0 0.0
      %1287 = vmatprep.subr.mxu0 0.0
      %1288 = vmatpush1.msra.mxu0 0.0
      %1289 = vmatprep.subr.mxu0 0.0
      %1290 = vmatpush1.msra.mxu0 0.0
      %1291 = vmatprep.subr.mxu0 0.0
      %1292 = vmatpush1.msra.mxu0 0.0
      %1293 = vmatprep.subr.mxu0 0.0
      %1294 = vmatpush1.msra.mxu0 0.0
      %1295 = vmatprep.subr.mxu0 0.0
      %1296 = vmatpush1.msra.mxu0 0.0
      %1297 = vmatprep.subr.mxu0 0.0
      %1298 = vmatpush1.msra.mxu0 0.0
      %1299 = vmatprep.subr.mxu0 0.0
      %1300 = vmatpush1.msra.mxu0 0.0
      %1301 = vmatprep.subr.mxu0 0.0
      %1302 = vmatpush1.msra.mxu0 0.0
      %1303 = vmatprep.subr.mxu0 0.0
      %1304 = vmatpush1.msra.mxu0 0.0
      %1305 = vmatprep.subr.mxu0 0.0
      %1306 = vmatpush1.msra.mxu0 0.0
      %1307 = vmatprep.subr.mxu0 0.0
      %1308 = vmatpush1.msra.mxu0 0.0
      %1309 = vmatprep.subr.mxu0 0.0
      %1310 = vmatpush1.msra.mxu0 0.0
      %1311 = vmatprep.subr.mxu0 %v1275
      %1312 = vmatpush1.msra.mxu0 %v1272
      %1313 = vmatprep.subr.mxu0 %v1258
      %1314 = vmatpush1.msra.mxu0 %v1257
      %1315 = vmatprep.subr.mxu0 0.0
      %1316 = vmatpush2.msra.mxu0 0.0
      %1317 = vmatprep.subr.mxu0 0.0
      %1318 = vmatpush2.msra.mxu0 0.0
      %1319 = vmatprep.subr.mxu0 0.0
      %1320 = vmatpush2.msra.mxu0 0.0
      %1321 = vmatprep.subr.mxu0 0.0
      %1322 = vmatpush2.msra.mxu0 0.0
      %1323 = vmatprep.subr.mxu0 0.0
      %1324 = vmatpush2.msra.mxu0 0.0
      %1325 = vmatprep.subr.mxu0 0.0
      %1326 = vmatpush2.msra.mxu0 0.0
      %1327 = vmatprep.subr.mxu0 0.0
      %1328 = vmatpush2.msra.mxu0 0.0
      %1329 = vmatprep.subr.mxu0 0.0
      %1330 = vmatpush2.msra.mxu0 0.0
      %1331 = vmatprep.subr.mxu0 0.0
      %1332 = vmatpush2.msra.mxu0 0.0
      %1333 = vmatprep.subr.mxu0 0.0
      %1334 = vmatpush2.msra.mxu0 0.0
      %1335 = vmatprep.subr.mxu0 0.0
      %1336 = vmatpush2.msra.mxu0 0.0
      %1337 = vmatprep.subr.mxu0 0.0
      %1338 = vmatpush2.msra.mxu0 0.0
      %1339 = vmatprep.subr.mxu0 0.0
      %1340 = vmatpush2.msra.mxu0 0.0
      %1341 = vmatprep.subr.mxu0 0.0
      %1342 = vmatpush2.msra.mxu0 0.0
      %1343 = vmatprep.subr.mxu0 0.0
      %1344 = vmatpush2.msra.mxu0 0.0
      %1345 = vmatprep.subr.mxu0 0.0
      %1346 = vmatpush2.msra.mxu0 0.0
      %1347 = vmatprep.mubr.f32.mxu0 0.0
      %1348 = vmatmul.mubr.f32.gmra.mxu0 %v1268
      %v1349 = vpop.f32.mrf.mxu0
      %v1350 = vadd.f32 0.0, %v1349
      %v1351 = vpop.f32.mrf.mxu0
      %v1352 = vadd.f32 0.0, %v1351
      %1353 = vdwg.mxu0
      %1354 = vmatprep.subr.mxu0 0.0
      %1355 = vmatpush1.msra.mxu0 0.0
      %1356 = vmatprep.subr.mxu0 0.0
      %1357 = vmatpush1.msra.mxu0 0.0
      %1358 = vmatprep.subr.mxu0 0.0
      %1359 = vmatpush1.msra.mxu0 0.0
      %1360 = vmatprep.subr.mxu0 0.0
      %1361 = vmatpush1.msra.mxu0 0.0
      %1362 = vmatprep.subr.mxu0 0.0
      %1363 = vmatpush1.msra.mxu0 0.0
      %1364 = vmatprep.subr.mxu0 0.0
      %1365 = vmatpush1.msra.mxu0 0.0
      %1366 = vmatprep.subr.mxu0 0.0
      %1367 = vmatpush1.msra.mxu0 0.0
      %1368 = vmatprep.subr.mxu0 0.0
      %1369 = vmatpush1.msra.mxu0 0.0
      %1370 = vmatprep.subr.mxu0 0.0
      %1371 = vmatpush1.msra.mxu0 0.0
      %1372 = vmatprep.subr.mxu0 0.0
      %1373 = vmatpush1.msra.mxu0 0.0
      %1374 = vmatprep.subr.mxu0 0.0
      %1375 = vmatpush1.msra.mxu0 0.0
      %1376 = vmatprep.subr.mxu0 0.0
      %1377 = vmatpush1.msra.mxu0 0.0
      %1378 = vmatprep.subr.mxu0 0.0
      %1379 = vmatpush1.msra.mxu0 0.0
      %1380 = vmatprep.subr.mxu0 0.0
      %1381 = vmatpush1.msra.mxu0 0.0
      %1382 = vmatprep.subr.mxu0 %v1281
      %1383 = vmatpush1.msra.mxu0 %v1278
      %1384 = vmatprep.subr.mxu0 %v1260
      %1385 = vmatpush1.msra.mxu0 %v1259
      %1386 = vmatprep.subr.mxu0 0.0
      %1387 = vmatpush2.msra.mxu0 0.0
      %1388 = vmatprep.subr.mxu0 0.0
      %1389 = vmatpush2.msra.mxu0 0.0
      %1390 = vmatprep.subr.mxu0 0.0
      %1391 = vmatpush2.msra.mxu0 0.0
      %1392 = vmatprep.subr.mxu0 0.0
      %1393 = vmatpush2.msra.mxu0 0.0
      %1394 = vmatprep.subr.mxu0 0.0
      %1395 = vmatpush2.msra.mxu0 0.0
      %1396 = vmatprep.subr.mxu0 0.0
      %1397 = vmatpush2.msra.mxu0 0.0
      %1398 = vmatprep.subr.mxu0 0.0
      %1399 = vmatpush2.msra.mxu0 0.0
      %1400 = vmatprep.subr.mxu0 0.0
      %1401 = vmatpush2.msra.mxu0 0.0
      %1402 = vmatprep.subr.mxu0 0.0
      %1403 = vmatpush2.msra.mxu0 0.0
      %1404 = vmatprep.subr.mxu0 0.0
      %1405 = vmatpush2.msra.mxu0 0.0
      %1406 = vmatprep.subr.mxu0 0.0
      %1407 = vmatpush2.msra.mxu0 0.0
      %1408 = vmatprep.subr.mxu0 0.0
      %1409 = vmatpush2.msra.mxu0 0.0
      %1410 = vmatprep.subr.mxu0 0.0
      %1411 = vmatpush2.msra.mxu0 0.0
      %1412 = vmatprep.subr.mxu0 0.0
      %1413 = vmatpush2.msra.mxu0 0.0
      %1414 = vmatprep.subr.mxu0 0.0
      %1415 = vmatpush2.msra.mxu0 0.0
      %1416 = vmatprep.subr.mxu0 0.0
      %1417 = vmatpush2.msra.mxu0 0.0
      %1418 = vmatprep.mubr.f32.mxu0 0.0
      %1419 = vmatmul.mubr.f32.gmra.mxu0 %v1268
      %v1420 = vpop.f32.mrf.mxu0
      %v1421 = vadd.f32 0.0, %v1420
      %v1422 = vpop.f32.mrf.mxu0
      %v1423 = vadd.f32 0.0, %v1422
      %1424 = vdwg.mxu0
      %v1425 = vsel %vm922, %v1350, 0.0
      %1426 = vadd.xlane.f32.xlu0 %v1425
      %v1427 = vpop.xlane.xlu0 %1426
      %v1428 = vmul.f32 %v1427, 0.0078125
      %v1429 = vsel %vm922, %v1352, 0.0
      %1430 = vadd.xlane.f32.xlu0 %v1429
      %v1431 = vpop.xlane.xlu0 %1430
      %v1432 = vmul.f32 %v1431, 0.0078125
      %v1433 = vsel %vm922, %v1421, 0.0
      %1434 = vadd.xlane.f32.xlu0 %v1433
      %v1435 = vpop.xlane.xlu0 %1434
      %v1436 = vmul.f32 %v1435, 0.0078125
      %v1437 = vsel %vm922, %v1423, 0.0
      %1438 = vadd.xlane.f32.xlu0 %v1437
      %v1439 = vpop.xlane.xlu0 %1438
      %v1440 = vmul.f32 %v1439, 0.0078125
      %v1445 = vrot.slane %v1428, 5
      %v1446 = vrot.slane %v1432, 5
      %v1447 = vrot.slane %v1436, 5
      %v1448 = vrot.slane %v1440, 5
      %v1453 = vsel %vm922, %v913, %v1445
      %v1454 = vsel %vm922, %v914, %v1446
      %v1455 = vsel %vm922, %v915, %v1447
      %v1456 = vsel %vm922, %v916, %v1448
      %v1457 = vld [vmem:[%s10] sm:$0x1]
      %v1459 = vsel %vm1083, %v1457, 0
      %v1462 = vsel %vm1090, %v1453, 0
      %v1465 = vsel %vm1090, %v1454, 0
      %v1468 = vsel %vm1090, %v1455, 0
      %v1471 = vsel %vm1090, %v1456, 0
      %1473 = vmatprep.subr.mxu0 0.0
      %1474 = vmatpush1.msra.mxu0 0.0
      %1475 = vmatprep.subr.mxu0 0.0
      %1476 = vmatpush1.msra.mxu0 0.0
      %1477 = vmatprep.subr.mxu0 0.0
      %1478 = vmatpush1.msra.mxu0 0.0
      %1479 = vmatprep.subr.mxu0 0.0
      %1480 = vmatpush1.msra.mxu0 0.0
      %1481 = vmatprep.subr.mxu0 0.0
      %1482 = vmatpush1.msra.mxu0 0.0
      %1483 = vmatprep.subr.mxu0 0.0
      %1484 = vmatpush1.msra.mxu0 0.0
      %1485 = vmatprep.subr.mxu0 0.0
      %1486 = vmatpush1.msra.mxu0 0.0
      %1487 = vmatprep.subr.mxu0 0.0
      %1488 = vmatpush1.msra.mxu0 0.0
      %1489 = vmatprep.subr.mxu0 0.0
      %1490 = vmatpush1.msra.mxu0 0.0
      %1491 = vmatprep.subr.mxu0 0.0
      %1492 = vmatpush1.msra.mxu0 0.0
      %1493 = vmatprep.subr.mxu0 0.0
      %1494 = vmatpush1.msra.mxu0 0.0
      %1495 = vmatprep.subr.mxu0 0.0
      %1496 = vmatpush1.msra.mxu0 0.0
      %1497 = vmatprep.subr.mxu0 0.0
      %1498 = vmatpush1.msra.mxu0 0.0
      %1499 = vmatprep.subr.mxu0 0.0
      %1500 = vmatpush1.msra.mxu0 0.0
      %1501 = vmatprep.subr.mxu0 0.0
      %1502 = vmatpush1.msra.mxu0 0.0
      %1503 = vmatprep.subr.mxu0 %v1465
      %1504 = vmatpush1.msra.mxu0 %v1462
      %1505 = vmatprep.subr.mxu0 0.0
      %1506 = vmatpush2.msra.mxu0 0.0
      %1507 = vmatprep.subr.mxu0 0.0
      %1508 = vmatpush2.msra.mxu0 0.0
      %1509 = vmatprep.subr.mxu0 0.0
      %1510 = vmatpush2.msra.mxu0 0.0
      %1511 = vmatprep.subr.mxu0 0.0
      %1512 = vmatpush2.msra.mxu0 0.0
      %1513 = vmatprep.subr.mxu0 0.0
      %1514 = vmatpush2.msra.mxu0 0.0
      %1515 = vmatprep.subr.mxu0 0.0
      %1516 = vmatpush2.msra.mxu0 0.0
      %1517 = vmatprep.subr.mxu0 0.0
      %1518 = vmatpush2.msra.mxu0 0.0
      %1519 = vmatprep.subr.mxu0 0.0
      %1520 = vmatpush2.msra.mxu0 0.0
      %1521 = vmatprep.subr.mxu0 0.0
      %1522 = vmatpush2.msra.mxu0 0.0
      %1523 = vmatprep.subr.mxu0 0.0
      %1524 = vmatpush2.msra.mxu0 0.0
      %1525 = vmatprep.subr.mxu0 0.0
      %1526 = vmatpush2.msra.mxu0 0.0
      %1527 = vmatprep.subr.mxu0 0.0
      %1528 = vmatpush2.msra.mxu0 0.0
      %1529 = vmatprep.subr.mxu0 0.0
      %1530 = vmatpush2.msra.mxu0 0.0
      %1531 = vmatprep.subr.mxu0 0.0
      %1532 = vmatpush2.msra.mxu0 0.0
      %1533 = vmatprep.subr.mxu0 0.0
      %1534 = vmatpush2.msra.mxu0 0.0
      %1535 = vmatprep.subr.mxu0 0.0
      %1536 = vmatpush2.msra.mxu0 0.0
      %1537 = vmatprep.mubr.f32.mxu0 0.0
      %1538 = vmatmul.mubr.f32.gmra.mxu0 %v1459
      %v1539 = vpop.f32.mrf.mxu0
      %v1540 = vadd.f32 0.0, %v1539
      %v1541 = vpop.f32.mrf.mxu0
      %v1542 = vadd.f32 0.0, %v1541
      %1543 = vdwg.mxu0
      %1544 = vmatprep.subr.mxu0 0.0
      %1545 = vmatpush1.msra.mxu0 0.0
      %1546 = vmatprep.subr.mxu0 0.0
      %1547 = vmatpush1.msra.mxu0 0.0
      %1548 = vmatprep.subr.mxu0 0.0
      %1549 = vmatpush1.msra.mxu0 0.0
      %1550 = vmatprep.subr.mxu0 0.0
      %1551 = vmatpush1.msra.mxu0 0.0
      %1552 = vmatprep.subr.mxu0 0.0
      %1553 = vmatpush1.msra.mxu0 0.0
      %1554 = vmatprep.subr.mxu0 0.0
      %1555 = vmatpush1.msra.mxu0 0.0
      %1556 = vmatprep.subr.mxu0 0.0
      %1557 = vmatpush1.msra.mxu0 0.0
      %1558 = vmatprep.subr.mxu0 0.0
      %1559 = vmatpush1.msra.mxu0 0.0
      %1560 = vmatprep.subr.mxu0 0.0
      %1561 = vmatpush1.msra.mxu0 0.0
      %1562 = vmatprep.subr.mxu0 0.0
      %1563 = vmatpush1.msra.mxu0 0.0
      %1564 = vmatprep.subr.mxu0 0.0
      %1565 = vmatpush1.msra.mxu0 0.0
      %1566 = vmatprep.subr.mxu0 0.0
      %1567 = vmatpush1.msra.mxu0 0.0
      %1568 = vmatprep.subr.mxu0 0.0
      %1569 = vmatpush1.msra.mxu0 0.0
      %1570 = vmatprep.subr.mxu0 0.0
      %1571 = vmatpush1.msra.mxu0 0.0
      %1572 = vmatprep.subr.mxu0 0.0
      %1573 = vmatpush1.msra.mxu0 0.0
      %1574 = vmatprep.subr.mxu0 %v1471
      %1575 = vmatpush1.msra.mxu0 %v1468
      %1576 = vmatprep.subr.mxu0 0.0
      %1577 = vmatpush2.msra.mxu0 0.0
      %1578 = vmatprep.subr.mxu0 0.0
      %1579 = vmatpush2.msra.mxu0 0.0
      %1580 = vmatprep.subr.mxu0 0.0
      %1581 = vmatpush2.msra.mxu0 0.0
      %1582 = vmatprep.subr.mxu0 0.0
      %1583 = vmatpush2.msra.mxu0 0.0
      %1584 = vmatprep.subr.mxu0 0.0
      %1585 = vmatpush2.msra.mxu0 0.0
      %1586 = vmatprep.subr.mxu0 0.0
      %1587 = vmatpush2.msra.mxu0 0.0
      %1588 = vmatprep.subr.mxu0 0.0
      %1589 = vmatpush2.msra.mxu0 0.0
      %1590 = vmatprep.subr.mxu0 0.0
      %1591 = vmatpush2.msra.mxu0 0.0
      %1592 = vmatprep.subr.mxu0 0.0
      %1593 = vmatpush2.msra.mxu0 0.0
      %1594 = vmatprep.subr.mxu0 0.0
      %1595 = vmatpush2.msra.mxu0 0.0
      %1596 = vmatprep.subr.mxu0 0.0
      %1597 = vmatpush2.msra.mxu0 0.0
      %1598 = vmatprep.subr.mxu0 0.0
      %1599 = vmatpush2.msra.mxu0 0.0
      %1600 = vmatprep.subr.mxu0 0.0
      %1601 = vmatpush2.msra.mxu0 0.0
      %1602 = vmatprep.subr.mxu0 0.0
      %1603 = vmatpush2.msra.mxu0 0.0
      %1604 = vmatprep.subr.mxu0 0.0
      %1605 = vmatpush2.msra.mxu0 0.0
      %1606 = vmatprep.subr.mxu0 0.0
      %1607 = vmatpush2.msra.mxu0 0.0
      %1608 = vmatprep.mubr.f32.mxu0 0.0
      %1609 = vmatmul.mubr.f32.gmra.mxu0 %v1459
      %v1610 = vpop.f32.mrf.mxu0
      %v1611 = vadd.f32 0.0, %v1610
      %v1612 = vpop.f32.mrf.mxu0
      %v1613 = vadd.f32 0.0, %v1612
      %1614 = vdwg.mxu0
      %v1615 = vld [vmem:[%s7] sm:$0xff]
      %v1616 = vld [vmem:[%s7 + $0x8] sm:$0xf]
      %v1618 = vsel %vm1083, %v1615, 0
      %v1621 = vsel %vm1083, %v1616, 0
      %1623 = vmatprep.subr.mxu0 0.0
      %1624 = vmatpush1.msra.mxu0 0.0
      %1625 = vmatprep.subr.mxu0 0.0
      %1626 = vmatpush1.msra.mxu0 0.0
      %1627 = vmatprep.subr.mxu0 0.0
      %1628 = vmatpush1.msra.mxu0 0.0
      %1629 = vmatprep.subr.mxu0 0.0
      %1630 = vmatpush1.msra.mxu0 0.0
      %1631 = vmatprep.subr.mxu0 0.0
      %1632 = vmatpush1.msra.mxu0 0.0
      %1633 = vmatprep.subr.mxu0 0.0
      %1634 = vmatpush1.msra.mxu0 0.0
      %1635 = vmatprep.subr.mxu0 0.0
      %1636 = vmatpush1.msra.mxu0 0.0
      %1637 = vmatprep.subr.mxu0 0.0
      %1638 = vmatpush1.msra.mxu0 0.0
      %1639 = vmatprep.subr.mxu0 0.0
      %1640 = vmatpush1.msra.mxu0 0.0
      %1641 = vmatprep.subr.mxu0 0.0
      %1642 = vmatpush1.msra.mxu0 0.0
      %1643 = vmatprep.subr.mxu0 0.0
      %1644 = vmatpush1.msra.mxu0 0.0
      %1645 = vmatprep.subr.mxu0 0.0
      %1646 = vmatpush1.msra.mxu0 0.0
      %1647 = vmatprep.subr.mxu0 0.0
      %1648 = vmatpush1.msra.mxu0 0.0
      %1649 = vmatprep.subr.mxu0 0.0
      %1650 = vmatpush1.msra.mxu0 0.0
      %1651 = vmatprep.subr.mxu0 0.0
      %1652 = vmatpush1.msra.mxu0 0.0
      %1653 = vmatprep.subr.mxu0 %v1465
      %1654 = vmatpush1.msra.mxu0 %v1462
      %1655 = vmatprep.subr.mxu0 0.0
      %1656 = vmatpush2.msra.mxu0 0.0
      %1657 = vmatprep.subr.mxu0 0.0
      %1658 = vmatpush2.msra.mxu0 0.0
      %1659 = vmatprep.subr.mxu0 0.0
      %1660 = vmatpush2.msra.mxu0 0.0
      %1661 = vmatprep.subr.mxu0 0.0
      %1662 = vmatpush2.msra.mxu0 0.0
      %1663 = vmatprep.subr.mxu0 0.0
      %1664 = vmatpush2.msra.mxu0 0.0
      %1665 = vmatprep.subr.mxu0 0.0
      %1666 = vmatpush2.msra.mxu0 0.0
      %1667 = vmatprep.subr.mxu0 0.0
      %1668 = vmatpush2.msra.mxu0 0.0
      %1669 = vmatprep.subr.mxu0 0.0
      %1670 = vmatpush2.msra.mxu0 0.0
      %1671 = vmatprep.subr.mxu0 0.0
      %1672 = vmatpush2.msra.mxu0 0.0
      %1673 = vmatprep.subr.mxu0 0.0
      %1674 = vmatpush2.msra.mxu0 0.0
      %1675 = vmatprep.subr.mxu0 0.0
      %1676 = vmatpush2.msra.mxu0 0.0
      %1677 = vmatprep.subr.mxu0 0.0
      %1678 = vmatpush2.msra.mxu0 0.0
      %1679 = vmatprep.subr.mxu0 0.0
      %1680 = vmatpush2.msra.mxu0 0.0
      %1681 = vmatprep.subr.mxu0 0.0
      %1682 = vmatpush2.msra.mxu0 0.0
      %1683 = vmatprep.subr.mxu0 0.0
      %1684 = vmatpush2.msra.mxu0 0.0
      %1685 = vmatprep.subr.mxu0 0.0
      %1686 = vmatpush2.msra.mxu0 0.0
      %1687 = vmatprep.mubr.f32.mxu0 0.0
      %1688 = vmatmul.mubr.f32.gmra.mxu0 %v1618
      %v1689 = vpop.f32.mrf.mxu0
      %v1690 = vadd.f32 0.0, %v1689
      %v1691 = vpop.f32.mrf.mxu0
      %v1692 = vadd.f32 0.0, %v1691
      %1693 = vmatprep.mubr.f32.mxu0 0.0
      %1694 = vmatmul.mubr.f32.gmra.mxu0 %v1621
      %v1695 = vpop.f32.mrf.mxu0
      %v1696 = vadd.f32 0.0, %v1695
      %v1697 = vpop.f32.mrf.mxu0
      %v1698 = vadd.f32 0.0, %v1697
      %1699 = vdwg.mxu0
      %1700 = vmatprep.subr.mxu0 0.0
      %1701 = vmatpush1.msra.mxu0 0.0
      %1702 = vmatprep.subr.mxu0 0.0
      %1703 = vmatpush1.msra.mxu0 0.0
      %1704 = vmatprep.subr.mxu0 0.0
      %1705 = vmatpush1.msra.mxu0 0.0
      %1706 = vmatprep.subr.mxu0 0.0
      %1707 = vmatpush1.msra.mxu0 0.0
      %1708 = vmatprep.subr.mxu0 0.0
      %1709 = vmatpush1.msra.mxu0 0.0
      %1710 = vmatprep.subr.mxu0 0.0
      %1711 = vmatpush1.msra.mxu0 0.0
      %1712 = vmatprep.subr.mxu0 0.0
      %1713 = vmatpush1.msra.mxu0 0.0
      %1714 = vmatprep.subr.mxu0 0.0
      %1715 = vmatpush1.msra.mxu0 0.0
      %1716 = vmatprep.subr.mxu0 0.0
      %1717 = vmatpush1.msra.mxu0 0.0
      %1718 = vmatprep.subr.mxu0 0.0
      %1719 = vmatpush1.msra.mxu0 0.0
      %1720 = vmatprep.subr.mxu0 0.0
      %1721 = vmatpush1.msra.mxu0 0.0
      %1722 = vmatprep.subr.mxu0 0.0
      %1723 = vmatpush1.msra.mxu0 0.0
      %1724 = vmatprep.subr.mxu0 0.0
      %1725 = vmatpush1.msra.mxu0 0.0
      %1726 = vmatprep.subr.mxu0 0.0
      %1727 = vmatpush1.msra.mxu0 0.0
      %1728 = vmatprep.subr.mxu0 0.0
      %1729 = vmatpush1.msra.mxu0 0.0
      %1730 = vmatprep.subr.mxu0 %v1471
      %1731 = vmatpush1.msra.mxu0 %v1468
      %1732 = vmatprep.subr.mxu0 0.0
      %1733 = vmatpush2.msra.mxu0 0.0
      %1734 = vmatprep.subr.mxu0 0.0
      %1735 = vmatpush2.msra.mxu0 0.0
      %1736 = vmatprep.subr.mxu0 0.0
      %1737 = vmatpush2.msra.mxu0 0.0
      %1738 = vmatprep.subr.mxu0 0.0
      %1739 = vmatpush2.msra.mxu0 0.0
      %1740 = vmatprep.subr.mxu0 0.0
      %1741 = vmatpush2.msra.mxu0 0.0
      %1742 = vmatprep.subr.mxu0 0.0
      %1743 = vmatpush2.msra.mxu0 0.0
      %1744 = vmatprep.subr.mxu0 0.0
      %1745 = vmatpush2.msra.mxu0 0.0
      %1746 = vmatprep.subr.mxu0 0.0
      %1747 = vmatpush2.msra.mxu0 0.0
      %1748 = vmatprep.subr.mxu0 0.0
      %1749 = vmatpush2.msra.mxu0 0.0
      %1750 = vmatprep.subr.mxu0 0.0
      %1751 = vmatpush2.msra.mxu0 0.0
      %1752 = vmatprep.subr.mxu0 0.0
      %1753 = vmatpush2.msra.mxu0 0.0
      %1754 = vmatprep.subr.mxu0 0.0
      %1755 = vmatpush2.msra.mxu0 0.0
      %1756 = vmatprep.subr.mxu0 0.0
      %1757 = vmatpush2.msra.mxu0 0.0
      %1758 = vmatprep.subr.mxu0 0.0
      %1759 = vmatpush2.msra.mxu0 0.0
      %1760 = vmatprep.subr.mxu0 0.0
      %1761 = vmatpush2.msra.mxu0 0.0
      %1762 = vmatprep.subr.mxu0 0.0
      %1763 = vmatpush2.msra.mxu0 0.0
      %1764 = vmatprep.mubr.f32.mxu0 0.0
      %1765 = vmatmul.mubr.f32.gmra.mxu0 %v1618
      %v1766 = vpop.f32.mrf.mxu0
      %v1767 = vadd.f32 0.0, %v1766
      %v1768 = vpop.f32.mrf.mxu0
      %v1769 = vadd.f32 0.0, %v1768
      %1770 = vmatprep.mubr.f32.mxu0 0.0
      %1771 = vmatmul.mubr.f32.gmra.mxu0 %v1621
      %v1772 = vpop.f32.mrf.mxu0
      %v1773 = vadd.f32 0.0, %v1772
      %v1774 = vpop.f32.mrf.mxu0
      %v1775 = vadd.f32 0.0, %v1774
      %1776 = vdwg.mxu0
      %v1777 = vmax.f32 %v1690, 0.0
      %v1778 = vmax.f32 %v1692, 0.0
      %v1779 = vmax.f32 %v1767, 0.0
      %v1780 = vmax.f32 %v1769, 0.0
      %v1781 = vmax.f32 %v1696, 0.0
      %v1782 = vmax.f32 %v1698, 0.0
      %v1783 = vmax.f32 %v1773, 0.0
      %v1784 = vmax.f32 %v1775, 0.0
      %v1785 = vld [vmem:[%s8] sm:$0xff]
      %v1786 = vld [vmem:[%s8 + $0x8] sm:$0xff]
      %v1787 = vld [vmem:[%s8 + $0x10] sm:$0xff]
      %v1789 = vsel %vm1266, %v1785, 0
      %v1792 = vsel %vm1266, %v1786, 0
      %v1795 = vsel %vm1266, %v1787, 0
      %v1798 = vsel %vm1270, %v1781, 0
      %v1801 = vsel %vm1270, %v1782, 0
      %v1804 = vsel %vm1270, %v1783, 0
      %v1807 = vsel %vm1270, %v1784, 0
      %1809 = vmatprep.subr.mxu0 0.0
      %1810 = vmatpush1.msra.mxu0 0.0
      %1811 = vmatprep.subr.mxu0 0.0
      %1812 = vmatpush1.msra.mxu0 0.0
      %1813 = vmatprep.subr.mxu0 0.0
      %1814 = vmatpush1.msra.mxu0 0.0
      %1815 = vmatprep.subr.mxu0 0.0
      %1816 = vmatpush1.msra.mxu0 0.0
      %1817 = vmatprep.subr.mxu0 0.0
      %1818 = vmatpush1.msra.mxu0 0.0
      %1819 = vmatprep.subr.mxu0 0.0
      %1820 = vmatpush1.msra.mxu0 0.0
      %1821 = vmatprep.subr.mxu0 0.0
      %1822 = vmatpush1.msra.mxu0 0.0
      %1823 = vmatprep.subr.mxu0 0.0
      %1824 = vmatpush1.msra.mxu0 0.0
      %1825 = vmatprep.subr.mxu0 0.0
      %1826 = vmatpush1.msra.mxu0 0.0
      %1827 = vmatprep.subr.mxu0 0.0
      %1828 = vmatpush1.msra.mxu0 0.0
      %1829 = vmatprep.subr.mxu0 0.0
      %1830 = vmatpush1.msra.mxu0 0.0
      %1831 = vmatprep.subr.mxu0 0.0
      %1832 = vmatpush1.msra.mxu0 0.0
      %1833 = vmatprep.subr.mxu0 0.0
      %1834 = vmatpush1.msra.mxu0 0.0
      %1835 = vmatprep.subr.mxu0 0.0
      %1836 = vmatpush1.msra.mxu0 0.0
      %1837 = vmatprep.subr.mxu0 %v1801
      %1838 = vmatpush1.msra.mxu0 %v1798
      %1839 = vmatprep.subr.mxu0 %v1778
      %1840 = vmatpush1.msra.mxu0 %v1777
      %1841 = vmatprep.subr.mxu0 0.0
      %1842 = vmatpush2.msra.mxu0 0.0
      %1843 = vmatprep.subr.mxu0 0.0
      %1844 = vmatpush2.msra.mxu0 0.0
      %1845 = vmatprep.subr.mxu0 0.0
      %1846 = vmatpush2.msra.mxu0 0.0
      %1847 = vmatprep.subr.mxu0 0.0
      %1848 = vmatpush2.msra.mxu0 0.0
      %1849 = vmatprep.subr.mxu0 0.0
      %1850 = vmatpush2.msra.mxu0 0.0
      %1851 = vmatprep.subr.mxu0 0.0
      %1852 = vmatpush2.msra.mxu0 0.0
      %1853 = vmatprep.subr.mxu0 0.0
      %1854 = vmatpush2.msra.mxu0 0.0
      %1855 = vmatprep.subr.mxu0 0.0
      %1856 = vmatpush2.msra.mxu0 0.0
      %1857 = vmatprep.subr.mxu0 0.0
      %1858 = vmatpush2.msra.mxu0 0.0
      %1859 = vmatprep.subr.mxu0 0.0
      %1860 = vmatpush2.msra.mxu0 0.0
      %1861 = vmatprep.subr.mxu0 0.0
      %1862 = vmatpush2.msra.mxu0 0.0
      %1863 = vmatprep.subr.mxu0 0.0
      %1864 = vmatpush2.msra.mxu0 0.0
      %1865 = vmatprep.subr.mxu0 0.0
      %1866 = vmatpush2.msra.mxu0 0.0
      %1867 = vmatprep.subr.mxu0 0.0
      %1868 = vmatpush2.msra.mxu0 0.0
      %1869 = vmatprep.subr.mxu0 0.0
      %1870 = vmatpush2.msra.mxu0 0.0
      %1871 = vmatprep.subr.mxu0 0.0
      %1872 = vmatpush2.msra.mxu0 0.0
      %1873 = vmatprep.mubr.f32.mxu0 0.0
      %1874 = vmatmul.mubr.f32.gmra.mxu0 %v1789
      %v1875 = vpop.f32.mrf.mxu0
      %v1876 = vadd.f32 0.0, %v1875
      %v1877 = vpop.f32.mrf.mxu0
      %v1878 = vadd.f32 0.0, %v1877
      %1879 = vmatprep.mubr.f32.mxu0 0.0
      %1880 = vmatmul.mubr.f32.gmra.mxu0 %v1792
      %v1881 = vpop.f32.mrf.mxu0
      %v1882 = vadd.f32 0.0, %v1881
      %v1883 = vpop.f32.mrf.mxu0
      %v1884 = vadd.f32 0.0, %v1883
      %1885 = vmatprep.mubr.f32.mxu0 0.0
      %1886 = vmatmul.mubr.f32.gmra.mxu0 %v1795
      %v1887 = vpop.f32.mrf.mxu0
      %v1888 = vadd.f32 0.0, %v1887
      %v1889 = vpop.f32.mrf.mxu0
      %v1890 = vadd.f32 0.0, %v1889
      %1891 = vdwg.mxu0
      %1892 = vmatprep.subr.mxu0 0.0
      %1893 = vmatpush1.msra.mxu0 0.0
      %1894 = vmatprep.subr.mxu0 0.0
      %1895 = vmatpush1.msra.mxu0 0.0
      %1896 = vmatprep.subr.mxu0 0.0
      %1897 = vmatpush1.msra.mxu0 0.0
      %1898 = vmatprep.subr.mxu0 0.0
      %1899 = vmatpush1.msra.mxu0 0.0
      %1900 = vmatprep.subr.mxu0 0.0
      %1901 = vmatpush1.msra.mxu0 0.0
      %1902 = vmatprep.subr.mxu0 0.0
      %1903 = vmatpush1.msra.mxu0 0.0
      %1904 = vmatprep.subr.mxu0 0.0
      %1905 = vmatpush1.msra.mxu0 0.0
      %1906 = vmatprep.subr.mxu0 0.0
      %1907 = vmatpush1.msra.mxu0 0.0
      %1908 = vmatprep.subr.mxu0 0.0
      %1909 = vmatpush1.msra.mxu0 0.0
      %1910 = vmatprep.subr.mxu0 0.0
      %1911 = vmatpush1.msra.mxu0 0.0
      %1912 = vmatprep.subr.mxu0 0.0
      %1913 = vmatpush1.msra.mxu0 0.0
      %1914 = vmatprep.subr.mxu0 0.0
      %1915 = vmatpush1.msra.mxu0 0.0
      %1916 = vmatprep.subr.mxu0 0.0
      %1917 = vmatpush1.msra.mxu0 0.0
      %1918 = vmatprep.subr.mxu0 0.0
      %1919 = vmatpush1.msra.mxu0 0.0
      %1920 = vmatprep.subr.mxu0 %v1807
      %1921 = vmatpush1.msra.mxu0 %v1804
      %1922 = vmatprep.subr.mxu0 %v1780
      %1923 = vmatpush1.msra.mxu0 %v1779
      %1924 = vmatprep.subr.mxu0 0.0
      %1925 = vmatpush2.msra.mxu0 0.0
      %1926 = vmatprep.subr.mxu0 0.0
      %1927 = vmatpush2.msra.mxu0 0.0
      %1928 = vmatprep.subr.mxu0 0.0
      %1929 = vmatpush2.msra.mxu0 0.0
      %1930 = vmatprep.subr.mxu0 0.0
      %1931 = vmatpush2.msra.mxu0 0.0
      %1932 = vmatprep.subr.mxu0 0.0
      %1933 = vmatpush2.msra.mxu0 0.0
      %1934 = vmatprep.subr.mxu0 0.0
      %1935 = vmatpush2.msra.mxu0 0.0
      %1936 = vmatprep.subr.mxu0 0.0
      %1937 = vmatpush2.msra.mxu0 0.0
      %1938 = vmatprep.subr.mxu0 0.0
      %1939 = vmatpush2.msra.mxu0 0.0
      %1940 = vmatprep.subr.mxu0 0.0
      %1941 = vmatpush2.msra.mxu0 0.0
      %1942 = vmatprep.subr.mxu0 0.0
      %1943 = vmatpush2.msra.mxu0 0.0
      %1944 = vmatprep.subr.mxu0 0.0
      %1945 = vmatpush2.msra.mxu0 0.0
      %1946 = vmatprep.subr.mxu0 0.0
      %1947 = vmatpush2.msra.mxu0 0.0
      %1948 = vmatprep.subr.mxu0 0.0
      %1949 = vmatpush2.msra.mxu0 0.0
      %1950 = vmatprep.subr.mxu0 0.0
      %1951 = vmatpush2.msra.mxu0 0.0
      %1952 = vmatprep.subr.mxu0 0.0
      %1953 = vmatpush2.msra.mxu0 0.0
      %1954 = vmatprep.subr.mxu0 0.0
      %1955 = vmatpush2.msra.mxu0 0.0
      %1956 = vmatprep.mubr.f32.mxu0 0.0
      %1957 = vmatmul.mubr.f32.gmra.mxu0 %v1789
      %v1958 = vpop.f32.mrf.mxu0
      %v1959 = vadd.f32 0.0, %v1958
      %v1960 = vpop.f32.mrf.mxu0
      %v1961 = vadd.f32 0.0, %v1960
      %1962 = vmatprep.mubr.f32.mxu0 0.0
      %1963 = vmatmul.mubr.f32.gmra.mxu0 %v1792
      %v1964 = vpop.f32.mrf.mxu0
      %v1965 = vadd.f32 0.0, %v1964
      %v1966 = vpop.f32.mrf.mxu0
      %v1967 = vadd.f32 0.0, %v1966
      %1968 = vmatprep.mubr.f32.mxu0 0.0
      %1969 = vmatmul.mubr.f32.gmra.mxu0 %v1795
      %v1970 = vpop.f32.mrf.mxu0
      %v1971 = vadd.f32 0.0, %v1970
      %v1972 = vpop.f32.mrf.mxu0
      %v1973 = vadd.f32 0.0, %v1972
      %1974 = vdwg.mxu0
      %v1975 = vmax.f32 %v1876, 0.0
      %v1976 = vmax.f32 %v1878, 0.0
      %v1977 = vmax.f32 %v1959, 0.0
      %v1978 = vmax.f32 %v1961, 0.0
      %v1979 = vmax.f32 %v1882, 0.0
      %v1980 = vmax.f32 %v1884, 0.0
      %v1981 = vmax.f32 %v1965, 0.0
      %v1982 = vmax.f32 %v1967, 0.0
      %v1983 = vmax.f32 %v1888, 0.0
      %v1984 = vmax.f32 %v1890, 0.0
      %v1985 = vmax.f32 %v1971, 0.0
      %v1986 = vmax.f32 %v1973, 0.0
      %v1987 = vld [vmem:[%s9] sm:$0x1]
      %vm1988 = vcmask 195584
      %v1990 = vsel %vm1988, %v1987, 0
      %1992 = vmatprep.subr.mxu0 0.0
      %1993 = vmatpush1.msra.mxu0 0.0
      %1994 = vmatprep.subr.mxu0 0.0
      %1995 = vmatpush1.msra.mxu0 0.0
      %1996 = vmatprep.subr.mxu0 0.0
      %1997 = vmatpush1.msra.mxu0 0.0
      %1998 = vmatprep.subr.mxu0 0.0
      %1999 = vmatpush1.msra.mxu0 0.0
      %2000 = vmatprep.subr.mxu0 0.0
      %2001 = vmatpush1.msra.mxu0 0.0
      %2002 = vmatprep.subr.mxu0 0.0
      %2003 = vmatpush1.msra.mxu0 0.0
      %2004 = vmatprep.subr.mxu0 0.0
      %2005 = vmatpush1.msra.mxu0 0.0
      %2006 = vmatprep.subr.mxu0 0.0
      %2007 = vmatpush1.msra.mxu0 0.0
      %2008 = vmatprep.subr.mxu0 0.0
      %2009 = vmatpush1.msra.mxu0 0.0
      %2010 = vmatprep.subr.mxu0 0.0
      %2011 = vmatpush1.msra.mxu0 0.0
      %2012 = vmatprep.subr.mxu0 0.0
      %2013 = vmatpush1.msra.mxu0 0.0
      %2014 = vmatprep.subr.mxu0 0.0
      %2015 = vmatpush1.msra.mxu0 0.0
      %2016 = vmatprep.subr.mxu0 0.0
      %2017 = vmatpush1.msra.mxu0 0.0
      %2018 = vmatprep.subr.mxu0 %v1984
      %2019 = vmatpush1.msra.mxu0 %v1983
      %2020 = vmatprep.subr.mxu0 %v1980
      %2021 = vmatpush1.msra.mxu0 %v1979
      %2022 = vmatprep.subr.mxu0 %v1976
      %2023 = vmatpush1.msra.mxu0 %v1975
      %2024 = vmatprep.subr.mxu0 0.0
      %2025 = vmatpush2.msra.mxu0 0.0
      %2026 = vmatprep.subr.mxu0 0.0
      %2027 = vmatpush2.msra.mxu0 0.0
      %2028 = vmatprep.subr.mxu0 0.0
      %2029 = vmatpush2.msra.mxu0 0.0
      %2030 = vmatprep.subr.mxu0 0.0
      %2031 = vmatpush2.msra.mxu0 0.0
      %2032 = vmatprep.subr.mxu0 0.0
      %2033 = vmatpush2.msra.mxu0 0.0
      %2034 = vmatprep.subr.mxu0 0.0
      %2035 = vmatpush2.msra.mxu0 0.0
      %2036 = vmatprep.subr.mxu0 0.0
      %2037 = vmatpush2.msra.mxu0 0.0
      %2038 = vmatprep.subr.mxu0 0.0
      %2039 = vmatpush2.msra.mxu0 0.0
      %2040 = vmatprep.subr.mxu0 0.0
      %2041 = vmatpush2.msra.mxu0 0.0
      %2042 = vmatprep.subr.mxu0 0.0
      %2043 = vmatpush2.msra.mxu0 0.0
      %2044 = vmatprep.subr.mxu0 0.0
      %2045 = vmatpush2.msra.mxu0 0.0
      %2046 = vmatprep.subr.mxu0 0.0
      %2047 = vmatpush2.msra.mxu0 0.0
      %2048 = vmatprep.subr.mxu0 0.0
      %2049 = vmatpush2.msra.mxu0 0.0
      %2050 = vmatprep.subr.mxu0 0.0
      %2051 = vmatpush2.msra.mxu0 0.0
      %2052 = vmatprep.subr.mxu0 0.0
      %2053 = vmatpush2.msra.mxu0 0.0
      %2054 = vmatprep.subr.mxu0 0.0
      %2055 = vmatpush2.msra.mxu0 0.0
      %2056 = vmatprep.mubr.f32.mxu0 0.0
      %2057 = vmatmul.mubr.f32.gmra.mxu0 %v1990
      %v2058 = vpop.f32.mrf.mxu0
      %v2059 = vadd.f32 %v1540, %v2058
      %v2060 = vpop.f32.mrf.mxu0
      %v2061 = vadd.f32 %v1542, %v2060
      %2062 = vdwg.mxu0
      %2063 = vmatprep.subr.mxu0 0.0
      %2064 = vmatpush1.msra.mxu0 0.0
      %2065 = vmatprep.subr.mxu0 0.0
      %2066 = vmatpush1.msra.mxu0 0.0
      %2067 = vmatprep.subr.mxu0 0.0
      %2068 = vmatpush1.msra.mxu0 0.0
      %2069 = vmatprep.subr.mxu0 0.0
      %2070 = vmatpush1.msra.mxu0 0.0
      %2071 = vmatprep.subr.mxu0 0.0
      %2072 = vmatpush1.msra.mxu0 0.0
      %2073 = vmatprep.subr.mxu0 0.0
      %2074 = vmatpush1.msra.mxu0 0.0
      %2075 = vmatprep.subr.mxu0 0.0
      %2076 = vmatpush1.msra.mxu0 0.0
      %2077 = vmatprep.subr.mxu0 0.0
      %2078 = vmatpush1.msra.mxu0 0.0
      %2079 = vmatprep.subr.mxu0 0.0
      %2080 = vmatpush1.msra.mxu0 0.0
      %2081 = vmatprep.subr.mxu0 0.0
      %2082 = vmatpush1.msra.mxu0 0.0
      %2083 = vmatprep.subr.mxu0 0.0
      %2084 = vmatpush1.msra.mxu0 0.0
      %2085 = vmatprep.subr.mxu0 0.0
      %2086 = vmatpush1.msra.mxu0 0.0
      %2087 = vmatprep.subr.mxu0 0.0
      %2088 = vmatpush1.msra.mxu0 0.0
      %2089 = vmatprep.subr.mxu0 %v1986
      %2090 = vmatpush1.msra.mxu0 %v1985
      %2091 = vmatprep.subr.mxu0 %v1982
      %2092 = vmatpush1.msra.mxu0 %v1981
      %2093 = vmatprep.subr.mxu0 %v1978
      %2094 = vmatpush1.msra.mxu0 %v1977
      %2095 = vmatprep.subr.mxu0 0.0
      %2096 = vmatpush2.msra.mxu0 0.0
      %2097 = vmatprep.subr.mxu0 0.0
      %2098 = vmatpush2.msra.mxu0 0.0
      %2099 = vmatprep.subr.mxu0 0.0
      %2100 = vmatpush2.msra.mxu0 0.0
      %2101 = vmatprep.subr.mxu0 0.0
      %2102 = vmatpush2.msra.mxu0 0.0
      %2103 = vmatprep.subr.mxu0 0.0
      %2104 = vmatpush2.msra.mxu0 0.0
      %2105 = vmatprep.subr.mxu0 0.0
      %2106 = vmatpush2.msra.mxu0 0.0
      %2107 = vmatprep.subr.mxu0 0.0
      %2108 = vmatpush2.msra.mxu0 0.0
      %2109 = vmatprep.subr.mxu0 0.0
      %2110 = vmatpush2.msra.mxu0 0.0
      %2111 = vmatprep.subr.mxu0 0.0
      %2112 = vmatpush2.msra.mxu0 0.0
      %2113 = vmatprep.subr.mxu0 0.0
      %2114 = vmatpush2.msra.mxu0 0.0
      %2115 = vmatprep.subr.mxu0 0.0
      %2116 = vmatpush2.msra.mxu0 0.0
      %2117 = vmatprep.subr.mxu0 0.0
      %2118 = vmatpush2.msra.mxu0 0.0
      %2119 = vmatprep.subr.mxu0 0.0
      %2120 = vmatpush2.msra.mxu0 0.0
      %2121 = vmatprep.subr.mxu0 0.0
      %2122 = vmatpush2.msra.mxu0 0.0
      %2123 = vmatprep.subr.mxu0 0.0
      %2124 = vmatpush2.msra.mxu0 0.0
      %2125 = vmatprep.subr.mxu0 0.0
      %2126 = vmatpush2.msra.mxu0 0.0
      %2127 = vmatprep.mubr.f32.mxu0 0.0
      %2128 = vmatmul.mubr.f32.gmra.mxu0 %v1990
      %v2129 = vpop.f32.mrf.mxu0
      %v2130 = vadd.f32 %v1611, %v2129
      %v2131 = vpop.f32.mrf.mxu0
      %v2132 = vadd.f32 %v1613, %v2131
      %2133 = vdwg.mxu0
      %v2134 = vsub.f32 %v495, %v667
      %v2135 = vsub.f32 %v496, %v737
      %v2136 = vsub.f32 %v497, %v807
      %v2137 = vsub.f32 %v498, %v877
      %v2138 = vmul.f32 %v2059, %v503
      %v2139 = vmul.f32 %v2061, %v504
      %v2140 = vmul.f32 %v2130, %v505
      %v2141 = vmul.f32 %v2132, %v506
      %v2142 = vsel %vm531, %v2138, 0.0
      %2143 = vadd.xlane.f32.xlu0 %v2142
      %v2144 = vpop.xlane.xlu0 %2143
      %v2145 = vsel %vm531, %v2139, 0.0
      %2146 = vadd.xlane.f32.xlu0 %v2145
      %v2147 = vpop.xlane.xlu0 %2146
      %v2148 = vsel %vm531, %v2140, 0.0
      %2149 = vadd.xlane.f32.xlu0 %v2148
      %v2150 = vpop.xlane.xlu0 %2149
      %v2151 = vsel %vm531, %v2141, 0.0
      %2152 = vadd.xlane.f32.xlu0 %v2151
      %v2153 = vpop.xlane.xlu0 %2152
      %v2154 = vmul.f32 %v2134, %v503
      %v2155 = vmul.f32 %v2135, %v504
      %v2156 = vmul.f32 %v2136, %v505
      %v2157 = vmul.f32 %v2137, %v506
      %v2158 = vsel %vm531, %v2154, 0.0
      %2159 = vadd.xlane.f32.xlu0 %v2158
      %v2160 = vpop.xlane.xlu0 %2159
      %v2161 = vsel %vm531, %v2155, 0.0
      %2162 = vadd.xlane.f32.xlu0 %v2161
      %v2163 = vpop.xlane.xlu0 %2162
      %v2164 = vsel %vm531, %v2156, 0.0
      %2165 = vadd.xlane.f32.xlu0 %v2164
      %v2166 = vpop.xlane.xlu0 %2165
      %v2167 = vsel %vm531, %v2157, 0.0
      %2168 = vadd.xlane.f32.xlu0 %v2167
      %v2169 = vpop.xlane.xlu0 %2168
      %v2170 = vmul.f32 %v2134, %v491
      %v2171 = vmul.f32 %v2135, %v492
      %v2172 = vmul.f32 %v2136, %v493
      %v2173 = vmul.f32 %v2137, %v494
      %v2174 = vsel %vm531, %v2170, 0.0
      %2175 = vadd.xlane.f32.xlu0 %v2174
      %v2176 = vpop.xlane.xlu0 %2175
      %v2177 = vsel %vm531, %v2171, 0.0
      %2178 = vadd.xlane.f32.xlu0 %v2177
      %v2179 = vpop.xlane.xlu0 %2178
      %v2180 = vsel %vm531, %v2172, 0.0
      %2181 = vadd.xlane.f32.xlu0 %v2180
      %v2182 = vpop.xlane.xlu0 %2181
      %v2183 = vsel %vm531, %v2173, 0.0
      %2184 = vadd.xlane.f32.xlu0 %v2183
      %v2185 = vpop.xlane.xlu0 %2184
      %v2186 = vmul.f32 %v2059, %v491
      %v2187 = vmul.f32 %v2061, %v492
      %v2188 = vmul.f32 %v2130, %v493
      %v2189 = vmul.f32 %v2132, %v494
      %v2190 = vsel %vm531, %v2186, 0.0
      %2191 = vadd.xlane.f32.xlu0 %v2190
      %v2192 = vpop.xlane.xlu0 %2191
      %v2193 = vsel %vm531, %v2187, 0.0
      %2194 = vadd.xlane.f32.xlu0 %v2193
      %v2195 = vpop.xlane.xlu0 %2194
      %v2196 = vsel %vm531, %v2188, 0.0
      %2197 = vadd.xlane.f32.xlu0 %v2196
      %v2198 = vpop.xlane.xlu0 %2197
      %v2199 = vsel %vm531, %v2189, 0.0
      %2200 = vadd.xlane.f32.xlu0 %v2199
      %v2201 = vpop.xlane.xlu0 %2200
      %v2202 = vrcp.pop %v2144
      %v2203 = vmul.f32 1.0, %v2202
      %v2204 = vrcp.pop %v2147
      %v2205 = vmul.f32 1.0, %v2204
      %v2206 = vrcp.pop %v2150
      %v2207 = vmul.f32 1.0, %v2206
      %v2208 = vrcp.pop %v2153
      %v2209 = vmul.f32 1.0, %v2208
      %v2210 = vmul.f32 %v2160, %v2203
      %v2211 = vmul.f32 %v2163, %v2205
      %v2212 = vmul.f32 %v2166, %v2207
      %v2213 = vmul.f32 %v2169, %v2209
      %v2218 = vrot.slane %v2059, 7
      %v2219 = vrot.slane %v2061, 7
      %v2220 = vrot.slane %v2130, 7
      %v2221 = vrot.slane %v2132, 7
      %v2226 = vsel %vm531, %v2134, %v2218
      %v2227 = vsel %vm531, %v2135, %v2219
      %v2228 = vsel %vm531, %v2136, %v2220
      %v2229 = vsel %vm531, %v2137, %v2221
      %v2230 = vmul.f32 %v2203, %v2059
      %v2231 = vmul.f32 %v2205, %v2061
      %v2232 = vmul.f32 %v2207, %v2130
      %v2233 = vmul.f32 %v2209, %v2132
      %v2234 = vmul.f32 %v2203, %v2134
      %v2235 = vmul.f32 %v2205, %v2135
      %v2236 = vmul.f32 %v2207, %v2136
      %v2237 = vmul.f32 %v2209, %v2137
      %v2238 = vmul.f32 %v2203, %v2210
      %v2239 = vmul.f32 %v2205, %v2211
      %v2240 = vmul.f32 %v2207, %v2212
      %v2241 = vmul.f32 %v2209, %v2213
      %v2242 = vmul.f32 %v2238, %v2059
      %v2243 = vmul.f32 %v2239, %v2061
      %v2244 = vmul.f32 %v2240, %v2130
      %v2245 = vmul.f32 %v2241, %v2132
      %v2246 = vsub.f32 %v2234, %v2242
      %v2247 = vsub.f32 %v2235, %v2243
      %v2248 = vsub.f32 %v2236, %v2244
      %v2249 = vsub.f32 %v2237, %v2245
      %v2254 = vrot.slane %v2246, 7
      %v2255 = vrot.slane %v2247, 7
      %v2256 = vrot.slane %v2248, 7
      %v2257 = vrot.slane %v2249, 7
      %v2262 = vsel %vm531, %v2230, %v2254
      %v2263 = vsel %vm531, %v2231, %v2255
      %v2264 = vsel %vm531, %v2232, %v2256
      %v2265 = vsel %vm531, %v2233, %v2257
      %2266 = vxpose.xlu0.b32.start [1/16] %v2226, 128
      %2267 = vxpose.xlu0.b32.cont [2/16] 0.0, 128
      %2268 = vxpose.xlu0.b32.cont [3/16] 0.0, 128
      %2269 = vxpose.xlu0.b32.cont [4/16] 0.0, 128
      %2270 = vxpose.xlu0.b32.cont [5/16] 0.0, 128
      %2271 = vxpose.xlu0.b32.cont [6/16] 0.0, 128
      %2272 = vxpose.xlu0.b32.cont [7/16] 0.0, 128
      %2273 = vxpose.xlu0.b32.cont [8/16] 0.0, 128
      %2274 = vxpose.xlu0.b32.cont [9/16] 0.0, 128
      %2275 = vxpose.xlu0.b32.cont [10/16] 0.0, 128
      %2276 = vxpose.xlu0.b32.cont [11/16] 0.0, 128
      %2277 = vxpose.xlu0.b32.cont [12/16] 0.0, 128
      %2278 = vxpose.xlu0.b32.cont [13/16] 0.0, 128
      %2279 = vxpose.xlu0.b32.cont [14/16] 0.0, 128
      %2280 = vxpose.xlu0.b32.cont [15/16] 0.0, 128
      %2281 = vxpose.xlu0.b32.end [16/16] 0.0, 128
      %v2282 = vpop.trf.xlu0
      %v2283 = vpop.trf.xlu0
      %v2284 = vpop.trf.xlu0
      %v2285 = vpop.trf.xlu0
      %v2286 = vpop.trf.xlu0
      %v2287 = vpop.trf.xlu0
      %v2288 = vpop.trf.xlu0
      %v2289 = vpop.trf.xlu0
      %v2290 = vpop.trf.xlu0
      %v2291 = vpop.trf.xlu0
      %v2292 = vpop.trf.xlu0
      %v2293 = vpop.trf.xlu0
      %v2294 = vpop.trf.xlu0
      %v2295 = vpop.trf.xlu0
      %v2296 = vpop.trf.xlu0
      %v2297 = vpop.trf.xlu0
      %vm2298 = vcmask 15360
      %v2300 = vsel %vm2298, %v2282, 0
      %v2303 = vsel %vm2298, %v2283, 0
      %v2306 = vsel %vm2298, %v2284, 0
      %v2309 = vsel %vm2298, %v2285, 0
      %v2312 = vsel %vm2298, %v2286, 0
      %v2315 = vsel %vm2298, %v2287, 0
      %v2318 = vsel %vm2298, %v2288, 0
      %v2321 = vsel %vm2298, %v2289, 0
      %v2324 = vsel %vm2298, %v2290, 0
      %v2327 = vsel %vm2298, %v2291, 0
      %v2330 = vsel %vm2298, %v2292, 0
      %v2333 = vsel %vm2298, %v2293, 0
      %v2336 = vsel %vm2298, %v2294, 0
      %v2339 = vsel %vm2298, %v2295, 0
      %v2342 = vsel %vm2298, %v2296, 0
      %v2345 = vsel %vm2298, %v2297, 0
      %v2348 = vsel %vm912, %v2262, 0
      %2350 = vmatprep.subr.mxu0 0.0
      %2351 = vmatpush1.msra.mxu0 0.0
      %2352 = vmatprep.subr.mxu0 0.0
      %2353 = vmatpush1.msra.mxu0 0.0
      %2354 = vmatprep.subr.mxu0 0.0
      %2355 = vmatpush1.msra.mxu0 0.0
      %2356 = vmatprep.subr.mxu0 0.0
      %2357 = vmatpush1.msra.mxu0 0.0
      %2358 = vmatprep.subr.mxu0 0.0
      %2359 = vmatpush1.msra.mxu0 0.0
      %2360 = vmatprep.subr.mxu0 0.0
      %2361 = vmatpush1.msra.mxu0 0.0
      %2362 = vmatprep.subr.mxu0 0.0
      %2363 = vmatpush1.msra.mxu0 0.0
      %2364 = vmatprep.subr.mxu0 0.0
      %2365 = vmatpush1.msra.mxu0 0.0
      %2366 = vmatprep.subr.mxu0 0.0
      %2367 = vmatpush1.msra.mxu0 0.0
      %2368 = vmatprep.subr.mxu0 0.0
      %2369 = vmatpush1.msra.mxu0 0.0
      %2370 = vmatprep.subr.mxu0 0.0
      %2371 = vmatpush1.msra.mxu0 0.0
      %2372 = vmatprep.subr.mxu0 0.0
      %2373 = vmatpush1.msra.mxu0 0.0
      %2374 = vmatprep.subr.mxu0 0.0
      %2375 = vmatpush1.msra.mxu0 0.0
      %2376 = vmatprep.subr.mxu0 0.0
      %2377 = vmatpush1.msra.mxu0 0.0
      %2378 = vmatprep.subr.mxu0 0.0
      %2379 = vmatpush1.msra.mxu0 0.0
      %2380 = vmatprep.subr.mxu0 0.0
      %2381 = vmatpush1.msra.mxu0 %v2348
      %2382 = vmatprep.subr.mxu0 0.0
      %2383 = vmatpush2.msra.mxu0 0.0
      %2384 = vmatprep.subr.mxu0 0.0
      %2385 = vmatpush2.msra.mxu0 0.0
      %2386 = vmatprep.subr.mxu0 0.0
      %2387 = vmatpush2.msra.mxu0 0.0
      %2388 = vmatprep.subr.mxu0 0.0
      %2389 = vmatpush2.msra.mxu0 0.0
      %2390 = vmatprep.subr.mxu0 0.0
      %2391 = vmatpush2.msra.mxu0 0.0
      %2392 = vmatprep.subr.mxu0 0.0
      %2393 = vmatpush2.msra.mxu0 0.0
      %2394 = vmatprep.subr.mxu0 0.0
      %2395 = vmatpush2.msra.mxu0 0.0
      %2396 = vmatprep.subr.mxu0 0.0
      %2397 = vmatpush2.msra.mxu0 0.0
      %2398 = vmatprep.subr.mxu0 0.0
      %2399 = vmatpush2.msra.mxu0 0.0
      %2400 = vmatprep.subr.mxu0 0.0
      %2401 = vmatpush2.msra.mxu0 0.0
      %2402 = vmatprep.subr.mxu0 0.0
      %2403 = vmatpush2.msra.mxu0 0.0
      %2404 = vmatprep.subr.mxu0 0.0
      %2405 = vmatpush2.msra.mxu0 0.0
      %2406 = vmatprep.subr.mxu0 0.0
      %2407 = vmatpush2.msra.mxu0 0.0
      %2408 = vmatprep.subr.mxu0 0.0
      %2409 = vmatpush2.msra.mxu0 0.0
      %2410 = vmatprep.subr.mxu0 0.0
      %2411 = vmatpush2.msra.mxu0 0.0
      %2412 = vmatprep.subr.mxu0 0.0
      %2413 = vmatpush2.msra.mxu0 0.0
      %2414 = vmatprep.mubr.f32.mxu0 0.0
      %2415 = vmatmul.mubr.f32.gmra.mxu0 %v2300
      %v2416 = vpop.f32.mrf.mxu0
      %v2417 = vadd.f32 0.0, %v2416
      %v2418 = vpop.f32.mrf.mxu0
      %2419 = vmatprep.mubr.f32.mxu0 0.0
      %2420 = vmatmul.mubr.f32.gmra.mxu0 %v2303
      %v2421 = vpop.f32.mrf.mxu0
      %v2422 = vadd.f32 0.0, %v2421
      %v2423 = vpop.f32.mrf.mxu0
      %2424 = vmatprep.mubr.f32.mxu0 0.0
      %2425 = vmatmul.mubr.f32.gmra.mxu0 %v2306
      %v2426 = vpop.f32.mrf.mxu0
      %v2427 = vadd.f32 0.0, %v2426
      %v2428 = vpop.f32.mrf.mxu0
      %2429 = vmatprep.mubr.f32.mxu0 0.0
      %2430 = vmatmul.mubr.f32.gmra.mxu0 %v2309
      %v2431 = vpop.f32.mrf.mxu0
      %v2432 = vadd.f32 0.0, %v2431
      %v2433 = vpop.f32.mrf.mxu0
      %2434 = vmatprep.mubr.f32.mxu0 0.0
      %2435 = vmatmul.mubr.f32.gmra.mxu0 %v2312
      %v2436 = vpop.f32.mrf.mxu0
      %v2437 = vadd.f32 0.0, %v2436
      %v2438 = vpop.f32.mrf.mxu0
      %2439 = vmatprep.mubr.f32.mxu0 0.0
      %2440 = vmatmul.mubr.f32.gmra.mxu0 %v2315
      %v2441 = vpop.f32.mrf.mxu0
      %v2442 = vadd.f32 0.0, %v2441
      %v2443 = vpop.f32.mrf.mxu0
      %2444 = vmatprep.mubr.f32.mxu0 0.0
      %2445 = vmatmul.mubr.f32.gmra.mxu0 %v2318
      %v2446 = vpop.f32.mrf.mxu0
      %v2447 = vadd.f32 0.0, %v2446
      %v2448 = vpop.f32.mrf.mxu0
      %2449 = vmatprep.mubr.f32.mxu0 0.0
      %2450 = vmatmul.mubr.f32.gmra.mxu0 %v2321
      %v2451 = vpop.f32.mrf.mxu0
      %v2452 = vadd.f32 0.0, %v2451
      %v2453 = vpop.f32.mrf.mxu0
      %2454 = vmatprep.mubr.f32.mxu0 0.0
      %2455 = vmatmul.mubr.f32.gmra.mxu0 %v2324
      %v2456 = vpop.f32.mrf.mxu0
      %v2457 = vadd.f32 0.0, %v2456
      %v2458 = vpop.f32.mrf.mxu0
      %2459 = vmatprep.mubr.f32.mxu0 0.0
      %2460 = vmatmul.mubr.f32.gmra.mxu0 %v2327
      %v2461 = vpop.f32.mrf.mxu0
      %v2462 = vadd.f32 0.0, %v2461
      %v2463 = vpop.f32.mrf.mxu0
      %2464 = vmatprep.mubr.f32.mxu0 0.0
      %2465 = vmatmul.mubr.f32.gmra.mxu0 %v2330
      %v2466 = vpop.f32.mrf.mxu0
      %v2467 = vadd.f32 0.0, %v2466
      %v2468 = vpop.f32.mrf.mxu0
      %2469 = vmatprep.mubr.f32.mxu0 0.0
      %2470 = vmatmul.mubr.f32.gmra.mxu0 %v2333
      %v2471 = vpop.f32.mrf.mxu0
      %v2472 = vadd.f32 0.0, %v2471
      %v2473 = vpop.f32.mrf.mxu0
      %2474 = vmatprep.mubr.f32.mxu0 0.0
      %2475 = vmatmul.mubr.f32.gmra.mxu0 %v2336
      %v2476 = vpop.f32.mrf.mxu0
      %v2477 = vadd.f32 0.0, %v2476
      %v2478 = vpop.f32.mrf.mxu0
      %2479 = vmatprep.mubr.f32.mxu0 0.0
      %2480 = vmatmul.mubr.f32.gmra.mxu0 %v2339
      %v2481 = vpop.f32.mrf.mxu0
      %v2482 = vadd.f32 0.0, %v2481
      %v2483 = vpop.f32.mrf.mxu0
      %2484 = vmatprep.mubr.f32.mxu0 0.0
      %2485 = vmatmul.mubr.f32.gmra.mxu0 %v2342
      %v2486 = vpop.f32.mrf.mxu0
      %v2487 = vadd.f32 0.0, %v2486
      %v2488 = vpop.f32.mrf.mxu0
      %2489 = vmatprep.mubr.f32.mxu0 0.0
      %2490 = vmatmul.mubr.f32.gmra.mxu0 %v2345
      %v2491 = vpop.f32.mrf.mxu0
      %v2492 = vadd.f32 0.0, %v2491
      %v2493 = vpop.f32.mrf.mxu0
      %2494 = vdwg.mxu0
      %2495 = vxpose.xlu0.b32.start [1/16] %v2227, 128
      %2496 = vxpose.xlu0.b32.cont [2/16] 0.0, 128
      %2497 = vxpose.xlu0.b32.cont [3/16] 0.0, 128
      %2498 = vxpose.xlu0.b32.cont [4/16] 0.0, 128
      %2499 = vxpose.xlu0.b32.cont [5/16] 0.0, 128
      %2500 = vxpose.xlu0.b32.cont [6/16] 0.0, 128
      %2501 = vxpose.xlu0.b32.cont [7/16] 0.0, 128
      %2502 = vxpose.xlu0.b32.cont [8/16] 0.0, 128
      %2503 = vxpose.xlu0.b32.cont [9/16] 0.0, 128
      %2504 = vxpose.xlu0.b32.cont [10/16] 0.0, 128
      %2505 = vxpose.xlu0.b32.cont [11/16] 0.0, 128
      %2506 = vxpose.xlu0.b32.cont [12/16] 0.0, 128
      %2507 = vxpose.xlu0.b32.cont [13/16] 0.0, 128
      %2508 = vxpose.xlu0.b32.cont [14/16] 0.0, 128
      %2509 = vxpose.xlu0.b32.cont [15/16] 0.0, 128
      %2510 = vxpose.xlu0.b32.end [16/16] 0.0, 128
      %v2511 = vpop.trf.xlu0
      %v2512 = vpop.trf.xlu0
      %v2513 = vpop.trf.xlu0
      %v2514 = vpop.trf.xlu0
      %v2515 = vpop.trf.xlu0
      %v2516 = vpop.trf.xlu0
      %v2517 = vpop.trf.xlu0
      %v2518 = vpop.trf.xlu0
      %v2519 = vpop.trf.xlu0
      %v2520 = vpop.trf.xlu0
      %v2521 = vpop.trf.xlu0
      %v2522 = vpop.trf.xlu0
      %v2523 = vpop.trf.xlu0
      %v2524 = vpop.trf.xlu0
      %v2525 = vpop.trf.xlu0
      %v2526 = vpop.trf.xlu0
      %v2528 = vsel %vm2298, %v2511, 0
      %v2531 = vsel %vm2298, %v2512, 0
      %v2534 = vsel %vm2298, %v2513, 0
      %v2537 = vsel %vm2298, %v2514, 0
      %v2540 = vsel %vm2298, %v2515, 0
      %v2543 = vsel %vm2298, %v2516, 0
      %v2546 = vsel %vm2298, %v2517, 0
      %v2549 = vsel %vm2298, %v2518, 0
      %v2552 = vsel %vm2298, %v2519, 0
      %v2555 = vsel %vm2298, %v2520, 0
      %v2558 = vsel %vm2298, %v2521, 0
      %v2561 = vsel %vm2298, %v2522, 0
      %v2564 = vsel %vm2298, %v2523, 0
      %v2567 = vsel %vm2298, %v2524, 0
      %v2570 = vsel %vm2298, %v2525, 0
      %v2573 = vsel %vm2298, %v2526, 0
      %v2576 = vsel %vm912, %v2263, 0
      %2578 = vmatprep.subr.mxu0 0.0
      %2579 = vmatpush1.msra.mxu0 0.0
      %2580 = vmatprep.subr.mxu0 0.0
      %2581 = vmatpush1.msra.mxu0 0.0
      %2582 = vmatprep.subr.mxu0 0.0
      %2583 = vmatpush1.msra.mxu0 0.0
      %2584 = vmatprep.subr.mxu0 0.0
      %2585 = vmatpush1.msra.mxu0 0.0
      %2586 = vmatprep.subr.mxu0 0.0
      %2587 = vmatpush1.msra.mxu0 0.0
      %2588 = vmatprep.subr.mxu0 0.0
      %2589 = vmatpush1.msra.mxu0 0.0
      %2590 = vmatprep.subr.mxu0 0.0
      %2591 = vmatpush1.msra.mxu0 0.0
      %2592 = vmatprep.subr.mxu0 0.0
      %2593 = vmatpush1.msra.mxu0 0.0
      %2594 = vmatprep.subr.mxu0 0.0
      %2595 = vmatpush1.msra.mxu0 0.0
      %2596 = vmatprep.subr.mxu0 0.0
      %2597 = vmatpush1.msra.mxu0 0.0
      %2598 = vmatprep.subr.mxu0 0.0
      %2599 = vmatpush1.msra.mxu0 0.0
      %2600 = vmatprep.subr.mxu0 0.0
      %2601 = vmatpush1.msra.mxu0 0.0
      %2602 = vmatprep.subr.mxu0 0.0
      %2603 = vmatpush1.msra.mxu0 0.0
      %2604 = vmatprep.subr.mxu0 0.0
      %2605 = vmatpush1.msra.mxu0 0.0
      %2606 = vmatprep.subr.mxu0 0.0
      %2607 = vmatpush1.msra.mxu0 0.0
      %2608 = vmatprep.subr.mxu0 0.0
      %2609 = vmatpush1.msra.mxu0 %v2576
      %2610 = vmatprep.subr.mxu0 0.0
      %2611 = vmatpush2.msra.mxu0 0.0
      %2612 = vmatprep.subr.mxu0 0.0
      %2613 = vmatpush2.msra.mxu0 0.0
      %2614 = vmatprep.subr.mxu0 0.0
      %2615 = vmatpush2.msra.mxu0 0.0
      %2616 = vmatprep.subr.mxu0 0.0
      %2617 = vmatpush2.msra.mxu0 0.0
      %2618 = vmatprep.subr.mxu0 0.0
      %2619 = vmatpush2.msra.mxu0 0.0
      %2620 = vmatprep.subr.mxu0 0.0
      %2621 = vmatpush2.msra.mxu0 0.0
      %2622 = vmatprep.subr.mxu0 0.0
      %2623 = vmatpush2.msra.mxu0 0.0
      %2624 = vmatprep.subr.mxu0 0.0
      %2625 = vmatpush2.msra.mxu0 0.0
      %2626 = vmatprep.subr.mxu0 0.0
      %2627 = vmatpush2.msra.mxu0 0.0
      %2628 = vmatprep.subr.mxu0 0.0
      %2629 = vmatpush2.msra.mxu0 0.0
      %2630 = vmatprep.subr.mxu0 0.0
      %2631 = vmatpush2.msra.mxu0 0.0
      %2632 = vmatprep.subr.mxu0 0.0
      %2633 = vmatpush2.msra.mxu0 0.0
      %2634 = vmatprep.subr.mxu0 0.0
      %2635 = vmatpush2.msra.mxu0 0.0
      %2636 = vmatprep.subr.mxu0 0.0
      %2637 = vmatpush2.msra.mxu0 0.0
      %2638 = vmatprep.subr.mxu0 0.0
      %2639 = vmatpush2.msra.mxu0 0.0
      %2640 = vmatprep.subr.mxu0 0.0
      %2641 = vmatpush2.msra.mxu0 0.0
      %2642 = vmatprep.mubr.f32.mxu0 0.0
      %2643 = vmatmul.mubr.f32.gmra.mxu0 %v2528
      %v2644 = vpop.f32.mrf.mxu0
      %v2645 = vadd.f32 0.0, %v2644
      %v2646 = vpop.f32.mrf.mxu0
      %2647 = vmatprep.mubr.f32.mxu0 0.0
      %2648 = vmatmul.mubr.f32.gmra.mxu0 %v2531
      %v2649 = vpop.f32.mrf.mxu0
      %v2650 = vadd.f32 0.0, %v2649
      %v2651 = vpop.f32.mrf.mxu0
      %2652 = vmatprep.mubr.f32.mxu0 0.0
      %2653 = vmatmul.mubr.f32.gmra.mxu0 %v2534
      %v2654 = vpop.f32.mrf.mxu0
      %v2655 = vadd.f32 0.0, %v2654
      %v2656 = vpop.f32.mrf.mxu0
      %2657 = vmatprep.mubr.f32.mxu0 0.0
      %2658 = vmatmul.mubr.f32.gmra.mxu0 %v2537
      %v2659 = vpop.f32.mrf.mxu0
      %v2660 = vadd.f32 0.0, %v2659
      %v2661 = vpop.f32.mrf.mxu0
      %2662 = vmatprep.mubr.f32.mxu0 0.0
      %2663 = vmatmul.mubr.f32.gmra.mxu0 %v2540
      %v2664 = vpop.f32.mrf.mxu0
      %v2665 = vadd.f32 0.0, %v2664
      %v2666 = vpop.f32.mrf.mxu0
      %2667 = vmatprep.mubr.f32.mxu0 0.0
      %2668 = vmatmul.mubr.f32.gmra.mxu0 %v2543
      %v2669 = vpop.f32.mrf.mxu0
      %v2670 = vadd.f32 0.0, %v2669
      %v2671 = vpop.f32.mrf.mxu0
      %2672 = vmatprep.mubr.f32.mxu0 0.0
      %2673 = vmatmul.mubr.f32.gmra.mxu0 %v2546
      %v2674 = vpop.f32.mrf.mxu0
      %v2675 = vadd.f32 0.0, %v2674
      %v2676 = vpop.f32.mrf.mxu0
      %2677 = vmatprep.mubr.f32.mxu0 0.0
      %2678 = vmatmul.mubr.f32.gmra.mxu0 %v2549
      %v2679 = vpop.f32.mrf.mxu0
      %v2680 = vadd.f32 0.0, %v2679
      %v2681 = vpop.f32.mrf.mxu0
      %2682 = vmatprep.mubr.f32.mxu0 0.0
      %2683 = vmatmul.mubr.f32.gmra.mxu0 %v2552
      %v2684 = vpop.f32.mrf.mxu0
      %v2685 = vadd.f32 0.0, %v2684
      %v2686 = vpop.f32.mrf.mxu0
      %2687 = vmatprep.mubr.f32.mxu0 0.0
      %2688 = vmatmul.mubr.f32.gmra.mxu0 %v2555
      %v2689 = vpop.f32.mrf.mxu0
      %v2690 = vadd.f32 0.0, %v2689
      %v2691 = vpop.f32.mrf.mxu0
      %2692 = vmatprep.mubr.f32.mxu0 0.0
      %2693 = vmatmul.mubr.f32.gmra.mxu0 %v2558
      %v2694 = vpop.f32.mrf.mxu0
      %v2695 = vadd.f32 0.0, %v2694
      %v2696 = vpop.f32.mrf.mxu0
      %2697 = vmatprep.mubr.f32.mxu0 0.0
      %2698 = vmatmul.mubr.f32.gmra.mxu0 %v2561
      %v2699 = vpop.f32.mrf.mxu0
      %v2700 = vadd.f32 0.0, %v2699
      %v2701 = vpop.f32.mrf.mxu0
      %2702 = vmatprep.mubr.f32.mxu0 0.0
      %2703 = vmatmul.mubr.f32.gmra.mxu0 %v2564
      %v2704 = vpop.f32.mrf.mxu0
      %v2705 = vadd.f32 0.0, %v2704
      %v2706 = vpop.f32.mrf.mxu0
      %2707 = vmatprep.mubr.f32.mxu0 0.0
      %2708 = vmatmul.mubr.f32.gmra.mxu0 %v2567
      %v2709 = vpop.f32.mrf.mxu0
      %v2710 = vadd.f32 0.0, %v2709
      %v2711 = vpop.f32.mrf.mxu0
      %2712 = vmatprep.mubr.f32.mxu0 0.0
      %2713 = vmatmul.mubr.f32.gmra.mxu0 %v2570
      %v2714 = vpop.f32.mrf.mxu0
      %v2715 = vadd.f32 0.0, %v2714
      %v2716 = vpop.f32.mrf.mxu0
      %2717 = vmatprep.mubr.f32.mxu0 0.0
      %2718 = vmatmul.mubr.f32.gmra.mxu0 %v2573
      %v2719 = vpop.f32.mrf.mxu0
      %v2720 = vadd.f32 0.0, %v2719
      %v2721 = vpop.f32.mrf.mxu0
      %2722 = vdwg.mxu0
      %2723 = vxpose.xlu0.b32.start [1/16] %v2228, 128
      %2724 = vxpose.xlu0.b32.cont [2/16] 0.0, 128
      %2725 = vxpose.xlu0.b32.cont [3/16] 0.0, 128
      %2726 = vxpose.xlu0.b32.cont [4/16] 0.0, 128
      %2727 = vxpose.xlu0.b32.cont [5/16] 0.0, 128
      %2728 = vxpose.xlu0.b32.cont [6/16] 0.0, 128
      %2729 = vxpose.xlu0.b32.cont [7/16] 0.0, 128
      %2730 = vxpose.xlu0.b32.cont [8/16] 0.0, 128
      %2731 = vxpose.xlu0.b32.cont [9/16] 0.0, 128
      %2732 = vxpose.xlu0.b32.cont [10/16] 0.0, 128
      %2733 = vxpose.xlu0.b32.cont [11/16] 0.0, 128
      %2734 = vxpose.xlu0.b32.cont [12/16] 0.0, 128
      %2735 = vxpose.xlu0.b32.cont [13/16] 0.0, 128
      %2736 = vxpose.xlu0.b32.cont [14/16] 0.0, 128
      %2737 = vxpose.xlu0.b32.cont [15/16] 0.0, 128
      %2738 = vxpose.xlu0.b32.end [16/16] 0.0, 128
      %v2739 = vpop.trf.xlu0
      %v2740 = vpop.trf.xlu0
      %v2741 = vpop.trf.xlu0
      %v2742 = vpop.trf.xlu0
      %v2743 = vpop.trf.xlu0
      %v2744 = vpop.trf.xlu0
      %v2745 = vpop.trf.xlu0
      %v2746 = vpop.trf.xlu0
      %v2747 = vpop.trf.xlu0
      %v2748 = vpop.trf.xlu0
      %v2749 = vpop.trf.xlu0
      %v2750 = vpop.trf.xlu0
      %v2751 = vpop.trf.xlu0
      %v2752 = vpop.trf.xlu0
      %v2753 = vpop.trf.xlu0
      %v2754 = vpop.trf.xlu0
      %v2756 = vsel %vm2298, %v2739, 0
      %v2759 = vsel %vm2298, %v2740, 0
      %v2762 = vsel %vm2298, %v2741, 0
      %v2765 = vsel %vm2298, %v2742, 0
      %v2768 = vsel %vm2298, %v2743, 0
      %v2771 = vsel %vm2298, %v2744, 0
      %v2774 = vsel %vm2298, %v2745, 0
      %v2777 = vsel %vm2298, %v2746, 0
      %v2780 = vsel %vm2298, %v2747, 0
      %v2783 = vsel %vm2298, %v2748, 0
      %v2786 = vsel %vm2298, %v2749, 0
      %v2789 = vsel %vm2298, %v2750, 0
      %v2792 = vsel %vm2298, %v2751, 0
      %v2795 = vsel %vm2298, %v2752, 0
      %v2798 = vsel %vm2298, %v2753, 0
      %v2801 = vsel %vm2298, %v2754, 0
      %v2804 = vsel %vm912, %v2264, 0
      %2806 = vmatprep.subr.mxu0 0.0
      %2807 = vmatpush1.msra.mxu0 0.0
      %2808 = vmatprep.subr.mxu0 0.0
      %2809 = vmatpush1.msra.mxu0 0.0
      %2810 = vmatprep.subr.mxu0 0.0
      %2811 = vmatpush1.msra.mxu0 0.0
      %2812 = vmatprep.subr.mxu0 0.0
      %2813 = vmatpush1.msra.mxu0 0.0
      %2814 = vmatprep.subr.mxu0 0.0
      %2815 = vmatpush1.msra.mxu0 0.0
      %2816 = vmatprep.subr.mxu0 0.0
      %2817 = vmatpush1.msra.mxu0 0.0
      %2818 = vmatprep.subr.mxu0 0.0
      %2819 = vmatpush1.msra.mxu0 0.0
      %2820 = vmatprep.subr.mxu0 0.0
      %2821 = vmatpush1.msra.mxu0 0.0
      %2822 = vmatprep.subr.mxu0 0.0
      %2823 = vmatpush1.msra.mxu0 0.0
      %2824 = vmatprep.subr.mxu0 0.0
      %2825 = vmatpush1.msra.mxu0 0.0
      %2826 = vmatprep.subr.mxu0 0.0
      %2827 = vmatpush1.msra.mxu0 0.0
      %2828 = vmatprep.subr.mxu0 0.0
      %2829 = vmatpush1.msra.mxu0 0.0
      %2830 = vmatprep.subr.mxu0 0.0
      %2831 = vmatpush1.msra.mxu0 0.0
      %2832 = vmatprep.subr.mxu0 0.0
      %2833 = vmatpush1.msra.mxu0 0.0
      %2834 = vmatprep.subr.mxu0 0.0
      %2835 = vmatpush1.msra.mxu0 0.0
      %2836 = vmatprep.subr.mxu0 0.0
      %2837 = vmatpush1.msra.mxu0 %v2804
      %2838 = vmatprep.subr.mxu0 0.0
      %2839 = vmatpush2.msra.mxu0 0.0
      %2840 = vmatprep.subr.mxu0 0.0
      %2841 = vmatpush2.msra.mxu0 0.0
      %2842 = vmatprep.subr.mxu0 0.0
      %2843 = vmatpush2.msra.mxu0 0.0
      %2844 = vmatprep.subr.mxu0 0.0
      %2845 = vmatpush2.msra.mxu0 0.0
      %2846 = vmatprep.subr.mxu0 0.0
      %2847 = vmatpush2.msra.mxu0 0.0
      %2848 = vmatprep.subr.mxu0 0.0
      %2849 = vmatpush2.msra.mxu0 0.0
      %2850 = vmatprep.subr.mxu0 0.0
      %2851 = vmatpush2.msra.mxu0 0.0
      %2852 = vmatprep.subr.mxu0 0.0
      %2853 = vmatpush2.msra.mxu0 0.0
      %2854 = vmatprep.subr.mxu0 0.0
      %2855 = vmatpush2.msra.mxu0 0.0
      %2856 = vmatprep.subr.mxu0 0.0
      %2857 = vmatpush2.msra.mxu0 0.0
      %2858 = vmatprep.subr.mxu0 0.0
      %2859 = vmatpush2.msra.mxu0 0.0
      %2860 = vmatprep.subr.mxu0 0.0
      %2861 = vmatpush2.msra.mxu0 0.0
      %2862 = vmatprep.subr.mxu0 0.0
      %2863 = vmatpush2.msra.mxu0 0.0
      %2864 = vmatprep.subr.mxu0 0.0
      %2865 = vmatpush2.msra.mxu0 0.0
      %2866 = vmatprep.subr.mxu0 0.0
      %2867 = vmatpush2.msra.mxu0 0.0
      %2868 = vmatprep.subr.mxu0 0.0
      %2869 = vmatpush2.msra.mxu0 0.0
      %2870 = vmatprep.mubr.f32.mxu0 0.0
      %2871 = vmatmul.mubr.f32.gmra.mxu0 %v2756
      %v2872 = vpop.f32.mrf.mxu0
      %v2873 = vadd.f32 0.0, %v2872
      %v2874 = vpop.f32.mrf.mxu0
      %2875 = vmatprep.mubr.f32.mxu0 0.0
      %2876 = vmatmul.mubr.f32.gmra.mxu0 %v2759
      %v2877 = vpop.f32.mrf.mxu0
      %v2878 = vadd.f32 0.0, %v2877
      %v2879 = vpop.f32.mrf.mxu0
      %2880 = vmatprep.mubr.f32.mxu0 0.0
      %2881 = vmatmul.mubr.f32.gmra.mxu0 %v2762
      %v2882 = vpop.f32.mrf.mxu0
      %v2883 = vadd.f32 0.0, %v2882
      %v2884 = vpop.f32.mrf.mxu0
      %2885 = vmatprep.mubr.f32.mxu0 0.0
      %2886 = vmatmul.mubr.f32.gmra.mxu0 %v2765
      %v2887 = vpop.f32.mrf.mxu0
      %v2888 = vadd.f32 0.0, %v2887
      %v2889 = vpop.f32.mrf.mxu0
      %2890 = vmatprep.mubr.f32.mxu0 0.0
      %2891 = vmatmul.mubr.f32.gmra.mxu0 %v2768
      %v2892 = vpop.f32.mrf.mxu0
      %v2893 = vadd.f32 0.0, %v2892
      %v2894 = vpop.f32.mrf.mxu0
      %2895 = vmatprep.mubr.f32.mxu0 0.0
      %2896 = vmatmul.mubr.f32.gmra.mxu0 %v2771
      %v2897 = vpop.f32.mrf.mxu0
      %v2898 = vadd.f32 0.0, %v2897
      %v2899 = vpop.f32.mrf.mxu0
      %2900 = vmatprep.mubr.f32.mxu0 0.0
      %2901 = vmatmul.mubr.f32.gmra.mxu0 %v2774
      %v2902 = vpop.f32.mrf.mxu0
      %v2903 = vadd.f32 0.0, %v2902
      %v2904 = vpop.f32.mrf.mxu0
      %2905 = vmatprep.mubr.f32.mxu0 0.0
      %2906 = vmatmul.mubr.f32.gmra.mxu0 %v2777
      %v2907 = vpop.f32.mrf.mxu0
      %v2908 = vadd.f32 0.0, %v2907
      %v2909 = vpop.f32.mrf.mxu0
      %2910 = vmatprep.mubr.f32.mxu0 0.0
      %2911 = vmatmul.mubr.f32.gmra.mxu0 %v2780
      %v2912 = vpop.f32.mrf.mxu0
      %v2913 = vadd.f32 0.0, %v2912
      %v2914 = vpop.f32.mrf.mxu0
      %2915 = vmatprep.mubr.f32.mxu0 0.0
      %2916 = vmatmul.mubr.f32.gmra.mxu0 %v2783
      %v2917 = vpop.f32.mrf.mxu0
      %v2918 = vadd.f32 0.0, %v2917
      %v2919 = vpop.f32.mrf.mxu0
      %2920 = vmatprep.mubr.f32.mxu0 0.0
      %2921 = vmatmul.mubr.f32.gmra.mxu0 %v2786
      %v2922 = vpop.f32.mrf.mxu0
      %v2923 = vadd.f32 0.0, %v2922
      %v2924 = vpop.f32.mrf.mxu0
      %2925 = vmatprep.mubr.f32.mxu0 0.0
      %2926 = vmatmul.mubr.f32.gmra.mxu0 %v2789
      %v2927 = vpop.f32.mrf.mxu0
      %v2928 = vadd.f32 0.0, %v2927
      %v2929 = vpop.f32.mrf.mxu0
      %2930 = vmatprep.mubr.f32.mxu0 0.0
      %2931 = vmatmul.mubr.f32.gmra.mxu0 %v2792
      %v2932 = vpop.f32.mrf.mxu0
      %v2933 = vadd.f32 0.0, %v2932
      %v2934 = vpop.f32.mrf.mxu0
      %2935 = vmatprep.mubr.f32.mxu0 0.0
      %2936 = vmatmul.mubr.f32.gmra.mxu0 %v2795
      %v2937 = vpop.f32.mrf.mxu0
      %v2938 = vadd.f32 0.0, %v2937
      %v2939 = vpop.f32.mrf.mxu0
      %2940 = vmatprep.mubr.f32.mxu0 0.0
      %2941 = vmatmul.mubr.f32.gmra.mxu0 %v2798
      %v2942 = vpop.f32.mrf.mxu0
      %v2943 = vadd.f32 0.0, %v2942
      %v2944 = vpop.f32.mrf.mxu0
      %2945 = vmatprep.mubr.f32.mxu0 0.0
      %2946 = vmatmul.mubr.f32.gmra.mxu0 %v2801
      %v2947 = vpop.f32.mrf.mxu0
      %v2948 = vadd.f32 0.0, %v2947
      %v2949 = vpop.f32.mrf.mxu0
      %2950 = vdwg.mxu0
      %2951 = vxpose.xlu0.b32.start [1/16] %v2229, 128
      %2952 = vxpose.xlu0.b32.cont [2/16] 0.0, 128
      %2953 = vxpose.xlu0.b32.cont [3/16] 0.0, 128
      %2954 = vxpose.xlu0.b32.cont [4/16] 0.0, 128
      %2955 = vxpose.xlu0.b32.cont [5/16] 0.0, 128
      %2956 = vxpose.xlu0.b32.cont [6/16] 0.0, 128
      %2957 = vxpose.xlu0.b32.cont [7/16] 0.0, 128
      %2958 = vxpose.xlu0.b32.cont [8/16] 0.0, 128
      %2959 = vxpose.xlu0.b32.cont [9/16] 0.0, 128
      %2960 = vxpose.xlu0.b32.cont [10/16] 0.0, 128
      %2961 = vxpose.xlu0.b32.cont [11/16] 0.0, 128
      %2962 = vxpose.xlu0.b32.cont [12/16] 0.0, 128
      %2963 = vxpose.xlu0.b32.cont [13/16] 0.0, 128
      %2964 = vxpose.xlu0.b32.cont [14/16] 0.0, 128
      %2965 = vxpose.xlu0.b32.cont [15/16] 0.0, 128
      %2966 = vxpose.xlu0.b32.end [16/16] 0.0, 128
      %v2967 = vpop.trf.xlu0
      %v2968 = vpop.trf.xlu0
      %v2969 = vpop.trf.xlu0
      %v2970 = vpop.trf.xlu0
      %v2971 = vpop.trf.xlu0
      %v2972 = vpop.trf.xlu0
      %v2973 = vpop.trf.xlu0
      %v2974 = vpop.trf.xlu0
      %v2975 = vpop.trf.xlu0
      %v2976 = vpop.trf.xlu0
      %v2977 = vpop.trf.xlu0
      %v2978 = vpop.trf.xlu0
      %v2979 = vpop.trf.xlu0
      %v2980 = vpop.trf.xlu0
      %v2981 = vpop.trf.xlu0
      %v2982 = vpop.trf.xlu0
      %v2984 = vsel %vm2298, %v2967, 0
      %v2987 = vsel %vm2298, %v2968, 0
      %v2990 = vsel %vm2298, %v2969, 0
      %v2993 = vsel %vm2298, %v2970, 0
      %v2996 = vsel %vm2298, %v2971, 0
      %v2999 = vsel %vm2298, %v2972, 0
      %v3002 = vsel %vm2298, %v2973, 0
      %v3005 = vsel %vm2298, %v2974, 0
      %v3008 = vsel %vm2298, %v2975, 0
      %v3011 = vsel %vm2298, %v2976, 0
      %v3014 = vsel %vm2298, %v2977, 0
      %v3017 = vsel %vm2298, %v2978, 0
      %v3020 = vsel %vm2298, %v2979, 0
      %v3023 = vsel %vm2298, %v2980, 0
      %v3026 = vsel %vm2298, %v2981, 0
      %v3029 = vsel %vm2298, %v2982, 0
      %v3032 = vsel %vm912, %v2265, 0
      %3034 = vmatprep.subr.mxu0 0.0
      %3035 = vmatpush1.msra.mxu0 0.0
      %3036 = vmatprep.subr.mxu0 0.0
      %3037 = vmatpush1.msra.mxu0 0.0
      %3038 = vmatprep.subr.mxu0 0.0
      %3039 = vmatpush1.msra.mxu0 0.0
      %3040 = vmatprep.subr.mxu0 0.0
      %3041 = vmatpush1.msra.mxu0 0.0
      %3042 = vmatprep.subr.mxu0 0.0
      %3043 = vmatpush1.msra.mxu0 0.0
      %3044 = vmatprep.subr.mxu0 0.0
      %3045 = vmatpush1.msra.mxu0 0.0
      %3046 = vmatprep.subr.mxu0 0.0
      %3047 = vmatpush1.msra.mxu0 0.0
      %3048 = vmatprep.subr.mxu0 0.0
      %3049 = vmatpush1.msra.mxu0 0.0
      %3050 = vmatprep.subr.mxu0 0.0
      %3051 = vmatpush1.msra.mxu0 0.0
      %3052 = vmatprep.subr.mxu0 0.0
      %3053 = vmatpush1.msra.mxu0 0.0
      %3054 = vmatprep.subr.mxu0 0.0
      %3055 = vmatpush1.msra.mxu0 0.0
      %3056 = vmatprep.subr.mxu0 0.0
      %3057 = vmatpush1.msra.mxu0 0.0
      %3058 = vmatprep.subr.mxu0 0.0
      %3059 = vmatpush1.msra.mxu0 0.0
      %3060 = vmatprep.subr.mxu0 0.0
      %3061 = vmatpush1.msra.mxu0 0.0
      %3062 = vmatprep.subr.mxu0 0.0
      %3063 = vmatpush1.msra.mxu0 0.0
      %3064 = vmatprep.subr.mxu0 0.0
      %3065 = vmatpush1.msra.mxu0 %v3032
      %3066 = vmatprep.subr.mxu0 0.0
      %3067 = vmatpush2.msra.mxu0 0.0
      %3068 = vmatprep.subr.mxu0 0.0
      %3069 = vmatpush2.msra.mxu0 0.0
      %3070 = vmatprep.subr.mxu0 0.0
      %3071 = vmatpush2.msra.mxu0 0.0
      %3072 = vmatprep.subr.mxu0 0.0
      %3073 = vmatpush2.msra.mxu0 0.0
      %3074 = vmatprep.subr.mxu0 0.0
      %3075 = vmatpush2.msra.mxu0 0.0
      %3076 = vmatprep.subr.mxu0 0.0
      %3077 = vmatpush2.msra.mxu0 0.0
      %3078 = vmatprep.subr.mxu0 0.0
      %3079 = vmatpush2.msra.mxu0 0.0
      %3080 = vmatprep.subr.mxu0 0.0
      %3081 = vmatpush2.msra.mxu0 0.0
      %3082 = vmatprep.subr.mxu0 0.0
      %3083 = vmatpush2.msra.mxu0 0.0
      %3084 = vmatprep.subr.mxu0 0.0
      %3085 = vmatpush2.msra.mxu0 0.0
      %3086 = vmatprep.subr.mxu0 0.0
      %3087 = vmatpush2.msra.mxu0 0.0
      %3088 = vmatprep.subr.mxu0 0.0
      %3089 = vmatpush2.msra.mxu0 0.0
      %3090 = vmatprep.subr.mxu0 0.0
      %3091 = vmatpush2.msra.mxu0 0.0
      %3092 = vmatprep.subr.mxu0 0.0
      %3093 = vmatpush2.msra.mxu0 0.0
      %3094 = vmatprep.subr.mxu0 0.0
      %3095 = vmatpush2.msra.mxu0 0.0
      %3096 = vmatprep.subr.mxu0 0.0
      %3097 = vmatpush2.msra.mxu0 0.0
      %3098 = vmatprep.mubr.f32.mxu0 0.0
      %3099 = vmatmul.mubr.f32.gmra.mxu0 %v2984
      %v3100 = vpop.f32.mrf.mxu0
      %v3101 = vadd.f32 0.0, %v3100
      %v3102 = vpop.f32.mrf.mxu0
      %3103 = vmatprep.mubr.f32.mxu0 0.0
      %3104 = vmatmul.mubr.f32.gmra.mxu0 %v2987
      %v3105 = vpop.f32.mrf.mxu0
      %v3106 = vadd.f32 0.0, %v3105
      %v3107 = vpop.f32.mrf.mxu0
      %3108 = vmatprep.mubr.f32.mxu0 0.0
      %3109 = vmatmul.mubr.f32.gmra.mxu0 %v2990
      %v3110 = vpop.f32.mrf.mxu0
      %v3111 = vadd.f32 0.0, %v3110
      %v3112 = vpop.f32.mrf.mxu0
      %3113 = vmatprep.mubr.f32.mxu0 0.0
      %3114 = vmatmul.mubr.f32.gmra.mxu0 %v2993
      %v3115 = vpop.f32.mrf.mxu0
      %v3116 = vadd.f32 0.0, %v3115
      %v3117 = vpop.f32.mrf.mxu0
      %3118 = vmatprep.mubr.f32.mxu0 0.0
      %3119 = vmatmul.mubr.f32.gmra.mxu0 %v2996
      %v3120 = vpop.f32.mrf.mxu0
      %v3121 = vadd.f32 0.0, %v3120
      %v3122 = vpop.f32.mrf.mxu0
      %3123 = vmatprep.mubr.f32.mxu0 0.0
      %3124 = vmatmul.mubr.f32.gmra.mxu0 %v2999
      %v3125 = vpop.f32.mrf.mxu0
      %v3126 = vadd.f32 0.0, %v3125
      %v3127 = vpop.f32.mrf.mxu0
      %3128 = vmatprep.mubr.f32.mxu0 0.0
      %3129 = vmatmul.mubr.f32.gmra.mxu0 %v3002
      %v3130 = vpop.f32.mrf.mxu0
      %v3131 = vadd.f32 0.0, %v3130
      %v3132 = vpop.f32.mrf.mxu0
      %3133 = vmatprep.mubr.f32.mxu0 0.0
      %3134 = vmatmul.mubr.f32.gmra.mxu0 %v3005
      %v3135 = vpop.f32.mrf.mxu0
      %v3136 = vadd.f32 0.0, %v3135
      %v3137 = vpop.f32.mrf.mxu0
      %3138 = vmatprep.mubr.f32.mxu0 0.0
      %3139 = vmatmul.mubr.f32.gmra.mxu0 %v3008
      %v3140 = vpop.f32.mrf.mxu0
      %v3141 = vadd.f32 0.0, %v3140
      %v3142 = vpop.f32.mrf.mxu0
      %3143 = vmatprep.mubr.f32.mxu0 0.0
      %3144 = vmatmul.mubr.f32.gmra.mxu0 %v3011
      %v3145 = vpop.f32.mrf.mxu0
      %v3146 = vadd.f32 0.0, %v3145
      %v3147 = vpop.f32.mrf.mxu0
      %3148 = vmatprep.mubr.f32.mxu0 0.0
      %3149 = vmatmul.mubr.f32.gmra.mxu0 %v3014
      %v3150 = vpop.f32.mrf.mxu0
      %v3151 = vadd.f32 0.0, %v3150
      %v3152 = vpop.f32.mrf.mxu0
      %3153 = vmatprep.mubr.f32.mxu0 0.0
      %3154 = vmatmul.mubr.f32.gmra.mxu0 %v3017
      %v3155 = vpop.f32.mrf.mxu0
      %v3156 = vadd.f32 0.0, %v3155
      %v3157 = vpop.f32.mrf.mxu0
      %3158 = vmatprep.mubr.f32.mxu0 0.0
      %3159 = vmatmul.mubr.f32.gmra.mxu0 %v3020
      %v3160 = vpop.f32.mrf.mxu0
      %v3161 = vadd.f32 0.0, %v3160
      %v3162 = vpop.f32.mrf.mxu0
      %3163 = vmatprep.mubr.f32.mxu0 0.0
      %3164 = vmatmul.mubr.f32.gmra.mxu0 %v3023
      %v3165 = vpop.f32.mrf.mxu0
      %v3166 = vadd.f32 0.0, %v3165
      %v3167 = vpop.f32.mrf.mxu0
      %3168 = vmatprep.mubr.f32.mxu0 0.0
      %3169 = vmatmul.mubr.f32.gmra.mxu0 %v3026
      %v3170 = vpop.f32.mrf.mxu0
      %v3171 = vadd.f32 0.0, %v3170
      %v3172 = vpop.f32.mrf.mxu0
      %3173 = vmatprep.mubr.f32.mxu0 0.0
      %3174 = vmatmul.mubr.f32.gmra.mxu0 %v3029
      %v3175 = vpop.f32.mrf.mxu0
      %v3176 = vadd.f32 0.0, %v3175
      %v3177 = vpop.f32.mrf.mxu0
      %3178 = vdwg.mxu0
      %v3179 = vadd.f32 %v536, %v2417
      %v3180 = vadd.f32 %v537, %v2422
      %v3181 = vadd.f32 %v538, %v2427
      %v3182 = vadd.f32 %v539, %v2432
      %v3183 = vadd.f32 %v540, %v2437
      %v3184 = vadd.f32 %v541, %v2442
      %v3185 = vadd.f32 %v542, %v2447
      %v3186 = vadd.f32 %v543, %v2452
      %v3187 = vadd.f32 %v544, %v2457
      %v3188 = vadd.f32 %v545, %v2462
      %v3189 = vadd.f32 %v546, %v2467
      %v3190 = vadd.f32 %v547, %v2472
      %v3191 = vadd.f32 %v548, %v2477
      %v3192 = vadd.f32 %v549, %v2482
      %v3193 = vadd.f32 %v550, %v2487
      %v3194 = vadd.f32 %v551, %v2492
      %v3195 = vadd.f32 %v552, %v2645
      %v3196 = vadd.f32 %v553, %v2650
      %v3197 = vadd.f32 %v554, %v2655
      %v3198 = vadd.f32 %v555, %v2660
      %v3199 = vadd.f32 %v556, %v2665
      %v3200 = vadd.f32 %v557, %v2670
      %v3201 = vadd.f32 %v558, %v2675
      %v3202 = vadd.f32 %v559, %v2680
      %v3203 = vadd.f32 %v560, %v2685
      %v3204 = vadd.f32 %v561, %v2690
      %v3205 = vadd.f32 %v562, %v2695
      %v3206 = vadd.f32 %v563, %v2700
      %v3207 = vadd.f32 %v564, %v2705
      %v3208 = vadd.f32 %v565, %v2710
      %v3209 = vadd.f32 %v566, %v2715
      %v3210 = vadd.f32 %v567, %v2720
      %v3211 = vadd.f32 %v568, %v2873
      %v3212 = vadd.f32 %v569, %v2878
      %v3213 = vadd.f32 %v570, %v2883
      %v3214 = vadd.f32 %v571, %v2888
      %v3215 = vadd.f32 %v572, %v2893
      %v3216 = vadd.f32 %v573, %v2898
      %v3217 = vadd.f32 %v574, %v2903
      %v3218 = vadd.f32 %v575, %v2908
      %v3219 = vadd.f32 %v576, %v2913
      %v3220 = vadd.f32 %v577, %v2918
      %v3221 = vadd.f32 %v578, %v2923
      %v3222 = vadd.f32 %v579, %v2928
      %v3223 = vadd.f32 %v580, %v2933
      %v3224 = vadd.f32 %v581, %v2938
      %v3225 = vadd.f32 %v582, %v2943
      %v3226 = vadd.f32 %v583, %v2948
      %v3227 = vadd.f32 %v584, %v3101
      %v3228 = vadd.f32 %v585, %v3106
      %v3229 = vadd.f32 %v586, %v3111
      %v3230 = vadd.f32 %v587, %v3116
      %v3231 = vadd.f32 %v588, %v3121
      %v3232 = vadd.f32 %v589, %v3126
      %v3233 = vadd.f32 %v590, %v3131
      %v3234 = vadd.f32 %v591, %v3136
      %v3235 = vadd.f32 %v592, %v3141
      %v3236 = vadd.f32 %v593, %v3146
      %v3237 = vadd.f32 %v594, %v3151
      %v3238 = vadd.f32 %v595, %v3156
      %v3239 = vadd.f32 %v596, %v3161
      %v3240 = vadd.f32 %v597, %v3166
      %v3241 = vadd.f32 %v598, %v3171
      %v3242 = vadd.f32 %v599, %v3176
      %3243 = vst [vmem:[%s489] sm:$0xff] %v3179
      %3244 = vst [vmem:[%s489 + $0x8] sm:$0xff] %v3180
      %3245 = vst [vmem:[%s489 + $0x10] sm:$0xff] %v3181
      %3246 = vst [vmem:[%s489 + $0x18] sm:$0xff] %v3182
      %3247 = vst [vmem:[%s489 + $0x20] sm:$0xff] %v3183
      %3248 = vst [vmem:[%s489 + $0x28] sm:$0xff] %v3184
      %3249 = vst [vmem:[%s489 + $0x30] sm:$0xff] %v3185
      %3250 = vst [vmem:[%s489 + $0x38] sm:$0xff] %v3186
      %3251 = vst [vmem:[%s489 + $0x40] sm:$0xff] %v3187
      %3252 = vst [vmem:[%s489 + $0x48] sm:$0xff] %v3188
      %3253 = vst [vmem:[%s489 + $0x50] sm:$0xff] %v3189
      %3254 = vst [vmem:[%s489 + $0x58] sm:$0xff] %v3190
      %3255 = vst [vmem:[%s489 + $0x60] sm:$0xff] %v3191
      %3256 = vst [vmem:[%s489 + $0x68] sm:$0xff] %v3192
      %3257 = vst [vmem:[%s489 + $0x70] sm:$0xff] %v3193
      %3258 = vst [vmem:[%s489 + $0x78] sm:$0xff] %v3194
      %3259 = vst [vmem:[%s489 + $0x80] sm:$0xff] %v3195
      %3260 = vst [vmem:[%s489 + $0x88] sm:$0xff] %v3196
      %3261 = vst [vmem:[%s489 + $0x90] sm:$0xff] %v3197
      %3262 = vst [vmem:[%s489 + $0x98] sm:$0xff] %v3198
      %3263 = vst [vmem:[%s489 + $0xa0] sm:$0xff] %v3199
      %3264 = vst [vmem:[%s489 + $0xa8] sm:$0xff] %v3200
      %3265 = vst [vmem:[%s489 + $0xb0] sm:$0xff] %v3201
      %3266 = vst [vmem:[%s489 + $0xb8] sm:$0xff] %v3202
      %3267 = vst [vmem:[%s489 + $0xc0] sm:$0xff] %v3203
      %3268 = vst [vmem:[%s489 + $0xc8] sm:$0xff] %v3204
      %3269 = vst [vmem:[%s489 + $0xd0] sm:$0xff] %v3205
      %3270 = vst [vmem:[%s489 + $0xd8] sm:$0xff] %v3206
      %3271 = vst [vmem:[%s489 + $0xe0] sm:$0xff] %v3207
      %3272 = vst [vmem:[%s489 + $0xe8] sm:$0xff] %v3208
      %3273 = vst [vmem:[%s489 + $0xf0] sm:$0xff] %v3209
      %3274 = vst [vmem:[%s489 + $0xf8] sm:$0xff] %v3210
      %3275 = vst [vmem:[%s489 + $0x100] sm:$0xff] %v3211
      %3276 = vst [vmem:[%s489 + $0x108] sm:$0xff] %v3212
      %3277 = vst [vmem:[%s489 + $0x110] sm:$0xff] %v3213
      %3278 = vst [vmem:[%s489 + $0x118] sm:$0xff] %v3214
      %3279 = vst [vmem:[%s489 + $0x120] sm:$0xff] %v3215
      %3280 = vst [vmem:[%s489 + $0x128] sm:$0xff] %v3216
      %3281 = vst [vmem:[%s489 + $0x130] sm:$0xff] %v3217
      %3282 = vst [vmem:[%s489 + $0x138] sm:$0xff] %v3218
      %3283 = vst [vmem:[%s489 + $0x140] sm:$0xff] %v3219
      %3284 = vst [vmem:[%s489 + $0x148] sm:$0xff] %v3220
      %3285 = vst [vmem:[%s489 + $0x150] sm:$0xff] %v3221
      %3286 = vst [vmem:[%s489 + $0x158] sm:$0xff] %v3222
      %3287 = vst [vmem:[%s489 + $0x160] sm:$0xff] %v3223
      %3288 = vst [vmem:[%s489 + $0x168] sm:$0xff] %v3224
      %3289 = vst [vmem:[%s489 + $0x170] sm:$0xff] %v3225
      %3290 = vst [vmem:[%s489 + $0x178] sm:$0xff] %v3226
      %3291 = vst [vmem:[%s489 + $0x180] sm:$0xff] %v3227
      %3292 = vst [vmem:[%s489 + $0x188] sm:$0xff] %v3228
      %3293 = vst [vmem:[%s489 + $0x190] sm:$0xff] %v3229
      %3294 = vst [vmem:[%s489 + $0x198] sm:$0xff] %v3230
      %3295 = vst [vmem:[%s489 + $0x1a0] sm:$0xff] %v3231
      %3296 = vst [vmem:[%s489 + $0x1a8] sm:$0xff] %v3232
      %3297 = vst [vmem:[%s489 + $0x1b0] sm:$0xff] %v3233
      %3298 = vst [vmem:[%s489 + $0x1b8] sm:$0xff] %v3234
      %3299 = vst [vmem:[%s489 + $0x1c0] sm:$0xff] %v3235
      %3300 = vst [vmem:[%s489 + $0x1c8] sm:$0xff] %v3236
      %3301 = vst [vmem:[%s489 + $0x1d0] sm:$0xff] %v3237
      %3302 = vst [vmem:[%s489 + $0x1d8] sm:$0xff] %v3238
      %3303 = vst [vmem:[%s489 + $0x1e0] sm:$0xff] %v3239
      %3304 = vst [vmem:[%s489 + $0x1e8] sm:$0xff] %v3240
      %3305 = vst [vmem:[%s489 + $0x1f0] sm:$0xff] %v3241
      %3306 = vst [vmem:[%s489 + $0x1f8] sm:$0xff] %v3242
      %v3307 = vmul.f32 %v2203, %v2192
      %v3308 = vmul.f32 %v2205, %v2195
      %v3309 = vmul.f32 %v2207, %v2198
      %v3310 = vmul.f32 %v2209, %v2201
      %v3311 = vsub.f32 0.0, %v3307
      %v3312 = vsub.f32 0.0, %v3308
      %v3313 = vsub.f32 0.0, %v3309
      %v3314 = vsub.f32 0.0, %v3310
      %v3315 = vmul.f32 %v2210, %v2192
      %v3316 = vmul.f32 %v2211, %v2195
      %v3317 = vmul.f32 %v2212, %v2198
      %v3318 = vmul.f32 %v2213, %v2201
      %v3319 = vsub.f32 %v3315, %v2176
      %v3320 = vsub.f32 %v3316, %v2179
      %v3321 = vsub.f32 %v3317, %v2182
      %v3322 = vsub.f32 %v3318, %v2185
      %v3323 = vmul.f32 %v2203, %v3319
      %v3324 = vmul.f32 %v2205, %v3320
      %v3325 = vmul.f32 %v2207, %v3321
      %v3326 = vmul.f32 %v2209, %v3322
      %v3327 = vmul.f32 %v3311, %v2134
      %v3328 = vmul.f32 %v3312, %v2135
      %v3329 = vmul.f32 %v3313, %v2136
      %v3330 = vmul.f32 %v3314, %v2137
      %v3331 = vmul.f32 %v3323, %v2059
      %v3332 = vmul.f32 %v3324, %v2061
      %v3333 = vmul.f32 %v3325, %v2130
      %v3334 = vmul.f32 %v3326, %v2132
      %v3335 = vadd.f32 %v3327, %v3331
      %v3336 = vadd.f32 %v3328, %v3332
      %v3337 = vadd.f32 %v3329, %v3333
      %v3338 = vadd.f32 %v3330, %v3334
      %v3343 = vrot.slane %v667, 1
      %v3344 = vrot.slane %v737, 1
      %v3345 = vrot.slane %v807, 1
      %v3346 = vrot.slane %v877, 1
      %v3351 = vsub.f32 %v3335, %v3343
      %v3352 = vsub.f32 %v3336, %v3344
      %v3353 = vsub.f32 %v3337, %v3345
      %v3354 = vsub.f32 %v3338, %v3346
      %3355 = vst [vmem:[%s482] sm:$0x1] %v3351
      %3356 = vst [vmem:[%s482 + $0x1] sm:$0x1] %v3352
      %3357 = vst [vmem:[%s482 + $0x2] sm:$0x1] %v3353
      %3358 = vst [vmem:[%s482 + $0x3] sm:$0x1] %v3354
      %s3359 = smul.u32 4, %s24
      %p3360 = scmp.lt.s32.totalorder %s3359, 7
      %s3361 = scalar_select %p3360, %s3359, 7
      %s3362 = scalar_lea.vmem %s11, %s3361
      %s3363 = smul.u32 4, %s24
      %p3364 = scmp.lt.s32.totalorder %s3363, 7
      %s3365 = scalar_select %p3364, %s3363, 7
      %s3366 = smul.addr %s3365, 16
      %s3367 = smul.addr %s3366, 8
      %s3368 = scalar_lea.vmem %s12, %s3367
      // Predicated region
      $region65: #{loa_bfgs_forward.1} parent=63 // pred_check
        %p3369 = pneg %p293
      $region66: #{loa_bfgs_forward.1} parent=63 // pred_check_branch
        %3371 = sbr.rel (%p3369) target = $region68
      $region67: #{loa_bfgs_forward.1} parent=63 // pred_region
        %s3372 = smul.u32 4, %s24
      $region68: #{loa_bfgs_forward.1} parent=63 // pred_fallthru
        _
      // Predicated region
      $region69: #{loa_bfgs_forward.1} parent=63 // pred_check
        %p3373 = pneg %p319
      $region70: #{loa_bfgs_forward.1} parent=63 // pred_check_branch
        %3375 = sbr.rel (%p3373) target = $region72
      $region71: #{loa_bfgs_forward.1} parent=63 // pred_region
        %s3376 = smul.u32 4, %s24
      $region72: #{loa_bfgs_forward.1} parent=63 // pred_fallthru
        _
    $region64: #{loa_bfgs_forward.1} parent=5 // pred_fallthru
      _
    %p3377 = scmp.le.s32.totalorder 2, %s19
    // Predicated region
    $region73: #{loa_bfgs_forward.1} parent=5 // pred_check
      %p3378 = pneg %p3377
    $region74: #{loa_bfgs_forward.1} parent=5 // pred_check_branch
      %3380 = sbr.rel (%p3378) target = $region76
    $region75: #{loa_bfgs_forward.1} parent=5 // pred_region
      %s3381 = ssub.s32 %s19, 2
      // Predicated region
      $region77: #{loa_bfgs_forward.1} parent=75 // pred_check
        %p3382 = pneg %p299
      $region78: #{loa_bfgs_forward.1} parent=75 // pred_check_branch
        %3384 = sbr.rel (%p3382) target = $region80
      $region79: #{loa_bfgs_forward.1} parent=75 // pred_region
        %s3385 = smul.u32 4, %s25
        %p3386 = scmp.lt.s32.totalorder %s3385, 7
        %s3387 = scalar_select %p3386, %s3385, 7
        %s3388 = scalar_lea.vmem %s11, %s3387
      $region80: #{loa_bfgs_forward.1} parent=75 // pred_fallthru
        _
      // Predicated region
      $region81: #{loa_bfgs_forward.1} parent=75 // pred_check
        %p3389 = pneg %p325
      $region82: #{loa_bfgs_forward.1} parent=75 // pred_check_branch
        %3391 = sbr.rel (%p3389) target = $region84
      $region83: #{loa_bfgs_forward.1} parent=75 // pred_region
        %s3392 = smul.u32 4, %s25
        %p3393 = scmp.lt.s32.totalorder %s3392, 7
        %s3394 = scalar_select %p3393, %s3392, 7
        %s3395 = smul.addr %s3394, 16
        %s3396 = smul.addr %s3395, 8
        %s3397 = scalar_lea.vmem %s12, %s3396
      $region84: #{loa_bfgs_forward.1} parent=75 // pred_fallthru
        _
    $region76: #{loa_bfgs_forward.1} parent=5 // pred_fallthru
      _
  $region6: #{loa_bfgs_forward.1} parent=0 // loop_footer
    %s23 = sadd.s32 1, %s19
  $region7: #{loa_bfgs_forward.1} parent=0 // loop_footer_branch
    %18 = sbr.rel target = $region3
  $region8: #{loa_bfgs_forward.1} parent=0 // loop_exit
    _

</llo_original>
